<compile_context>
chip_gen: v5e
topology: v5e:2x2
jax: 0.10.0
libtpu: 0.0.40
codegen_flags: <defaults>
</compile_context>

<pallas_src>
import jax
import jax.numpy as jnp
from jax.experimental import pallas as pl
from jax.experimental.pallas import tpu as pltpu

L = 128  # lane-aligned block width


def _round_up(x, m):
    return (x + m - 1) // m * m


def eunet_kernel(x_ref, wg_ref, wf_ref, b_ref, o_ref):
    """One row-block of EuNet forward. All operands are 128-lane aligned."""
    x_act = x_ref[...]                    # [TB, 128 + KG]
    x_in = x_act[:, 0:L]                  # x_in in lanes [0, W), zeros beyond
    x_all = x_act[:, L:]                  # x_all in lanes [0, G), zeros beyond

    b = b_ref[...]                        # [8, 384]
    b_gate = b[0:1, :]                    # [1, 384]  (g0 | g1 | g2)
    b_fc1 = b[1:2, 0:L]
    b_fc2 = b[1:2, L:2 * L]
    b_out = b[1:2, 2 * L:3 * L]

    # ---- one fused MXU pass for the three gates G0|G1|G2 ------------------
    gates = jax.nn.sigmoid(
        jnp.dot(x_all, wg_ref[...], preferred_element_type=jnp.float32) + b_gate)
    g0 = gates[:, 0:L]                    # 128-aligned slices, no masking
    g1 = gates[:, L:2 * L]
    g2 = gates[:, 2 * L:3 * L]

    # ---- main path (padded lanes carry garbage, killed by zero weight rows)
    x0 = x_in + g0                                                    # [TB,128]
    x1 = jax.nn.sigmoid(
        jnp.dot(x0, wf_ref[0:L, :], preferred_element_type=jnp.float32)
        + b_fc1) + g1                                                 # [TB,128]
    x2 = jax.nn.sigmoid(
        jnp.dot(x1, wf_ref[L:2 * L, :], preferred_element_type=jnp.float32)
        + b_fc2) + g2                                                 # [TB,128]
    out = jnp.dot(x2, wf_ref[2 * L:3 * L, :],
                  preferred_element_type=jnp.float32) + b_out         # [TB,128]

    # ---- four unmasked, 128-lane-aligned stores ----------------------------
    o_ref[:, 0:L] = x0
    o_ref[:, L:2 * L] = x1
    o_ref[:, 2 * L:3 * L] = x2
    o_ref[:, 3 * L:4 * L] = out


def pack_params(p, W, H, V):
    """One-time packing into dense, lane-aligned slabs.

    Invariant: every padded row of w_gate / w_fc is exactly zero so that the
    0.5/1.0 garbage in padded activation lanes never reaches a used output lane.
    """
    assert W <= L and H <= L and V <= L, "packing scheme assumes <=128 features"
    G = W + 2 * H + V
    KG = _round_up(G, L)                  # padded gate-contraction width (256)

    # Gate slab: [KG, 3*128] = [g0_pad | g1_pad | g2_pad], pre-transposed.
    w_gate = jnp.zeros((KG, 3 * L), jnp.float32)
    w_gate = w_gate.at[:G, 0:W].set(p["G0_w"].T)
    w_gate = w_gate.at[:G, L:L + H].set(p["G1_w"].T)
    w_gate = w_gate.at[:G, 2 * L:2 * L + H].set(p["G2_w"].T)

    # FC slab: [3*128, 128] = rows [fc1_pad | fc2_pad | output_pad].
    w_fc = jnp.zeros((3 * L, L), jnp.float32)
    w_fc = w_fc.at[0:W, 0:H].set(p["fc1_w"].T)
    w_fc = w_fc.at[L:L + H, 0:H].set(p["fc2_w"].T)
    w_fc = w_fc.at[2 * L:2 * L + H, 0:V].set(p["output_w"].T)

    # Bias table: row 0 = gate biases, row 1 = [fc1 | fc2 | output].
    b_slab = jnp.zeros((8, 3 * L), jnp.float32)
    b_slab = b_slab.at[0, 0:W].set(p["G0_b"])
    b_slab = b_slab.at[0, L:L + H].set(p["G1_b"])
    b_slab = b_slab.at[0, 2 * L:2 * L + H].set(p["G2_b"])
    b_slab = b_slab.at[1, 0:H].set(p["fc1_b"])
    b_slab = b_slab.at[1, L:L + H].set(p["fc2_b"])
    b_slab = b_slab.at[1, 2 * L:2 * L + V].set(p["output_b"])

    return w_gate, w_fc, b_slab


def build_forward(B_total, W, H, V, row_block=256):
    G = W + 2 * H + V
    KG = _round_up(G, L)

    # Row blocking: fill the MXU rows (256 on v6e/v7x) and give the grid a
    # parallel axis so both v7x TensorCores get work.
    B_pad = _round_up(B_total, 8)
    TB = min(row_block, B_pad)
    B_pad = _round_up(B_pad, TB)
    n_blocks = B_pad // TB

    grid_spec = pltpu.PrefetchScalarGridSpec(
        num_scalar_prefetch=0,
        grid=(n_blocks,),
        in_specs=[
            # activations: one block per grid step
            pl.BlockSpec((TB, L + KG), lambda i: (i, 0)),
            # weights/biases: constant block index -> DMA'd once, stay resident
            pl.BlockSpec((KG, 3 * L), lambda i: (0, 0)),
            pl.BlockSpec((3 * L, L), lambda i: (0, 0)),
            pl.BlockSpec((8, 3 * L), lambda i: (0, 0)),
        ],
        out_specs=pl.BlockSpec((TB, 4 * L), lambda i: (i, 0)),
    )

    call = pl.pallas_call(
        eunet_kernel,
        out_shape=jax.ShapeDtypeStruct((B_pad, 4 * L), jnp.float32),
        grid_spec=grid_spec,
        compiler_params=pltpu.CompilerParams(
            dimension_semantics=("parallel",)),
    )

    @jax.jit
    def forward(x_in, x_all, w_gate, w_fc, b_slab):
        B = x_in.shape[0]
        # Merge x_in and x_all into one zero-padded, lane-aligned activation
        # buffer: x_in at lanes [0, 128), x_all at lanes [128, 128 + G).
        x_act = jnp.zeros((B_pad, L + KG), jnp.float32)
        x_act = x_act.at[:B, 0:W].set(x_in)
        x_act = x_act.at[:B, L:L + G].set(x_all)

        packed = call(x_act, w_gate, w_fc, b_slab)
        x0 = packed[:B, 0:W]
        x1 = packed[:B, L:L + H]
        x2 = packed[:B, 2 * L:2 * L + H]
        out = packed[:B, 3 * L:3 * L + V]
        return x0, x1, x2, out

    return forward


def init_params(key, window_size, hidden_sz, vocab_sz):
    """Deterministic init mimicking nn.Linear (uniform(+-1/sqrt(fan_in)))."""
    G_sz = window_size + 2 * hidden_sz + vocab_sz
    ks = jax.random.split(key, 12)

    def lin(kw, kb, out_f, in_f):
        bound = 1.0 / jnp.sqrt(in_f)
        w = jax.random.uniform(kw, (out_f, in_f), jnp.float32, -bound, bound)
        b = jax.random.uniform(kb, (out_f,), jnp.float32, -bound, bound)
        return w, b

    G0_w, G0_b = lin(ks[0], ks[1], window_size, G_sz)
    fc1_w, fc1_b = lin(ks[2], ks[3], hidden_sz, window_size)
    G1_w, G1_b = lin(ks[4], ks[5], hidden_sz, G_sz)
    fc2_w, fc2_b = lin(ks[6], ks[7], hidden_sz, hidden_sz)
    G2_w, G2_b = lin(ks[8], ks[9], hidden_sz, G_sz)
    out_w, out_b = lin(ks[10], ks[11], vocab_sz, hidden_sz)
    # G3 / tanh exist in __init__ but are unused in forward -> not created.
    return {
        "G0_w": G0_w, "G0_b": G0_b,
        "fc1_w": fc1_w, "fc1_b": fc1_b,
        "G1_w": G1_w, "G1_b": G1_b,
        "fc2_w": fc2_w, "fc2_b": fc2_b,
        "G2_w": G2_w, "G2_b": G2_b,
        "output_w": out_w, "output_b": out_b,
    }


def reference_forward(x_in, x_all, p):
    sig = jax.nn.sigmoid
    x0 = x_in + sig(x_all @ p["G0_w"].T + p["G0_b"])
    x1 = sig(x0 @ p["fc1_w"].T + p["fc1_b"]) + sig(x_all @ p["G1_w"].T + p["G1_b"])
    x2 = sig(x1 @ p["fc2_w"].T + p["fc2_b"]) + sig(x_all @ p["G2_w"].T + p["G2_b"])
    out = x2 @ p["output_w"].T + p["output_b"]
    return x0, x1, x2, out


if __name__ == "__main__":
    window_size = 4
    hidden_sz = 32
    vocab_sz = 128
    G_sz = window_size + 2 * hidden_sz + vocab_sz

    # Batch here stands in for (independent samples x timesteps); the grid
    # splits it into 256-row blocks so the MXU rows are full and the weight
    # slabs are DMA'd once for the whole batch.
    batch = 512

    key = jax.random.PRNGKey(0)
    k_params, k_x, k_all = jax.random.split(key, 3)

    params = init_params(k_params, window_size, hidden_sz, vocab_sz)
    x_in = jax.random.normal(k_x, (batch, window_size), jnp.float32)
    x_all = jax.random.normal(k_all, (batch, G_sz), jnp.float32)

    # One-time parameter packing (no per-call transposes / reshapes).
    w_gate, w_fc, b_slab = pack_params(params, window_size, hidden_sz, vocab_sz)
    forward = build_forward(batch, window_size, hidden_sz, vocab_sz)

    x0, x1, x2, out = forward(x_in, x_all, w_gate, w_fc, b_slab)
    jax.block_until_ready((x0, x1, x2, out))

    r0, r1, r2, rout = reference_forward(x_in, x_all, params)
    assert jnp.allclose(x0, r0, atol=1e-5, rtol=1e-5), "x0 mismatch"
    assert jnp.allclose(x1, r1, atol=1e-5, rtol=1e-5), "x1 mismatch"
    assert jnp.allclose(x2, r2, atol=1e-5, rtol=1e-5), "x2 mismatch"
    assert jnp.allclose(out, rout, atol=1e-5, rtol=1e-5), "output mismatch"

    print("KERNEL_OK")
</pallas_src>

<mosaic_0001>
module attributes {stable_mosaic.version = 11 : i64} {
  func.func @eunet_kernel(%arg0: i32, %arg1: memref<256x384xf32, #tpu.memory_space<vmem>>, %arg2: memref<256x384xf32, #tpu.memory_space<vmem>>, %arg3: memref<384x128xf32, #tpu.memory_space<vmem>>, %arg4: memref<8x384xf32, #tpu.memory_space<vmem>>, %arg5: memref<256x512xf32, #tpu.memory_space<vmem>>) attributes {dimension_semantics = [#tpu.dimension_semantics<parallel>], iteration_bounds = array<i64: 2>, scalar_prefetch = 0 : i64, scratch_operands = 0 : i64, tpu.core_type = #tpu.core_type<tc>, window_params = [{transform_indices = @transform_0, window_bounds = array<i64: 256, 384>}, {pipeline_mode = #tpu.pipeline_mode<synchronous>, transform_indices = @transform_1, window_bounds = array<i64: 256, 384>}, {pipeline_mode = #tpu.pipeline_mode<synchronous>, transform_indices = @transform_2, window_bounds = array<i64: 384, 128>}, {pipeline_mode = #tpu.pipeline_mode<synchronous>, transform_indices = @transform_3, window_bounds = array<i64: 8, 384>}, {transform_indices = @transform_4, window_bounds = array<i64: 256, 512>}]} {
    %c0 = arith.constant 0 : index
    %c0_0 = arith.constant 0 : index
    %0 = vector.load %arg1[%c0, %c0_0] : memref<256x384xf32, #tpu.memory_space<vmem>>, vector<256x384xf32>
    %1 = vector.extract_strided_slice %0 {offsets = [0, 0], sizes = [256, 128], strides = [1, 1]} : vector<256x384xf32> to vector<256x128xf32>
    %2 = vector.extract_strided_slice %0 {offsets = [0, 128], sizes = [256, 256], strides = [1, 1]} : vector<256x384xf32> to vector<256x256xf32>
    %c0_1 = arith.constant 0 : index
    %c0_2 = arith.constant 0 : index
    %3 = vector.load %arg4[%c0_1, %c0_2] : memref<8x384xf32, #tpu.memory_space<vmem>>, vector<8x384xf32>
    %4 = vector.extract_strided_slice %3 {offsets = [0, 0], sizes = [1, 384], strides = [1, 1]} : vector<8x384xf32> to vector<1x384xf32>
    %5 = vector.extract_strided_slice %3 {offsets = [1, 0], sizes = [1, 128], strides = [1, 1]} : vector<8x384xf32> to vector<1x128xf32>
    %6 = vector.extract_strided_slice %3 {offsets = [1, 128], sizes = [1, 128], strides = [1, 1]} : vector<8x384xf32> to vector<1x128xf32>
    %7 = vector.extract_strided_slice %3 {offsets = [1, 256], sizes = [1, 128], strides = [1, 1]} : vector<8x384xf32> to vector<1x128xf32>
    %c0_3 = arith.constant 0 : index
    %c0_4 = arith.constant 0 : index
    %8 = vector.load %arg2[%c0_3, %c0_4] : memref<256x384xf32, #tpu.memory_space<vmem>>, vector<256x384xf32>
    %cst = arith.constant dense<0.000000e+00> : vector<256x384xf32>
    %9 = tpu.matmul %2, %8, %cst {dimension_numbers = #tpu.dot_dimension_numbers<[1], [0], [0], [1], [0, 0, 1, 1], [], []>} : vector<256x256xf32>, vector<256x384xf32>, vector<256x384xf32> -> vector<256x384xf32>
    %10 = vector.broadcast %4 : vector<1x384xf32> to vector<256x384xf32>
    %11 = arith.addf %9, %10 : vector<256x384xf32>
    %12 = arith.negf %11 : vector<256x384xf32>
    %13 = math.exp %12 : vector<256x384xf32>
    %cst_5 = arith.constant 1.000000e+00 : f32
    %14 = vector.broadcast %cst_5 : f32 to vector<256x384xf32>
    %15 = arith.addf %14, %13 : vector<256x384xf32>
    %16 = arith.divf %14, %15 : vector<256x384xf32>
    %17 = vector.extract_strided_slice %16 {offsets = [0, 0], sizes = [256, 128], strides = [1, 1]} : vector<256x384xf32> to vector<256x128xf32>
    %18 = vector.extract_strided_slice %16 {offsets = [0, 128], sizes = [256, 128], strides = [1, 1]} : vector<256x384xf32> to vector<256x128xf32>
    %19 = vector.extract_strided_slice %16 {offsets = [0, 256], sizes = [256, 128], strides = [1, 1]} : vector<256x384xf32> to vector<256x128xf32>
    %20 = arith.addf %1, %17 : vector<256x128xf32>
    %c0_6 = arith.constant 0 : index
    %c0_7 = arith.constant 0 : index
    %21 = vector.load %arg3[%c0_6, %c0_7] : memref<384x128xf32, #tpu.memory_space<vmem>>, vector<128x128xf32>
    %cst_8 = arith.constant dense<0.000000e+00> : vector<256x128xf32>
    %22 = tpu.matmul %20, %21, %cst_8 {dimension_numbers = #tpu.dot_dimension_numbers<[1], [0], [0], [1], [0, 0, 1, 1], [], []>} : vector<256x128xf32>, vector<128x128xf32>, vector<256x128xf32> -> vector<256x128xf32>
    %23 = vector.broadcast %5 : vector<1x128xf32> to vector<256x128xf32>
    %24 = arith.addf %22, %23 : vector<256x128xf32>
    %25 = arith.negf %24 : vector<256x128xf32>
    %26 = math.exp %25 : vector<256x128xf32>
    %cst_9 = arith.constant 1.000000e+00 : f32
    %27 = vector.broadcast %cst_9 : f32 to vector<256x128xf32>
    %28 = arith.addf %27, %26 : vector<256x128xf32>
    %29 = arith.divf %27, %28 : vector<256x128xf32>
    %30 = arith.addf %29, %18 : vector<256x128xf32>
    %c128 = arith.constant 128 : index
    %c0_10 = arith.constant 0 : index
    %31 = vector.load %arg3[%c128, %c0_10] : memref<384x128xf32, #tpu.memory_space<vmem>>, vector<128x128xf32>
    %cst_11 = arith.constant dense<0.000000e+00> : vector<256x128xf32>
    %32 = tpu.matmul %30, %31, %cst_11 {dimension_numbers = #tpu.dot_dimension_numbers<[1], [0], [0], [1], [0, 0, 1, 1], [], []>} : vector<256x128xf32>, vector<128x128xf32>, vector<256x128xf32> -> vector<256x128xf32>
    %33 = vector.broadcast %6 : vector<1x128xf32> to vector<256x128xf32>
    %34 = arith.addf %32, %33 : vector<256x128xf32>
    %35 = arith.negf %34 : vector<256x128xf32>
    %36 = math.exp %35 : vector<256x128xf32>
    %cst_12 = arith.constant 1.000000e+00 : f32
    %37 = vector.broadcast %cst_12 : f32 to vector<256x128xf32>
    %38 = arith.addf %37, %36 : vector<256x128xf32>
    %39 = arith.divf %37, %38 : vector<256x128xf32>
    %40 = arith.addf %39, %19 : vector<256x128xf32>
    %c256 = arith.constant 256 : index
    %c0_13 = arith.constant 0 : index
    %41 = vector.load %arg3[%c256, %c0_13] : memref<384x128xf32, #tpu.memory_space<vmem>>, vector<128x128xf32>
    %cst_14 = arith.constant dense<0.000000e+00> : vector<256x128xf32>
    %42 = tpu.matmul %40, %41, %cst_14 {dimension_numbers = #tpu.dot_dimension_numbers<[1], [0], [0], [1], [0, 0, 1, 1], [], []>} : vector<256x128xf32>, vector<128x128xf32>, vector<256x128xf32> -> vector<256x128xf32>
    %43 = vector.broadcast %7 : vector<1x128xf32> to vector<256x128xf32>
    %44 = arith.addf %42, %43 : vector<256x128xf32>
    %c0_15 = arith.constant 0 : index
    %c0_16 = arith.constant 0 : index
    %45 = vector.load %arg5[%c0_15, %c0_16] : memref<256x512xf32, #tpu.memory_space<vmem>>, vector<256x128xf32>
    tpu.vector_store %arg5[%c0_15, %c0_16], %20 {strides = array<i32>} : memref<256x512xf32, #tpu.memory_space<vmem>>, vector<256x128xf32>,
    %c0_17 = arith.constant 0 : index
    %c128_18 = arith.constant 128 : index
    %46 = vector.load %arg5[%c0_17, %c128_18] : memref<256x512xf32, #tpu.memory_space<vmem>>, vector<256x128xf32>
    tpu.vector_store %arg5[%c0_17, %c128_18], %30 {strides = array<i32>} : memref<256x512xf32, #tpu.memory_space<vmem>>, vector<256x128xf32>,
    %c0_19 = arith.constant 0 : index
    %c256_20 = arith.constant 256 : index
    %47 = vector.load %arg5[%c0_19, %c256_20] : memref<256x512xf32, #tpu.memory_space<vmem>>, vector<256x128xf32>
    tpu.vector_store %arg5[%c0_19, %c256_20], %40 {strides = array<i32>} : memref<256x512xf32, #tpu.memory_space<vmem>>, vector<256x128xf32>,
    %c0_21 = arith.constant 0 : index
    %c384 = arith.constant 384 : index
    %48 = vector.load %arg5[%c0_21, %c384] : memref<256x512xf32, #tpu.memory_space<vmem>>, vector<256x128xf32>
    tpu.vector_store %arg5[%c0_21, %c384], %44 {strides = array<i32>} : memref<256x512xf32, #tpu.memory_space<vmem>>, vector<256x128xf32>,
    return
  }
  func.func @transform_0(%arg0: i32) -> (i32, i32) {
    %c0_i32 = arith.constant 0 : i32
    %c0_i32_0 = arith.constant 0 : i32
    return %arg0, %c0_i32 : i32, i32
  }
  func.func @transform_1(%arg0: i32) -> (i32, i32) {
    %c0_i32 = arith.constant 0 : i32
    %c0_i32_0 = arith.constant 0 : i32
    %c0_i32_1 = arith.constant 0 : i32
    return %c0_i32, %c0_i32_0 : i32, i32
  }
  func.func @transform_2(%arg0: i32) -> (i32, i32) {
    %c0_i32 = arith.constant 0 : i32
    %c0_i32_0 = arith.constant 0 : i32
    %c0_i32_1 = arith.constant 0 : i32
    return %c0_i32, %c0_i32_0 : i32, i32
  }
  func.func @transform_3(%arg0: i32) -> (i32, i32) {
    %c0_i32 = arith.constant 0 : i32
    %c0_i32_0 = arith.constant 0 : i32
    %c0_i32_1 = arith.constant 0 : i32
    return %c0_i32, %c0_i32_0 : i32, i32
  }
  func.func @transform_4(%arg0: i32) -> (i32, i32) {
    %c0_i32 = arith.constant 0 : i32
    %c0_i32_0 = arith.constant 0 : i32
    return %arg0, %c0_i32 : i32, i32
  }
}

</mosaic_0001>

<llo_original>
// kernel: forward.1
$region0: #{forward.1}
  #allocation0 [shape = 'u32[]', space=smem, size = 0x4, offset = 0x4, fixed_abs, tag = 'smem constant byte address 0x4 - core index']
  #allocation1 [shape = 'u32[72,128]{1,0:T(1,128)}', space=vmem, size = 0x9000, scoped, tag = 'internal scratch']
  %s0 = inlined_call_operand.vmem [shape: f32[512,384], index: 0, kind: input, shape index: {}]
  %s1 = inlined_call_operand.vmem [shape: f32[256,384], index: 1, kind: input, shape index: {}]
  %s2 = inlined_call_operand.vmem [shape: f32[384,128], index: 2, kind: input, shape index: {}]
  %s3 = inlined_call_operand.vmem [shape: f32[8,384], index: 3, kind: input, shape index: {}]
  %s4 = inlined_call_operand.vmem [shape: f32[512,512], index: 4, kind: output, shape index: {}]
  %s5 = sld [smem:[#allocation0]]
  $region49: #{forward.1} parent=0
    _
  %s7 = ssub.s32 1, %s5
  %s8 = scalar_select 0, %s7, %s5
  loop: start=0, step=1, limit=4
  $region2: #{forward.1} parent=0 // loop_pre_header
    _
  $region3: #{forward.1} parent=0 // loop_header
    %s10 = sphi 0, %s14
    %p11 = scmp.ge.s32.totalorder %s10, 4
    %s20 = sphi 0, %s22
    %s23 = sphi 0, %s20
    %s24 = sphi 0, %s23
    %s40 = sphi 0, %s24
    %s44 = sphi 0, %s44
    %s46 = sphi 0, %s44
    %s47 = sphi 0, %s46
    %s61 = sphi 0, %s47
    %s65 = sphi 0, %s65
    %s67 = sphi 0, %s65
    %s68 = sphi 0, %s67
    %s82 = sphi 0, %s68
    %s86 = sphi 0, %s86
    %s88 = sphi 0, %s86
    %s89 = sphi 0, %s88
    %s103 = sphi 0, %s89
    %s109 = sphi 0, %s111
    %s112 = sphi 0, %s109
    %s113 = sphi 0, %s112
    %s129 = sphi 0, %s113
  $region4: #{forward.1} parent=0 // loop_header_branch
    %13 = sbr.rel (%p11) target = $region8
  $region5: #{forward.1} parent=0 // loop_body
    %s15 = ssub.s32 %s10, 1
    %s16 = ssub.s32 %s10, 2
    %s17 = sadd.s32 %s10, 1
    %s18 = ssub.s32 %s10, %s17
    %p19 = scmp.eq.s32.totalorder %s18, 0
    %s21 = sadd.s32 %s20, 1
    %s22 = scalar_select %p19, %s20, %s21
    %p25 = pneg %p19
    %p26 = scmp.eq.s32.totalorder %s10, 1
    %p27 = por %p25, %p26
    %p28 = scmp.ne.s32.totalorder %s20, %s23
    %p29 = scmp.eq.s32.totalorder %s10, 0
    %p30 = por %p28, %p29
    %p31 = scmp.ne.s32.totalorder %s20, %s23
    %p32 = scmp.eq.s32.totalorder %s15, 1
    %p33 = por %p31, %p32
    %p34 = scmp.ne.s32.totalorder %s23, %s24
    %p35 = scmp.eq.s32.totalorder %s15, 0
    %p36 = por %p34, %p35
    %p37 = scmp.ne.s32.totalorder %s23, %s24
    %p38 = scmp.eq.s32.totalorder %s16, 1
    %p39 = por %p37, %p38
    %p41 = scmp.ne.s32.totalorder %s24, %s40
    %p42 = scmp.eq.s32.totalorder %s16, 0
    %p43 = por %p41, %p42
    %s45 = sadd.s32 %s44, 1
    %p48 = scmp.eq.s32.totalorder %s10, 1
    %p49 = scmp.ne.s32.totalorder %s44, %s46
    %p50 = scmp.eq.s32.totalorder %s10, 0
    %p51 = por %p49, %p50
    %p52 = scmp.ne.s32.totalorder %s44, %s46
    %p53 = scmp.eq.s32.totalorder %s15, 1
    %p54 = por %p52, %p53
    %p55 = scmp.ne.s32.totalorder %s46, %s47
    %p56 = scmp.eq.s32.totalorder %s15, 0
    %p57 = por %p55, %p56
    %p58 = scmp.ne.s32.totalorder %s46, %s47
    %p59 = scmp.eq.s32.totalorder %s16, 1
    %p60 = por %p58, %p59
    %p62 = scmp.ne.s32.totalorder %s47, %s61
    %p63 = scmp.eq.s32.totalorder %s16, 0
    %p64 = por %p62, %p63
    %s66 = sadd.s32 %s65, 1
    %p69 = scmp.eq.s32.totalorder %s10, 1
    %p70 = scmp.ne.s32.totalorder %s65, %s67
    %p71 = scmp.eq.s32.totalorder %s10, 0
    %p72 = por %p70, %p71
    %p73 = scmp.ne.s32.totalorder %s65, %s67
    %p74 = scmp.eq.s32.totalorder %s15, 1
    %p75 = por %p73, %p74
    %p76 = scmp.ne.s32.totalorder %s67, %s68
    %p77 = scmp.eq.s32.totalorder %s15, 0
    %p78 = por %p76, %p77
    %p79 = scmp.ne.s32.totalorder %s67, %s68
    %p80 = scmp.eq.s32.totalorder %s16, 1
    %p81 = por %p79, %p80
    %p83 = scmp.ne.s32.totalorder %s68, %s82
    %p84 = scmp.eq.s32.totalorder %s16, 0
    %p85 = por %p83, %p84
    %s87 = sadd.s32 %s86, 1
    %p90 = scmp.eq.s32.totalorder %s10, 1
    %p91 = scmp.ne.s32.totalorder %s86, %s88
    %p92 = scmp.eq.s32.totalorder %s10, 0
    %p93 = por %p91, %p92
    %p94 = scmp.ne.s32.totalorder %s86, %s88
    %p95 = scmp.eq.s32.totalorder %s15, 1
    %p96 = por %p94, %p95
    %p97 = scmp.ne.s32.totalorder %s88, %s89
    %p98 = scmp.eq.s32.totalorder %s15, 0
    %p99 = por %p97, %p98
    %p100 = scmp.ne.s32.totalorder %s88, %s89
    %p101 = scmp.eq.s32.totalorder %s16, 1
    %p102 = por %p100, %p101
    %p104 = scmp.ne.s32.totalorder %s89, %s103
    %p105 = scmp.eq.s32.totalorder %s16, 0
    %p106 = por %p104, %p105
    %s107 = ssub.s32 %s10, %s17
    %p108 = scmp.eq.s32.totalorder %s107, 0
    %s110 = sadd.s32 %s109, 1
    %s111 = scalar_select %p108, %s109, %s110
    %p114 = pneg %p108
    %p115 = scmp.eq.s32.totalorder %s10, 1
    %p116 = por %p114, %p115
    %p117 = scmp.ne.s32.totalorder %s109, %s112
    %p118 = scmp.eq.s32.totalorder %s10, 0
    %p119 = por %p117, %p118
    %p120 = scmp.ne.s32.totalorder %s109, %s112
    %p121 = scmp.eq.s32.totalorder %s15, 1
    %p122 = por %p120, %p121
    %p123 = scmp.ne.s32.totalorder %s112, %s113
    %p124 = scmp.eq.s32.totalorder %s15, 0
    %p125 = por %p123, %p124
    %p126 = scmp.ne.s32.totalorder %s112, %s113
    %p127 = scmp.eq.s32.totalorder %s16, 1
    %p128 = por %p126, %p127
    %p130 = scmp.ne.s32.totalorder %s113, %s129
    %p131 = scmp.eq.s32.totalorder %s16, 0
    %p132 = por %p130, %p131
    %p133 = scmp.le.s32.totalorder 1, %s10
    %p134 = scmp.lt.s32.totalorder %s10, 3
    %p135 = pnand %p133, %p134
    %p136 = pneg %p135
    // Predicated region
    $region9: #{forward.1} parent=5 // pred_check
      _
    $region10: #{forward.1} parent=5 // pred_check_branch
      %138 = sbr.rel (%p135) target = $region12
    $region11: #{forward.1} parent=5 // pred_region
      %s139 = ssub.s32 %s10, 1
      // Predicated region
      $region13: #{forward.1} parent=11 // pred_check
        %p140 = pneg %p57
      $region14: #{forward.1} parent=11 // pred_check_branch
        %142 = sbr.rel (%p140) target = $region16
      $region15: #{forward.1} parent=11 // pred_region
        _
      $region16: #{forward.1} parent=11 // pred_fallthru
        _
      // Predicated region
      $region17: #{forward.1} parent=11 // pred_check
        %p143 = pneg %p78
      $region18: #{forward.1} parent=11 // pred_check_branch
        %145 = sbr.rel (%p143) target = $region20
      $region19: #{forward.1} parent=11 // pred_region
        _
      $region20: #{forward.1} parent=11 // pred_fallthru
        _
      // Predicated region
      $region21: #{forward.1} parent=11 // pred_check
        %p146 = pneg %p99
      $region22: #{forward.1} parent=11 // pred_check_branch
        %148 = sbr.rel (%p146) target = $region24
      $region23: #{forward.1} parent=11 // pred_region
        _
      $region24: #{forward.1} parent=11 // pred_fallthru
        _
    $region12: #{forward.1} parent=5 // pred_fallthru
      _
    %p149 = scmp.lt.s32.totalorder %s10, 2
    // Predicated region
    $region25: #{forward.1} parent=5 // pred_check
      %p150 = pneg %p149
    $region26: #{forward.1} parent=5 // pred_check_branch
      %152 = sbr.rel (%p150) target = $region28
    $region27: #{forward.1} parent=5 // pred_region
      // Predicated region
      $region29: #{forward.1} parent=27 // pred_check
        %p153 = pneg %p30
      $region30: #{forward.1} parent=27 // pred_check_branch
        %155 = sbr.rel (%p153) target = $region32
      $region31: #{forward.1} parent=27 // pred_region
        %s156 = smul.u32 32, %s10
        %p157 = scmp.lt.s32.totalorder %s156, 63
        %s158 = scalar_select %p157, %s156, 63
        %s159 = smul.addr %s158, 3
        %s160 = smul.addr %s159, 8
        %s161 = scalar_lea.vmem %s0, %s160
        %s162 = smul.u32 32, %s10
      $region32: #{forward.1} parent=27 // pred_fallthru
        _
    $region28: #{forward.1} parent=5 // pred_fallthru
      _
    %p163 = scmp.le.s32.totalorder 1, %s10
    %p164 = scmp.lt.s32.totalorder %s10, 3
    %p165 = pnand %p163, %p164
    %p166 = pneg %p165
    // Predicated region
    $region33: #{forward.1} parent=5 // pred_check
      _
    $region34: #{forward.1} parent=5 // pred_check_branch
      %168 = sbr.rel (%p165) target = $region36
    $region35: #{forward.1} parent=5 // pred_region
      %s169 = ssub.s32 %s10, 1
      %s170 = smul.u32 32, %s15
      %p171 = scmp.lt.s32.totalorder %s170, 63
      %s172 = scalar_select %p171, %s170, 63
      %s173 = smul.addr %s172, 3
      %s174 = smul.addr %s173, 8
      %s175 = scalar_lea.vmem %s0, %s174
      %p176 = pneg %p36
      %p177 = pneg %p33
      %p178 = pneg %p57
      %p179 = pneg %p54
      %p180 = pneg %p78
      %p181 = pneg %p75
      %p182 = pneg %p99
      %p183 = pneg %p96
      %p184 = pneg %p125
      %p185 = pneg %p122
      %s186 = smul.u32 32, %s15
      %p187 = scmp.lt.s32.totalorder %s186, 63
      %s188 = scalar_select %p187, %s186, 63
      %s189 = smul.addr %s188, 4
      %s190 = smul.addr %s189, 8
      %s191 = scalar_lea.vmem %s4, %s190
      %s192 = smul.u32 32, %s15
      %p193 = scmp.lt.s32.totalorder %s192, 63
      %s194 = scalar_select %p193, %s192, 63
      %s195 = smul.addr %s194, 3
      %s196 = smul.addr %s195, 8
      %s197 = scalar_lea.vmem %s0, %s196
      %s198 = smul.u32 32, %s15
      %s199 = smul.u32 32, %s15
      %p200 = scmp.lt.s32.totalorder %s199, 63
      %s201 = scalar_select %p200, %s199, 63
      %s202 = smul.addr %s201, 4
      %s203 = smul.addr %s202, 8
      %s204 = scalar_lea.vmem %s4, %s203
      %s205 = smul.u32 32, %s15
      %v206 = vld [vmem:[%s197] sm:$0xff]
      %v207 = vld [vmem:[%s197 + $0x8] sm:$0xff]
      %v208 = vld [vmem:[%s197 + $0x10] sm:$0xff]
      %v209 = vld [vmem:[%s197 + $0x18] sm:$0xff]
      %v210 = vld [vmem:[%s197 + $0x20] sm:$0xff]
      %v211 = vld [vmem:[%s197 + $0x28] sm:$0xff]
      %v212 = vld [vmem:[%s197 + $0x30] sm:$0xff]
      %v213 = vld [vmem:[%s197 + $0x38] sm:$0xff]
      %v214 = vld [vmem:[%s197 + $0x40] sm:$0xff]
      %v215 = vld [vmem:[%s197 + $0x48] sm:$0xff]
      %v216 = vld [vmem:[%s197 + $0x50] sm:$0xff]
      %v217 = vld [vmem:[%s197 + $0x58] sm:$0xff]
      %v218 = vld [vmem:[%s197 + $0x60] sm:$0xff]
      %v219 = vld [vmem:[%s197 + $0x68] sm:$0xff]
      %v220 = vld [vmem:[%s197 + $0x70] sm:$0xff]
      %v221 = vld [vmem:[%s197 + $0x78] sm:$0xff]
      %v222 = vld [vmem:[%s197 + $0x80] sm:$0xff]
      %v223 = vld [vmem:[%s197 + $0x88] sm:$0xff]
      %v224 = vld [vmem:[%s197 + $0x90] sm:$0xff]
      %v225 = vld [vmem:[%s197 + $0x98] sm:$0xff]
      %v226 = vld [vmem:[%s197 + $0xa0] sm:$0xff]
      %v227 = vld [vmem:[%s197 + $0xa8] sm:$0xff]
      %v228 = vld [vmem:[%s197 + $0xb0] sm:$0xff]
      %v229 = vld [vmem:[%s197 + $0xb8] sm:$0xff]
      %v230 = vld [vmem:[%s197 + $0xc0] sm:$0xff]
      %v231 = vld [vmem:[%s197 + $0xc8] sm:$0xff]
      %v232 = vld [vmem:[%s197 + $0xd0] sm:$0xff]
      %v233 = vld [vmem:[%s197 + $0xd8] sm:$0xff]
      %v234 = vld [vmem:[%s197 + $0xe0] sm:$0xff]
      %v235 = vld [vmem:[%s197 + $0xe8] sm:$0xff]
      %v236 = vld [vmem:[%s197 + $0xf0] sm:$0xff]
      %v237 = vld [vmem:[%s197 + $0xf8] sm:$0xff]
      %v238 = vld [vmem:[%s197 + $0x100] sm:$0xff]
      %v239 = vld [vmem:[%s197 + $0x108] sm:$0xff]
      %v240 = vld [vmem:[%s197 + $0x110] sm:$0xff]
      %v241 = vld [vmem:[%s197 + $0x118] sm:$0xff]
      %v242 = vld [vmem:[%s197 + $0x120] sm:$0xff]
      %v243 = vld [vmem:[%s197 + $0x128] sm:$0xff]
      %v244 = vld [vmem:[%s197 + $0x130] sm:$0xff]
      %v245 = vld [vmem:[%s197 + $0x138] sm:$0xff]
      %v246 = vld [vmem:[%s197 + $0x140] sm:$0xff]
      %v247 = vld [vmem:[%s197 + $0x148] sm:$0xff]
      %v248 = vld [vmem:[%s197 + $0x150] sm:$0xff]
      %v249 = vld [vmem:[%s197 + $0x158] sm:$0xff]
      %v250 = vld [vmem:[%s197 + $0x160] sm:$0xff]
      %v251 = vld [vmem:[%s197 + $0x168] sm:$0xff]
      %v252 = vld [vmem:[%s197 + $0x170] sm:$0xff]
      %v253 = vld [vmem:[%s197 + $0x178] sm:$0xff]
      %v254 = vld [vmem:[%s197 + $0x180] sm:$0xff]
      %v255 = vld [vmem:[%s197 + $0x188] sm:$0xff]
      %v256 = vld [vmem:[%s197 + $0x190] sm:$0xff]
      %v257 = vld [vmem:[%s197 + $0x198] sm:$0xff]
      %v258 = vld [vmem:[%s197 + $0x1a0] sm:$0xff]
      %v259 = vld [vmem:[%s197 + $0x1a8] sm:$0xff]
      %v260 = vld [vmem:[%s197 + $0x1b0] sm:$0xff]
      %v261 = vld [vmem:[%s197 + $0x1b8] sm:$0xff]
      %v262 = vld [vmem:[%s197 + $0x1c0] sm:$0xff]
      %v263 = vld [vmem:[%s197 + $0x1c8] sm:$0xff]
      %v264 = vld [vmem:[%s197 + $0x1d0] sm:$0xff]
      %v265 = vld [vmem:[%s197 + $0x1d8] sm:$0xff]
      %v266 = vld [vmem:[%s197 + $0x1e0] sm:$0xff]
      %v267 = vld [vmem:[%s197 + $0x1e8] sm:$0xff]
      %v268 = vld [vmem:[%s197 + $0x1f0] sm:$0xff]
      %v269 = vld [vmem:[%s197 + $0x1f8] sm:$0xff]
      %v270 = vld [vmem:[%s197 + $0x200] sm:$0xff]
      %v271 = vld [vmem:[%s197 + $0x208] sm:$0xff]
      %v272 = vld [vmem:[%s197 + $0x210] sm:$0xff]
      %v273 = vld [vmem:[%s197 + $0x218] sm:$0xff]
      %v274 = vld [vmem:[%s197 + $0x220] sm:$0xff]
      %v275 = vld [vmem:[%s197 + $0x228] sm:$0xff]
      %v276 = vld [vmem:[%s197 + $0x230] sm:$0xff]
      %v277 = vld [vmem:[%s197 + $0x238] sm:$0xff]
      %v278 = vld [vmem:[%s197 + $0x240] sm:$0xff]
      %v279 = vld [vmem:[%s197 + $0x248] sm:$0xff]
      %v280 = vld [vmem:[%s197 + $0x250] sm:$0xff]
      %v281 = vld [vmem:[%s197 + $0x258] sm:$0xff]
      %v282 = vld [vmem:[%s197 + $0x260] sm:$0xff]
      %v283 = vld [vmem:[%s197 + $0x268] sm:$0xff]
      %v284 = vld [vmem:[%s197 + $0x270] sm:$0xff]
      %v285 = vld [vmem:[%s197 + $0x278] sm:$0xff]
      %v286 = vld [vmem:[%s197 + $0x280] sm:$0xff]
      %v287 = vld [vmem:[%s197 + $0x288] sm:$0xff]
      %v288 = vld [vmem:[%s197 + $0x290] sm:$0xff]
      %v289 = vld [vmem:[%s197 + $0x298] sm:$0xff]
      %v290 = vld [vmem:[%s197 + $0x2a0] sm:$0xff]
      %v291 = vld [vmem:[%s197 + $0x2a8] sm:$0xff]
      %v292 = vld [vmem:[%s197 + $0x2b0] sm:$0xff]
      %v293 = vld [vmem:[%s197 + $0x2b8] sm:$0xff]
      %v294 = vld [vmem:[%s197 + $0x2c0] sm:$0xff]
      %v295 = vld [vmem:[%s197 + $0x2c8] sm:$0xff]
      %v296 = vld [vmem:[%s197 + $0x2d0] sm:$0xff]
      %v297 = vld [vmem:[%s197 + $0x2d8] sm:$0xff]
      %v298 = vld [vmem:[%s197 + $0x2e0] sm:$0xff]
      %v299 = vld [vmem:[%s197 + $0x2e8] sm:$0xff]
      %v300 = vld [vmem:[%s197 + $0x2f0] sm:$0xff]
      %v301 = vld [vmem:[%s197 + $0x2f8] sm:$0xff]
      %v302 = vld [vmem:[%s3] sm:$0xff]
      %v303 = vld [vmem:[%s3 + $0x8] sm:$0xff]
      %v304 = vld [vmem:[%s3 + $0x10] sm:$0xff]
      %v305 = vld [vmem:[%s1] sm:$0xff]
      %v306 = vld [vmem:[%s1 + $0x8] sm:$0xff]
      %v307 = vld [vmem:[%s1 + $0x10] sm:$0xff]
      %v308 = vld [vmem:[%s1 + $0x18] sm:$0xff]
      %v309 = vld [vmem:[%s1 + $0x20] sm:$0xff]
      %v310 = vld [vmem:[%s1 + $0x28] sm:$0xff]
      %v311 = vld [vmem:[%s1 + $0x30] sm:$0xff]
      %v312 = vld [vmem:[%s1 + $0x38] sm:$0xff]
      %v313 = vld [vmem:[%s1 + $0x40] sm:$0xff]
      %v314 = vld [vmem:[%s1 + $0x48] sm:$0xff]
      %v315 = vld [vmem:[%s1 + $0x50] sm:$0xff]
      %v316 = vld [vmem:[%s1 + $0x58] sm:$0xff]
      %v317 = vld [vmem:[%s1 + $0x60] sm:$0xff]
      %v318 = vld [vmem:[%s1 + $0x68] sm:$0xff]
      %v319 = vld [vmem:[%s1 + $0x70] sm:$0xff]
      %v320 = vld [vmem:[%s1 + $0x78] sm:$0xff]
      %v321 = vld [vmem:[%s1 + $0x80] sm:$0xff]
      %v322 = vld [vmem:[%s1 + $0x88] sm:$0xff]
      %v323 = vld [vmem:[%s1 + $0x90] sm:$0xff]
      %v324 = vld [vmem:[%s1 + $0x98] sm:$0xff]
      %v325 = vld [vmem:[%s1 + $0xa0] sm:$0xff]
      %v326 = vld [vmem:[%s1 + $0xa8] sm:$0xff]
      %v327 = vld [vmem:[%s1 + $0xb0] sm:$0xff]
      %v328 = vld [vmem:[%s1 + $0xb8] sm:$0xff]
      %v329 = vld [vmem:[%s1 + $0xc0] sm:$0xff]
      %v330 = vld [vmem:[%s1 + $0xc8] sm:$0xff]
      %v331 = vld [vmem:[%s1 + $0xd0] sm:$0xff]
      %v332 = vld [vmem:[%s1 + $0xd8] sm:$0xff]
      %v333 = vld [vmem:[%s1 + $0xe0] sm:$0xff]
      %v334 = vld [vmem:[%s1 + $0xe8] sm:$0xff]
      %v335 = vld [vmem:[%s1 + $0xf0] sm:$0xff]
      %v336 = vld [vmem:[%s1 + $0xf8] sm:$0xff]
      %v337 = vld [vmem:[%s1 + $0x100] sm:$0xff]
      %v338 = vld [vmem:[%s1 + $0x108] sm:$0xff]
      %v339 = vld [vmem:[%s1 + $0x110] sm:$0xff]
      %v340 = vld [vmem:[%s1 + $0x118] sm:$0xff]
      %v341 = vld [vmem:[%s1 + $0x120] sm:$0xff]
      %v342 = vld [vmem:[%s1 + $0x128] sm:$0xff]
      %v343 = vld [vmem:[%s1 + $0x130] sm:$0xff]
      %v344 = vld [vmem:[%s1 + $0x138] sm:$0xff]
      %v345 = vld [vmem:[%s1 + $0x140] sm:$0xff]
      %v346 = vld [vmem:[%s1 + $0x148] sm:$0xff]
      %v347 = vld [vmem:[%s1 + $0x150] sm:$0xff]
      %v348 = vld [vmem:[%s1 + $0x158] sm:$0xff]
      %v349 = vld [vmem:[%s1 + $0x160] sm:$0xff]
      %v350 = vld [vmem:[%s1 + $0x168] sm:$0xff]
      %v351 = vld [vmem:[%s1 + $0x170] sm:$0xff]
      %v352 = vld [vmem:[%s1 + $0x178] sm:$0xff]
      %v353 = vld [vmem:[%s1 + $0x180] sm:$0xff]
      %v354 = vld [vmem:[%s1 + $0x188] sm:$0xff]
      %v355 = vld [vmem:[%s1 + $0x190] sm:$0xff]
      %v356 = vld [vmem:[%s1 + $0x198] sm:$0xff]
      %v357 = vld [vmem:[%s1 + $0x1a0] sm:$0xff]
      %v358 = vld [vmem:[%s1 + $0x1a8] sm:$0xff]
      %v359 = vld [vmem:[%s1 + $0x1b0] sm:$0xff]
      %v360 = vld [vmem:[%s1 + $0x1b8] sm:$0xff]
      %v361 = vld [vmem:[%s1 + $0x1c0] sm:$0xff]
      %v362 = vld [vmem:[%s1 + $0x1c8] sm:$0xff]
      %v363 = vld [vmem:[%s1 + $0x1d0] sm:$0xff]
      %v364 = vld [vmem:[%s1 + $0x1d8] sm:$0xff]
      %v365 = vld [vmem:[%s1 + $0x1e0] sm:$0xff]
      %v366 = vld [vmem:[%s1 + $0x1e8] sm:$0xff]
      %v367 = vld [vmem:[%s1 + $0x1f0] sm:$0xff]
      %v368 = vld [vmem:[%s1 + $0x1f8] sm:$0xff]
      %v369 = vld [vmem:[%s1 + $0x200] sm:$0xff]
      %v370 = vld [vmem:[%s1 + $0x208] sm:$0xff]
      %v371 = vld [vmem:[%s1 + $0x210] sm:$0xff]
      %v372 = vld [vmem:[%s1 + $0x218] sm:$0xff]
      %v373 = vld [vmem:[%s1 + $0x220] sm:$0xff]
      %v374 = vld [vmem:[%s1 + $0x228] sm:$0xff]
      %v375 = vld [vmem:[%s1 + $0x230] sm:$0xff]
      %v376 = vld [vmem:[%s1 + $0x238] sm:$0xff]
      %v377 = vld [vmem:[%s1 + $0x240] sm:$0xff]
      %v378 = vld [vmem:[%s1 + $0x248] sm:$0xff]
      %v379 = vld [vmem:[%s1 + $0x250] sm:$0xff]
      %v380 = vld [vmem:[%s1 + $0x258] sm:$0xff]
      %v381 = vld [vmem:[%s1 + $0x260] sm:$0xff]
      %v382 = vld [vmem:[%s1 + $0x268] sm:$0xff]
      %v383 = vld [vmem:[%s1 + $0x270] sm:$0xff]
      %v384 = vld [vmem:[%s1 + $0x278] sm:$0xff]
      %v385 = vld [vmem:[%s1 + $0x280] sm:$0xff]
      %v386 = vld [vmem:[%s1 + $0x288] sm:$0xff]
      %v387 = vld [vmem:[%s1 + $0x290] sm:$0xff]
      %v388 = vld [vmem:[%s1 + $0x298] sm:$0xff]
      %v389 = vld [vmem:[%s1 + $0x2a0] sm:$0xff]
      %v390 = vld [vmem:[%s1 + $0x2a8] sm:$0xff]
      %v391 = vld [vmem:[%s1 + $0x2b0] sm:$0xff]
      %v392 = vld [vmem:[%s1 + $0x2b8] sm:$0xff]
      %v393 = vld [vmem:[%s1 + $0x2c0] sm:$0xff]
      %v394 = vld [vmem:[%s1 + $0x2c8] sm:$0xff]
      %v395 = vld [vmem:[%s1 + $0x2d0] sm:$0xff]
      %v396 = vld [vmem:[%s1 + $0x2d8] sm:$0xff]
      %v397 = vld [vmem:[%s1 + $0x2e0] sm:$0xff]
      %v398 = vld [vmem:[%s1 + $0x2e8] sm:$0xff]
      %v399 = vld [vmem:[%s1 + $0x2f0] sm:$0xff]
      %v400 = vld [vmem:[%s1 + $0x2f8] sm:$0xff]
      %v401 = vperm.slane %v302, 0
      %v402 = vperm.slane %v303, 0
      %v403 = vperm.slane %v304, 0
      %404 = vmatpush.msra.mxu0 %v350
      %405 = vmatpush.msra.mxu0 %v347
      %406 = vmatpush.msra.mxu0 %v344
      %407 = vmatpush.msra.mxu0 %v341
      %408 = vmatpush.msra.mxu0 %v338
      %409 = vmatpush.msra.mxu0 %v335
      %410 = vmatpush.msra.mxu0 %v332
      %411 = vmatpush.msra.mxu0 %v329
      %412 = vmatpush.msra.mxu0 %v326
      %413 = vmatpush.msra.mxu0 %v323
      %414 = vmatpush.msra.mxu0 %v320
      %415 = vmatpush.msra.mxu0 %v317
      %416 = vmatpush.msra.mxu0 %v314
      %417 = vmatpush.msra.mxu0 %v311
      %418 = vmatpush.msra.mxu0 %v308
      %419 = vmatpush.msra.mxu0 %v305
      %420 = vmatmul.f32.gmra.mxu0 %v207
      %v421 = vpop.f32.mrf.mxu0
      %v422 = vadd.f32 %v401, %v421
      %423 = vmatmul.f32.gmra.mxu0 %v210
      %v424 = vpop.f32.mrf.mxu0
      %v425 = vadd.f32 %v401, %v424
      %426 = vmatmul.f32.gmra.mxu0 %v213
      %v427 = vpop.f32.mrf.mxu0
      %v428 = vadd.f32 %v401, %v427
      %429 = vmatmul.f32.gmra.mxu0 %v216
      %v430 = vpop.f32.mrf.mxu0
      %v431 = vadd.f32 %v401, %v430
      %432 = vmatmul.f32.gmra.mxu0 %v219
      %v433 = vpop.f32.mrf.mxu0
      %v434 = vadd.f32 %v401, %v433
      %435 = vmatmul.f32.gmra.mxu0 %v222
      %v436 = vpop.f32.mrf.mxu0
      %v437 = vadd.f32 %v401, %v436
      %438 = vmatmul.f32.gmra.mxu0 %v225
      %v439 = vpop.f32.mrf.mxu0
      %v440 = vadd.f32 %v401, %v439
      %441 = vmatmul.f32.gmra.mxu0 %v228
      %v442 = vpop.f32.mrf.mxu0
      %v443 = vadd.f32 %v401, %v442
      %444 = vmatmul.f32.gmra.mxu0 %v231
      %v445 = vpop.f32.mrf.mxu0
      %v446 = vadd.f32 %v401, %v445
      %447 = vmatmul.f32.gmra.mxu0 %v234
      %v448 = vpop.f32.mrf.mxu0
      %v449 = vadd.f32 %v401, %v448
      %450 = vmatmul.f32.gmra.mxu0 %v237
      %v451 = vpop.f32.mrf.mxu0
      %v452 = vadd.f32 %v401, %v451
      %453 = vmatmul.f32.gmra.mxu0 %v240
      %v454 = vpop.f32.mrf.mxu0
      %v455 = vadd.f32 %v401, %v454
      %456 = vmatmul.f32.gmra.mxu0 %v243
      %v457 = vpop.f32.mrf.mxu0
      %v458 = vadd.f32 %v401, %v457
      %459 = vmatmul.f32.gmra.mxu0 %v246
      %v460 = vpop.f32.mrf.mxu0
      %v461 = vadd.f32 %v401, %v460
      %462 = vmatmul.f32.gmra.mxu0 %v249
      %v463 = vpop.f32.mrf.mxu0
      %v464 = vadd.f32 %v401, %v463
      %465 = vmatmul.f32.gmra.mxu0 %v252
      %v466 = vpop.f32.mrf.mxu0
      %v467 = vadd.f32 %v401, %v466
      %468 = vmatmul.f32.gmra.mxu0 %v255
      %v469 = vpop.f32.mrf.mxu0
      %v470 = vadd.f32 %v401, %v469
      %471 = vmatmul.f32.gmra.mxu0 %v258
      %v472 = vpop.f32.mrf.mxu0
      %v473 = vadd.f32 %v401, %v472
      %474 = vmatmul.f32.gmra.mxu0 %v261
      %v475 = vpop.f32.mrf.mxu0
      %v476 = vadd.f32 %v401, %v475
      %477 = vmatmul.f32.gmra.mxu0 %v264
      %v478 = vpop.f32.mrf.mxu0
      %v479 = vadd.f32 %v401, %v478
      %480 = vmatmul.f32.gmra.mxu0 %v267
      %v481 = vpop.f32.mrf.mxu0
      %v482 = vadd.f32 %v401, %v481
      %483 = vmatmul.f32.gmra.mxu0 %v270
      %v484 = vpop.f32.mrf.mxu0
      %v485 = vadd.f32 %v401, %v484
      %486 = vmatmul.f32.gmra.mxu0 %v273
      %v487 = vpop.f32.mrf.mxu0
      %v488 = vadd.f32 %v401, %v487
      %489 = vmatmul.f32.gmra.mxu0 %v276
      %v490 = vpop.f32.mrf.mxu0
      %v491 = vadd.f32 %v401, %v490
      %492 = vmatmul.f32.gmra.mxu0 %v279
      %v493 = vpop.f32.mrf.mxu0
      %v494 = vadd.f32 %v401, %v493
      %495 = vmatmul.f32.gmra.mxu0 %v282
      %v496 = vpop.f32.mrf.mxu0
      %v497 = vadd.f32 %v401, %v496
      %498 = vmatmul.f32.gmra.mxu0 %v285
      %v499 = vpop.f32.mrf.mxu0
      %v500 = vadd.f32 %v401, %v499
      %501 = vmatmul.f32.gmra.mxu0 %v288
      %v502 = vpop.f32.mrf.mxu0
      %v503 = vadd.f32 %v401, %v502
      %504 = vmatmul.f32.gmra.mxu0 %v291
      %v505 = vpop.f32.mrf.mxu0
      %v506 = vadd.f32 %v401, %v505
      %507 = vmatmul.f32.gmra.mxu0 %v294
      %v508 = vpop.f32.mrf.mxu0
      %v509 = vadd.f32 %v401, %v508
      %510 = vmatmul.f32.gmra.mxu0 %v297
      %v511 = vpop.f32.mrf.mxu0
      %v512 = vadd.f32 %v401, %v511
      %513 = vmatmul.f32.gmra.mxu0 %v300
      %v514 = vpop.f32.mrf.mxu0
      %v515 = vadd.f32 %v401, %v514
      %516 = vdwg.mxu0
      %517 = vmatpush.msra.mxu0 %v398
      %518 = vmatpush.msra.mxu0 %v395
      %519 = vmatpush.msra.mxu0 %v392
      %520 = vmatpush.msra.mxu0 %v389
      %521 = vmatpush.msra.mxu0 %v386
      %522 = vmatpush.msra.mxu0 %v383
      %523 = vmatpush.msra.mxu0 %v380
      %524 = vmatpush.msra.mxu0 %v377
      %525 = vmatpush.msra.mxu0 %v374
      %526 = vmatpush.msra.mxu0 %v371
      %527 = vmatpush.msra.mxu0 %v368
      %528 = vmatpush.msra.mxu0 %v365
      %529 = vmatpush.msra.mxu0 %v362
      %530 = vmatpush.msra.mxu0 %v359
      %531 = vmatpush.msra.mxu0 %v356
      %532 = vmatpush.msra.mxu0 %v353
      %533 = vmatmul.f32.gmra.mxu0 %v208
      %v534 = vpop.f32.mrf.mxu0
      %v535 = vadd.f32 %v422, %v534
      %536 = vmatmul.f32.gmra.mxu0 %v211
      %v537 = vpop.f32.mrf.mxu0
      %v538 = vadd.f32 %v425, %v537
      %539 = vmatmul.f32.gmra.mxu0 %v214
      %v540 = vpop.f32.mrf.mxu0
      %v541 = vadd.f32 %v428, %v540
      %542 = vmatmul.f32.gmra.mxu0 %v217
      %v543 = vpop.f32.mrf.mxu0
      %v544 = vadd.f32 %v431, %v543
      %545 = vmatmul.f32.gmra.mxu0 %v220
      %v546 = vpop.f32.mrf.mxu0
      %v547 = vadd.f32 %v434, %v546
      %548 = vmatmul.f32.gmra.mxu0 %v223
      %v549 = vpop.f32.mrf.mxu0
      %v550 = vadd.f32 %v437, %v549
      %551 = vmatmul.f32.gmra.mxu0 %v226
      %v552 = vpop.f32.mrf.mxu0
      %v553 = vadd.f32 %v440, %v552
      %554 = vmatmul.f32.gmra.mxu0 %v229
      %v555 = vpop.f32.mrf.mxu0
      %v556 = vadd.f32 %v443, %v555
      %557 = vmatmul.f32.gmra.mxu0 %v232
      %v558 = vpop.f32.mrf.mxu0
      %v559 = vadd.f32 %v446, %v558
      %560 = vmatmul.f32.gmra.mxu0 %v235
      %v561 = vpop.f32.mrf.mxu0
      %v562 = vadd.f32 %v449, %v561
      %563 = vmatmul.f32.gmra.mxu0 %v238
      %v564 = vpop.f32.mrf.mxu0
      %v565 = vadd.f32 %v452, %v564
      %566 = vmatmul.f32.gmra.mxu0 %v241
      %v567 = vpop.f32.mrf.mxu0
      %v568 = vadd.f32 %v455, %v567
      %569 = vmatmul.f32.gmra.mxu0 %v244
      %v570 = vpop.f32.mrf.mxu0
      %v571 = vadd.f32 %v458, %v570
      %572 = vmatmul.f32.gmra.mxu0 %v247
      %v573 = vpop.f32.mrf.mxu0
      %v574 = vadd.f32 %v461, %v573
      %575 = vmatmul.f32.gmra.mxu0 %v250
      %v576 = vpop.f32.mrf.mxu0
      %v577 = vadd.f32 %v464, %v576
      %578 = vmatmul.f32.gmra.mxu0 %v253
      %v579 = vpop.f32.mrf.mxu0
      %v580 = vadd.f32 %v467, %v579
      %581 = vmatmul.f32.gmra.mxu0 %v256
      %v582 = vpop.f32.mrf.mxu0
      %v583 = vadd.f32 %v470, %v582
      %584 = vmatmul.f32.gmra.mxu0 %v259
      %v585 = vpop.f32.mrf.mxu0
      %v586 = vadd.f32 %v473, %v585
      %587 = vmatmul.f32.gmra.mxu0 %v262
      %v588 = vpop.f32.mrf.mxu0
      %v589 = vadd.f32 %v476, %v588
      %590 = vmatmul.f32.gmra.mxu0 %v265
      %v591 = vpop.f32.mrf.mxu0
      %v592 = vadd.f32 %v479, %v591
      %593 = vmatmul.f32.gmra.mxu0 %v268
      %v594 = vpop.f32.mrf.mxu0
      %v595 = vadd.f32 %v482, %v594
      %596 = vmatmul.f32.gmra.mxu0 %v271
      %v597 = vpop.f32.mrf.mxu0
      %v598 = vadd.f32 %v485, %v597
      %599 = vmatmul.f32.gmra.mxu0 %v274
      %v600 = vpop.f32.mrf.mxu0
      %v601 = vadd.f32 %v488, %v600
      %602 = vmatmul.f32.gmra.mxu0 %v277
      %v603 = vpop.f32.mrf.mxu0
      %v604 = vadd.f32 %v491, %v603
      %605 = vmatmul.f32.gmra.mxu0 %v280
      %v606 = vpop.f32.mrf.mxu0
      %v607 = vadd.f32 %v494, %v606
      %608 = vmatmul.f32.gmra.mxu0 %v283
      %v609 = vpop.f32.mrf.mxu0
      %v610 = vadd.f32 %v497, %v609
      %611 = vmatmul.f32.gmra.mxu0 %v286
      %v612 = vpop.f32.mrf.mxu0
      %v613 = vadd.f32 %v500, %v612
      %614 = vmatmul.f32.gmra.mxu0 %v289
      %v615 = vpop.f32.mrf.mxu0
      %v616 = vadd.f32 %v503, %v615
      %617 = vmatmul.f32.gmra.mxu0 %v292
      %v618 = vpop.f32.mrf.mxu0
      %v619 = vadd.f32 %v506, %v618
      %620 = vmatmul.f32.gmra.mxu0 %v295
      %v621 = vpop.f32.mrf.mxu0
      %v622 = vadd.f32 %v509, %v621
      %623 = vmatmul.f32.gmra.mxu0 %v298
      %v624 = vpop.f32.mrf.mxu0
      %v625 = vadd.f32 %v512, %v624
      %626 = vmatmul.f32.gmra.mxu0 %v301
      %v627 = vpop.f32.mrf.mxu0
      %v628 = vadd.f32 %v515, %v627
      %629 = vdwg.mxu0
      %630 = vmatpush.msra.mxu0 %v351
      %631 = vmatpush.msra.mxu0 %v348
      %632 = vmatpush.msra.mxu0 %v345
      %633 = vmatpush.msra.mxu0 %v342
      %634 = vmatpush.msra.mxu0 %v339
      %635 = vmatpush.msra.mxu0 %v336
      %636 = vmatpush.msra.mxu0 %v333
      %637 = vmatpush.msra.mxu0 %v330
      %638 = vmatpush.msra.mxu0 %v327
      %639 = vmatpush.msra.mxu0 %v324
      %640 = vmatpush.msra.mxu0 %v321
      %641 = vmatpush.msra.mxu0 %v318
      %642 = vmatpush.msra.mxu0 %v315
      %643 = vmatpush.msra.mxu0 %v312
      %644 = vmatpush.msra.mxu0 %v309
      %645 = vmatpush.msra.mxu0 %v306
      %646 = vmatmul.f32.gmra.mxu0 %v207
      %v647 = vpop.f32.mrf.mxu0
      %v648 = vadd.f32 %v402, %v647
      %649 = vmatmul.f32.gmra.mxu0 %v210
      %v650 = vpop.f32.mrf.mxu0
      %v651 = vadd.f32 %v402, %v650
      %652 = vmatmul.f32.gmra.mxu0 %v213
      %v653 = vpop.f32.mrf.mxu0
      %v654 = vadd.f32 %v402, %v653
      %655 = vmatmul.f32.gmra.mxu0 %v216
      %v656 = vpop.f32.mrf.mxu0
      %v657 = vadd.f32 %v402, %v656
      %658 = vmatmul.f32.gmra.mxu0 %v219
      %v659 = vpop.f32.mrf.mxu0
      %v660 = vadd.f32 %v402, %v659
      %661 = vmatmul.f32.gmra.mxu0 %v222
      %v662 = vpop.f32.mrf.mxu0
      %v663 = vadd.f32 %v402, %v662
      %664 = vmatmul.f32.gmra.mxu0 %v225
      %v665 = vpop.f32.mrf.mxu0
      %v666 = vadd.f32 %v402, %v665
      %667 = vmatmul.f32.gmra.mxu0 %v228
      %v668 = vpop.f32.mrf.mxu0
      %v669 = vadd.f32 %v402, %v668
      %670 = vmatmul.f32.gmra.mxu0 %v231
      %v671 = vpop.f32.mrf.mxu0
      %v672 = vadd.f32 %v402, %v671
      %673 = vmatmul.f32.gmra.mxu0 %v234
      %v674 = vpop.f32.mrf.mxu0
      %v675 = vadd.f32 %v402, %v674
      %676 = vmatmul.f32.gmra.mxu0 %v237
      %v677 = vpop.f32.mrf.mxu0
      %v678 = vadd.f32 %v402, %v677
      %679 = vmatmul.f32.gmra.mxu0 %v240
      %v680 = vpop.f32.mrf.mxu0
      %v681 = vadd.f32 %v402, %v680
      %682 = vmatmul.f32.gmra.mxu0 %v243
      %v683 = vpop.f32.mrf.mxu0
      %v684 = vadd.f32 %v402, %v683
      %685 = vmatmul.f32.gmra.mxu0 %v246
      %v686 = vpop.f32.mrf.mxu0
      %v687 = vadd.f32 %v402, %v686
      %688 = vmatmul.f32.gmra.mxu0 %v249
      %v689 = vpop.f32.mrf.mxu0
      %v690 = vadd.f32 %v402, %v689
      %691 = vmatmul.f32.gmra.mxu0 %v252
      %v692 = vpop.f32.mrf.mxu0
      %v693 = vadd.f32 %v402, %v692
      %694 = vmatmul.f32.gmra.mxu0 %v255
      %v695 = vpop.f32.mrf.mxu0
      %v696 = vadd.f32 %v402, %v695
      %697 = vmatmul.f32.gmra.mxu0 %v258
      %v698 = vpop.f32.mrf.mxu0
      %v699 = vadd.f32 %v402, %v698
      %700 = vmatmul.f32.gmra.mxu0 %v261
      %v701 = vpop.f32.mrf.mxu0
      %v702 = vadd.f32 %v402, %v701
      %703 = vmatmul.f32.gmra.mxu0 %v264
      %v704 = vpop.f32.mrf.mxu0
      %v705 = vadd.f32 %v402, %v704
      %706 = vmatmul.f32.gmra.mxu0 %v267
      %v707 = vpop.f32.mrf.mxu0
      %v708 = vadd.f32 %v402, %v707
      %709 = vmatmul.f32.gmra.mxu0 %v270
      %v710 = vpop.f32.mrf.mxu0
      %v711 = vadd.f32 %v402, %v710
      %712 = vmatmul.f32.gmra.mxu0 %v273
      %v713 = vpop.f32.mrf.mxu0
      %v714 = vadd.f32 %v402, %v713
      %715 = vmatmul.f32.gmra.mxu0 %v276
      %v716 = vpop.f32.mrf.mxu0
      %v717 = vadd.f32 %v402, %v716
      %718 = vmatmul.f32.gmra.mxu0 %v279
      %v719 = vpop.f32.mrf.mxu0
      %v720 = vadd.f32 %v402, %v719
      %721 = vmatmul.f32.gmra.mxu0 %v282
      %v722 = vpop.f32.mrf.mxu0
      %v723 = vadd.f32 %v402, %v722
      %724 = vmatmul.f32.gmra.mxu0 %v285
      %v725 = vpop.f32.mrf.mxu0
      %v726 = vadd.f32 %v402, %v725
      %727 = vmatmul.f32.gmra.mxu0 %v288
      %v728 = vpop.f32.mrf.mxu0
      %v729 = vadd.f32 %v402, %v728
      %730 = vmatmul.f32.gmra.mxu0 %v291
      %v731 = vpop.f32.mrf.mxu0
      %v732 = vadd.f32 %v402, %v731
      %733 = vmatmul.f32.gmra.mxu0 %v294
      %v734 = vpop.f32.mrf.mxu0
      %v735 = vadd.f32 %v402, %v734
      %736 = vmatmul.f32.gmra.mxu0 %v297
      %v737 = vpop.f32.mrf.mxu0
      %v738 = vadd.f32 %v402, %v737
      %739 = vmatmul.f32.gmra.mxu0 %v300
      %v740 = vpop.f32.mrf.mxu0
      %v741 = vadd.f32 %v402, %v740
      %742 = vdwg.mxu0
      %743 = vmatpush.msra.mxu0 %v399
      %744 = vmatpush.msra.mxu0 %v396
      %745 = vmatpush.msra.mxu0 %v393
      %746 = vmatpush.msra.mxu0 %v390
      %747 = vmatpush.msra.mxu0 %v387
      %748 = vmatpush.msra.mxu0 %v384
      %749 = vmatpush.msra.mxu0 %v381
      %750 = vmatpush.msra.mxu0 %v378
      %751 = vmatpush.msra.mxu0 %v375
      %752 = vmatpush.msra.mxu0 %v372
      %753 = vmatpush.msra.mxu0 %v369
      %754 = vmatpush.msra.mxu0 %v366
      %755 = vmatpush.msra.mxu0 %v363
      %756 = vmatpush.msra.mxu0 %v360
      %757 = vmatpush.msra.mxu0 %v357
      %758 = vmatpush.msra.mxu0 %v354
      %759 = vmatmul.f32.gmra.mxu0 %v208
      %v760 = vpop.f32.mrf.mxu0
      %v761 = vadd.f32 %v648, %v760
      %762 = vmatmul.f32.gmra.mxu0 %v211
      %v763 = vpop.f32.mrf.mxu0
      %v764 = vadd.f32 %v651, %v763
      %765 = vmatmul.f32.gmra.mxu0 %v214
      %v766 = vpop.f32.mrf.mxu0
      %v767 = vadd.f32 %v654, %v766
      %768 = vmatmul.f32.gmra.mxu0 %v217
      %v769 = vpop.f32.mrf.mxu0
      %v770 = vadd.f32 %v657, %v769
      %771 = vmatmul.f32.gmra.mxu0 %v220
      %v772 = vpop.f32.mrf.mxu0
      %v773 = vadd.f32 %v660, %v772
      %774 = vmatmul.f32.gmra.mxu0 %v223
      %v775 = vpop.f32.mrf.mxu0
      %v776 = vadd.f32 %v663, %v775
      %777 = vmatmul.f32.gmra.mxu0 %v226
      %v778 = vpop.f32.mrf.mxu0
      %v779 = vadd.f32 %v666, %v778
      %780 = vmatmul.f32.gmra.mxu0 %v229
      %v781 = vpop.f32.mrf.mxu0
      %v782 = vadd.f32 %v669, %v781
      %783 = vmatmul.f32.gmra.mxu0 %v232
      %v784 = vpop.f32.mrf.mxu0
      %v785 = vadd.f32 %v672, %v784
      %786 = vmatmul.f32.gmra.mxu0 %v235
      %v787 = vpop.f32.mrf.mxu0
      %v788 = vadd.f32 %v675, %v787
      %789 = vmatmul.f32.gmra.mxu0 %v238
      %v790 = vpop.f32.mrf.mxu0
      %v791 = vadd.f32 %v678, %v790
      %792 = vmatmul.f32.gmra.mxu0 %v241
      %v793 = vpop.f32.mrf.mxu0
      %v794 = vadd.f32 %v681, %v793
      %795 = vmatmul.f32.gmra.mxu0 %v244
      %v796 = vpop.f32.mrf.mxu0
      %v797 = vadd.f32 %v684, %v796
      %798 = vmatmul.f32.gmra.mxu0 %v247
      %v799 = vpop.f32.mrf.mxu0
      %v800 = vadd.f32 %v687, %v799
      %801 = vmatmul.f32.gmra.mxu0 %v250
      %v802 = vpop.f32.mrf.mxu0
      %v803 = vadd.f32 %v690, %v802
      %804 = vmatmul.f32.gmra.mxu0 %v253
      %v805 = vpop.f32.mrf.mxu0
      %v806 = vadd.f32 %v693, %v805
      %807 = vmatmul.f32.gmra.mxu0 %v256
      %v808 = vpop.f32.mrf.mxu0
      %v809 = vadd.f32 %v696, %v808
      %810 = vmatmul.f32.gmra.mxu0 %v259
      %v811 = vpop.f32.mrf.mxu0
      %v812 = vadd.f32 %v699, %v811
      %813 = vmatmul.f32.gmra.mxu0 %v262
      %v814 = vpop.f32.mrf.mxu0
      %v815 = vadd.f32 %v702, %v814
      %816 = vmatmul.f32.gmra.mxu0 %v265
      %v817 = vpop.f32.mrf.mxu0
      %v818 = vadd.f32 %v705, %v817
      %819 = vmatmul.f32.gmra.mxu0 %v268
      %v820 = vpop.f32.mrf.mxu0
      %v821 = vadd.f32 %v708, %v820
      %822 = vmatmul.f32.gmra.mxu0 %v271
      %v823 = vpop.f32.mrf.mxu0
      %v824 = vadd.f32 %v711, %v823
      %825 = vmatmul.f32.gmra.mxu0 %v274
      %v826 = vpop.f32.mrf.mxu0
      %v827 = vadd.f32 %v714, %v826
      %828 = vmatmul.f32.gmra.mxu0 %v277
      %v829 = vpop.f32.mrf.mxu0
      %v830 = vadd.f32 %v717, %v829
      %831 = vmatmul.f32.gmra.mxu0 %v280
      %v832 = vpop.f32.mrf.mxu0
      %v833 = vadd.f32 %v720, %v832
      %834 = vmatmul.f32.gmra.mxu0 %v283
      %v835 = vpop.f32.mrf.mxu0
      %v836 = vadd.f32 %v723, %v835
      %837 = vmatmul.f32.gmra.mxu0 %v286
      %v838 = vpop.f32.mrf.mxu0
      %v839 = vadd.f32 %v726, %v838
      %840 = vmatmul.f32.gmra.mxu0 %v289
      %v841 = vpop.f32.mrf.mxu0
      %v842 = vadd.f32 %v729, %v841
      %843 = vmatmul.f32.gmra.mxu0 %v292
      %v844 = vpop.f32.mrf.mxu0
      %v845 = vadd.f32 %v732, %v844
      %846 = vmatmul.f32.gmra.mxu0 %v295
      %v847 = vpop.f32.mrf.mxu0
      %v848 = vadd.f32 %v735, %v847
      %849 = vmatmul.f32.gmra.mxu0 %v298
      %v850 = vpop.f32.mrf.mxu0
      %v851 = vadd.f32 %v738, %v850
      %852 = vmatmul.f32.gmra.mxu0 %v301
      %v853 = vpop.f32.mrf.mxu0
      %v854 = vadd.f32 %v741, %v853
      %855 = vdwg.mxu0
      %856 = vmatpush.msra.mxu0 %v352
      %857 = vmatpush.msra.mxu0 %v349
      %858 = vmatpush.msra.mxu0 %v346
      %859 = vmatpush.msra.mxu0 %v343
      %860 = vmatpush.msra.mxu0 %v340
      %861 = vmatpush.msra.mxu0 %v337
      %862 = vmatpush.msra.mxu0 %v334
      %863 = vmatpush.msra.mxu0 %v331
      %864 = vmatpush.msra.mxu0 %v328
      %865 = vmatpush.msra.mxu0 %v325
      %866 = vmatpush.msra.mxu0 %v322
      %867 = vmatpush.msra.mxu0 %v319
      %868 = vmatpush.msra.mxu0 %v316
      %869 = vmatpush.msra.mxu0 %v313
      %870 = vmatpush.msra.mxu0 %v310
      %871 = vmatpush.msra.mxu0 %v307
      %872 = vmatmul.f32.gmra.mxu0 %v207
      %v873 = vpop.f32.mrf.mxu0
      %v874 = vadd.f32 %v403, %v873
      %875 = vmatmul.f32.gmra.mxu0 %v210
      %v876 = vpop.f32.mrf.mxu0
      %v877 = vadd.f32 %v403, %v876
      %878 = vmatmul.f32.gmra.mxu0 %v213
      %v879 = vpop.f32.mrf.mxu0
      %v880 = vadd.f32 %v403, %v879
      %881 = vmatmul.f32.gmra.mxu0 %v216
      %v882 = vpop.f32.mrf.mxu0
      %v883 = vadd.f32 %v403, %v882
      %884 = vmatmul.f32.gmra.mxu0 %v219
      %v885 = vpop.f32.mrf.mxu0
      %v886 = vadd.f32 %v403, %v885
      %887 = vmatmul.f32.gmra.mxu0 %v222
      %v888 = vpop.f32.mrf.mxu0
      %v889 = vadd.f32 %v403, %v888
      %890 = vmatmul.f32.gmra.mxu0 %v225
      %v891 = vpop.f32.mrf.mxu0
      %v892 = vadd.f32 %v403, %v891
      %893 = vmatmul.f32.gmra.mxu0 %v228
      %v894 = vpop.f32.mrf.mxu0
      %v895 = vadd.f32 %v403, %v894
      %896 = vmatmul.f32.gmra.mxu0 %v231
      %v897 = vpop.f32.mrf.mxu0
      %v898 = vadd.f32 %v403, %v897
      %899 = vmatmul.f32.gmra.mxu0 %v234
      %v900 = vpop.f32.mrf.mxu0
      %v901 = vadd.f32 %v403, %v900
      %902 = vmatmul.f32.gmra.mxu0 %v237
      %v903 = vpop.f32.mrf.mxu0
      %v904 = vadd.f32 %v403, %v903
      %905 = vmatmul.f32.gmra.mxu0 %v240
      %v906 = vpop.f32.mrf.mxu0
      %v907 = vadd.f32 %v403, %v906
      %908 = vmatmul.f32.gmra.mxu0 %v243
      %v909 = vpop.f32.mrf.mxu0
      %v910 = vadd.f32 %v403, %v909
      %911 = vmatmul.f32.gmra.mxu0 %v246
      %v912 = vpop.f32.mrf.mxu0
      %v913 = vadd.f32 %v403, %v912
      %914 = vmatmul.f32.gmra.mxu0 %v249
      %v915 = vpop.f32.mrf.mxu0
      %v916 = vadd.f32 %v403, %v915
      %917 = vmatmul.f32.gmra.mxu0 %v252
      %v918 = vpop.f32.mrf.mxu0
      %v919 = vadd.f32 %v403, %v918
      %920 = vmatmul.f32.gmra.mxu0 %v255
      %v921 = vpop.f32.mrf.mxu0
      %v922 = vadd.f32 %v403, %v921
      %923 = vmatmul.f32.gmra.mxu0 %v258
      %v924 = vpop.f32.mrf.mxu0
      %v925 = vadd.f32 %v403, %v924
      %926 = vmatmul.f32.gmra.mxu0 %v261
      %v927 = vpop.f32.mrf.mxu0
      %v928 = vadd.f32 %v403, %v927
      %929 = vmatmul.f32.gmra.mxu0 %v264
      %v930 = vpop.f32.mrf.mxu0
      %v931 = vadd.f32 %v403, %v930
      %932 = vmatmul.f32.gmra.mxu0 %v267
      %v933 = vpop.f32.mrf.mxu0
      %v934 = vadd.f32 %v403, %v933
      %935 = vmatmul.f32.gmra.mxu0 %v270
      %v936 = vpop.f32.mrf.mxu0
      %v937 = vadd.f32 %v403, %v936
      %938 = vmatmul.f32.gmra.mxu0 %v273
      %v939 = vpop.f32.mrf.mxu0
      %v940 = vadd.f32 %v403, %v939
      %941 = vmatmul.f32.gmra.mxu0 %v276
      %v942 = vpop.f32.mrf.mxu0
      %v943 = vadd.f32 %v403, %v942
      %944 = vmatmul.f32.gmra.mxu0 %v279
      %v945 = vpop.f32.mrf.mxu0
      %v946 = vadd.f32 %v403, %v945
      %947 = vmatmul.f32.gmra.mxu0 %v282
      %v948 = vpop.f32.mrf.mxu0
      %v949 = vadd.f32 %v403, %v948
      %950 = vmatmul.f32.gmra.mxu0 %v285
      %v951 = vpop.f32.mrf.mxu0
      %v952 = vadd.f32 %v403, %v951
      %953 = vmatmul.f32.gmra.mxu0 %v288
      %v954 = vpop.f32.mrf.mxu0
      %v955 = vadd.f32 %v403, %v954
      %956 = vmatmul.f32.gmra.mxu0 %v291
      %v957 = vpop.f32.mrf.mxu0
      %v958 = vadd.f32 %v403, %v957
      %959 = vmatmul.f32.gmra.mxu0 %v294
      %v960 = vpop.f32.mrf.mxu0
      %v961 = vadd.f32 %v403, %v960
      %962 = vmatmul.f32.gmra.mxu0 %v297
      %v963 = vpop.f32.mrf.mxu0
      %v964 = vadd.f32 %v403, %v963
      %965 = vmatmul.f32.gmra.mxu0 %v300
      %v966 = vpop.f32.mrf.mxu0
      %v967 = vadd.f32 %v403, %v966
      %968 = vdwg.mxu0
      %969 = vmatpush.msra.mxu0 %v400
      %970 = vmatpush.msra.mxu0 %v397
      %971 = vmatpush.msra.mxu0 %v394
      %972 = vmatpush.msra.mxu0 %v391
      %973 = vmatpush.msra.mxu0 %v388
      %974 = vmatpush.msra.mxu0 %v385
      %975 = vmatpush.msra.mxu0 %v382
      %976 = vmatpush.msra.mxu0 %v379
      %977 = vmatpush.msra.mxu0 %v376
      %978 = vmatpush.msra.mxu0 %v373
      %979 = vmatpush.msra.mxu0 %v370
      %980 = vmatpush.msra.mxu0 %v367
      %981 = vmatpush.msra.mxu0 %v364
      %982 = vmatpush.msra.mxu0 %v361
      %983 = vmatpush.msra.mxu0 %v358
      %984 = vmatpush.msra.mxu0 %v355
      %985 = vmatmul.f32.gmra.mxu0 %v208
      %v986 = vpop.f32.mrf.mxu0
      %v987 = vadd.f32 %v874, %v986
      %988 = vmatmul.f32.gmra.mxu0 %v211
      %v989 = vpop.f32.mrf.mxu0
      %v990 = vadd.f32 %v877, %v989
      %991 = vmatmul.f32.gmra.mxu0 %v214
      %v992 = vpop.f32.mrf.mxu0
      %v993 = vadd.f32 %v880, %v992
      %994 = vmatmul.f32.gmra.mxu0 %v217
      %v995 = vpop.f32.mrf.mxu0
      %v996 = vadd.f32 %v883, %v995
      %997 = vmatmul.f32.gmra.mxu0 %v220
      %v998 = vpop.f32.mrf.mxu0
      %v999 = vadd.f32 %v886, %v998
      %1000 = vmatmul.f32.gmra.mxu0 %v223
      %v1001 = vpop.f32.mrf.mxu0
      %v1002 = vadd.f32 %v889, %v1001
      %1003 = vmatmul.f32.gmra.mxu0 %v226
      %v1004 = vpop.f32.mrf.mxu0
      %v1005 = vadd.f32 %v892, %v1004
      %1006 = vmatmul.f32.gmra.mxu0 %v229
      %v1007 = vpop.f32.mrf.mxu0
      %v1008 = vadd.f32 %v895, %v1007
      %1009 = vmatmul.f32.gmra.mxu0 %v232
      %v1010 = vpop.f32.mrf.mxu0
      %v1011 = vadd.f32 %v898, %v1010
      %1012 = vmatmul.f32.gmra.mxu0 %v235
      %v1013 = vpop.f32.mrf.mxu0
      %v1014 = vadd.f32 %v901, %v1013
      %1015 = vmatmul.f32.gmra.mxu0 %v238
      %v1016 = vpop.f32.mrf.mxu0
      %v1017 = vadd.f32 %v904, %v1016
      %1018 = vmatmul.f32.gmra.mxu0 %v241
      %v1019 = vpop.f32.mrf.mxu0
      %v1020 = vadd.f32 %v907, %v1019
      %1021 = vmatmul.f32.gmra.mxu0 %v244
      %v1022 = vpop.f32.mrf.mxu0
      %v1023 = vadd.f32 %v910, %v1022
      %1024 = vmatmul.f32.gmra.mxu0 %v247
      %v1025 = vpop.f32.mrf.mxu0
      %v1026 = vadd.f32 %v913, %v1025
      %1027 = vmatmul.f32.gmra.mxu0 %v250
      %v1028 = vpop.f32.mrf.mxu0
      %v1029 = vadd.f32 %v916, %v1028
      %1030 = vmatmul.f32.gmra.mxu0 %v253
      %v1031 = vpop.f32.mrf.mxu0
      %v1032 = vadd.f32 %v919, %v1031
      %1033 = vmatmul.f32.gmra.mxu0 %v256
      %v1034 = vpop.f32.mrf.mxu0
      %v1035 = vadd.f32 %v922, %v1034
      %1036 = vmatmul.f32.gmra.mxu0 %v259
      %v1037 = vpop.f32.mrf.mxu0
      %v1038 = vadd.f32 %v925, %v1037
      %1039 = vmatmul.f32.gmra.mxu0 %v262
      %v1040 = vpop.f32.mrf.mxu0
      %v1041 = vadd.f32 %v928, %v1040
      %1042 = vmatmul.f32.gmra.mxu0 %v265
      %v1043 = vpop.f32.mrf.mxu0
      %v1044 = vadd.f32 %v931, %v1043
      %1045 = vmatmul.f32.gmra.mxu0 %v268
      %v1046 = vpop.f32.mrf.mxu0
      %v1047 = vadd.f32 %v934, %v1046
      %1048 = vmatmul.f32.gmra.mxu0 %v271
      %v1049 = vpop.f32.mrf.mxu0
      %v1050 = vadd.f32 %v937, %v1049
      %1051 = vmatmul.f32.gmra.mxu0 %v274
      %v1052 = vpop.f32.mrf.mxu0
      %v1053 = vadd.f32 %v940, %v1052
      %1054 = vmatmul.f32.gmra.mxu0 %v277
      %v1055 = vpop.f32.mrf.mxu0
      %v1056 = vadd.f32 %v943, %v1055
      %1057 = vmatmul.f32.gmra.mxu0 %v280
      %v1058 = vpop.f32.mrf.mxu0
      %v1059 = vadd.f32 %v946, %v1058
      %1060 = vmatmul.f32.gmra.mxu0 %v283
      %v1061 = vpop.f32.mrf.mxu0
      %v1062 = vadd.f32 %v949, %v1061
      %1063 = vmatmul.f32.gmra.mxu0 %v286
      %v1064 = vpop.f32.mrf.mxu0
      %v1065 = vadd.f32 %v952, %v1064
      %1066 = vmatmul.f32.gmra.mxu0 %v289
      %v1067 = vpop.f32.mrf.mxu0
      %v1068 = vadd.f32 %v955, %v1067
      %1069 = vmatmul.f32.gmra.mxu0 %v292
      %v1070 = vpop.f32.mrf.mxu0
      %v1071 = vadd.f32 %v958, %v1070
      %1072 = vmatmul.f32.gmra.mxu0 %v295
      %v1073 = vpop.f32.mrf.mxu0
      %v1074 = vadd.f32 %v961, %v1073
      %1075 = vmatmul.f32.gmra.mxu0 %v298
      %v1076 = vpop.f32.mrf.mxu0
      %v1077 = vadd.f32 %v964, %v1076
      %1078 = vmatmul.f32.gmra.mxu0 %v301
      %v1079 = vpop.f32.mrf.mxu0
      %v1080 = vadd.f32 %v967, %v1079
      %1081 = vdwg.mxu0
      %v1082 = vxor.u32 %v535, 2147483648
      %v1083 = vxor.u32 %v761, 2147483648
      %v1084 = vxor.u32 %v987, 2147483648
      %v1085 = vxor.u32 %v538, 2147483648
      %v1086 = vxor.u32 %v764, 2147483648
      %v1087 = vxor.u32 %v990, 2147483648
      %v1088 = vxor.u32 %v541, 2147483648
      %v1089 = vxor.u32 %v767, 2147483648
      %v1090 = vxor.u32 %v993, 2147483648
      %v1091 = vxor.u32 %v544, 2147483648
      %v1092 = vxor.u32 %v770, 2147483648
      %v1093 = vxor.u32 %v996, 2147483648
      %v1094 = vxor.u32 %v547, 2147483648
      %v1095 = vxor.u32 %v773, 2147483648
      %v1096 = vxor.u32 %v999, 2147483648
      %v1097 = vxor.u32 %v550, 2147483648
      %v1098 = vxor.u32 %v776, 2147483648
      %v1099 = vxor.u32 %v1002, 2147483648
      %v1100 = vxor.u32 %v553, 2147483648
      %v1101 = vxor.u32 %v779, 2147483648
      %v1102 = vxor.u32 %v1005, 2147483648
      %v1103 = vxor.u32 %v556, 2147483648
      %v1104 = vxor.u32 %v782, 2147483648
      %v1105 = vxor.u32 %v1008, 2147483648
      %v1106 = vxor.u32 %v559, 2147483648
      %v1107 = vxor.u32 %v785, 2147483648
      %v1108 = vxor.u32 %v1011, 2147483648
      %v1109 = vxor.u32 %v562, 2147483648
      %v1110 = vxor.u32 %v788, 2147483648
      %v1111 = vxor.u32 %v1014, 2147483648
      %v1112 = vxor.u32 %v565, 2147483648
      %v1113 = vxor.u32 %v791, 2147483648
      %v1114 = vxor.u32 %v1017, 2147483648
      %v1115 = vxor.u32 %v568, 2147483648
      %v1116 = vxor.u32 %v794, 2147483648
      %v1117 = vxor.u32 %v1020, 2147483648
      %v1118 = vxor.u32 %v571, 2147483648
      %v1119 = vxor.u32 %v797, 2147483648
      %v1120 = vxor.u32 %v1023, 2147483648
      %v1121 = vxor.u32 %v574, 2147483648
      %v1122 = vxor.u32 %v800, 2147483648
      %v1123 = vxor.u32 %v1026, 2147483648
      %v1124 = vxor.u32 %v577, 2147483648
      %v1125 = vxor.u32 %v803, 2147483648
      %v1126 = vxor.u32 %v1029, 2147483648
      %v1127 = vxor.u32 %v580, 2147483648
      %v1128 = vxor.u32 %v806, 2147483648
      %v1129 = vxor.u32 %v1032, 2147483648
      %v1130 = vxor.u32 %v583, 2147483648
      %v1131 = vxor.u32 %v809, 2147483648
      %v1132 = vxor.u32 %v1035, 2147483648
      %v1133 = vxor.u32 %v586, 2147483648
      %v1134 = vxor.u32 %v812, 2147483648
      %v1135 = vxor.u32 %v1038, 2147483648
      %v1136 = vxor.u32 %v589, 2147483648
      %v1137 = vxor.u32 %v815, 2147483648
      %v1138 = vxor.u32 %v1041, 2147483648
      %v1139 = vxor.u32 %v592, 2147483648
      %v1140 = vxor.u32 %v818, 2147483648
      %v1141 = vxor.u32 %v1044, 2147483648
      %v1142 = vxor.u32 %v595, 2147483648
      %v1143 = vxor.u32 %v821, 2147483648
      %v1144 = vxor.u32 %v1047, 2147483648
      %v1145 = vxor.u32 %v598, 2147483648
      %v1146 = vxor.u32 %v824, 2147483648
      %v1147 = vxor.u32 %v1050, 2147483648
      %v1148 = vxor.u32 %v601, 2147483648
      %v1149 = vxor.u32 %v827, 2147483648
      %v1150 = vxor.u32 %v1053, 2147483648
      %v1151 = vxor.u32 %v604, 2147483648
      %v1152 = vxor.u32 %v830, 2147483648
      %v1153 = vxor.u32 %v1056, 2147483648
      %v1154 = vxor.u32 %v607, 2147483648
      %v1155 = vxor.u32 %v833, 2147483648
      %v1156 = vxor.u32 %v1059, 2147483648
      %v1157 = vxor.u32 %v610, 2147483648
      %v1158 = vxor.u32 %v836, 2147483648
      %v1159 = vxor.u32 %v1062, 2147483648
      %v1160 = vxor.u32 %v613, 2147483648
      %v1161 = vxor.u32 %v839, 2147483648
      %v1162 = vxor.u32 %v1065, 2147483648
      %v1163 = vxor.u32 %v616, 2147483648
      %v1164 = vxor.u32 %v842, 2147483648
      %v1165 = vxor.u32 %v1068, 2147483648
      %v1166 = vxor.u32 %v619, 2147483648
      %v1167 = vxor.u32 %v845, 2147483648
      %v1168 = vxor.u32 %v1071, 2147483648
      %v1169 = vxor.u32 %v622, 2147483648
      %v1170 = vxor.u32 %v848, 2147483648
      %v1171 = vxor.u32 %v1074, 2147483648
      %v1172 = vxor.u32 %v625, 2147483648
      %v1173 = vxor.u32 %v851, 2147483648
      %v1174 = vxor.u32 %v1077, 2147483648
      %v1175 = vxor.u32 %v628, 2147483648
      %v1176 = vxor.u32 %v854, 2147483648
      %v1177 = vxor.u32 %v1080, 2147483648
      %v1178 = vmul.f32 %v1082, 1.442695
      %v1179 = vpow.pop %v1178
      %v1180 = vmul.f32 %v1083, 1.442695
      %v1181 = vpow.pop %v1180
      %v1182 = vmul.f32 %v1084, 1.442695
      %v1183 = vpow.pop %v1182
      %v1184 = vmul.f32 %v1085, 1.442695
      %v1185 = vpow.pop %v1184
      %v1186 = vmul.f32 %v1086, 1.442695
      %v1187 = vpow.pop %v1186
      %v1188 = vmul.f32 %v1087, 1.442695
      %v1189 = vpow.pop %v1188
      %v1190 = vmul.f32 %v1088, 1.442695
      %v1191 = vpow.pop %v1190
      %v1192 = vmul.f32 %v1089, 1.442695
      %v1193 = vpow.pop %v1192
      %v1194 = vmul.f32 %v1090, 1.442695
      %v1195 = vpow.pop %v1194
      %v1196 = vmul.f32 %v1091, 1.442695
      %v1197 = vpow.pop %v1196
      %v1198 = vmul.f32 %v1092, 1.442695
      %v1199 = vpow.pop %v1198
      %v1200 = vmul.f32 %v1093, 1.442695
      %v1201 = vpow.pop %v1200
      %v1202 = vmul.f32 %v1094, 1.442695
      %v1203 = vpow.pop %v1202
      %v1204 = vmul.f32 %v1095, 1.442695
      %v1205 = vpow.pop %v1204
      %v1206 = vmul.f32 %v1096, 1.442695
      %v1207 = vpow.pop %v1206
      %v1208 = vmul.f32 %v1097, 1.442695
      %v1209 = vpow.pop %v1208
      %v1210 = vmul.f32 %v1098, 1.442695
      %v1211 = vpow.pop %v1210
      %v1212 = vmul.f32 %v1099, 1.442695
      %v1213 = vpow.pop %v1212
      %v1214 = vmul.f32 %v1100, 1.442695
      %v1215 = vpow.pop %v1214
      %v1216 = vmul.f32 %v1101, 1.442695
      %v1217 = vpow.pop %v1216
      %v1218 = vmul.f32 %v1102, 1.442695
      %v1219 = vpow.pop %v1218
      %v1220 = vmul.f32 %v1103, 1.442695
      %v1221 = vpow.pop %v1220
      %v1222 = vmul.f32 %v1104, 1.442695
      %v1223 = vpow.pop %v1222
      %v1224 = vmul.f32 %v1105, 1.442695
      %v1225 = vpow.pop %v1224
      %v1226 = vmul.f32 %v1106, 1.442695
      %v1227 = vpow.pop %v1226
      %v1228 = vmul.f32 %v1107, 1.442695
      %v1229 = vpow.pop %v1228
      %v1230 = vmul.f32 %v1108, 1.442695
      %v1231 = vpow.pop %v1230
      %v1232 = vmul.f32 %v1109, 1.442695
      %v1233 = vpow.pop %v1232
      %v1234 = vmul.f32 %v1110, 1.442695
      %v1235 = vpow.pop %v1234
      %v1236 = vmul.f32 %v1111, 1.442695
      %v1237 = vpow.pop %v1236
      %v1238 = vmul.f32 %v1112, 1.442695
      %v1239 = vpow.pop %v1238
      %v1240 = vmul.f32 %v1113, 1.442695
      %v1241 = vpow.pop %v1240
      %v1242 = vmul.f32 %v1114, 1.442695
      %v1243 = vpow.pop %v1242
      %v1244 = vmul.f32 %v1115, 1.442695
      %v1245 = vpow.pop %v1244
      %v1246 = vmul.f32 %v1116, 1.442695
      %v1247 = vpow.pop %v1246
      %v1248 = vmul.f32 %v1117, 1.442695
      %v1249 = vpow.pop %v1248
      %v1250 = vmul.f32 %v1118, 1.442695
      %v1251 = vpow.pop %v1250
      %v1252 = vmul.f32 %v1119, 1.442695
      %v1253 = vpow.pop %v1252
      %v1254 = vmul.f32 %v1120, 1.442695
      %v1255 = vpow.pop %v1254
      %v1256 = vmul.f32 %v1121, 1.442695
      %v1257 = vpow.pop %v1256
      %v1258 = vmul.f32 %v1122, 1.442695
      %v1259 = vpow.pop %v1258
      %v1260 = vmul.f32 %v1123, 1.442695
      %v1261 = vpow.pop %v1260
      %v1262 = vmul.f32 %v1124, 1.442695
      %v1263 = vpow.pop %v1262
      %v1264 = vmul.f32 %v1125, 1.442695
      %v1265 = vpow.pop %v1264
      %v1266 = vmul.f32 %v1126, 1.442695
      %v1267 = vpow.pop %v1266
      %v1268 = vmul.f32 %v1127, 1.442695
      %v1269 = vpow.pop %v1268
      %v1270 = vmul.f32 %v1128, 1.442695
      %v1271 = vpow.pop %v1270
      %v1272 = vmul.f32 %v1129, 1.442695
      %v1273 = vpow.pop %v1272
      %v1274 = vmul.f32 %v1130, 1.442695
      %v1275 = vpow.pop %v1274
      %v1276 = vmul.f32 %v1131, 1.442695
      %v1277 = vpow.pop %v1276
      %v1278 = vmul.f32 %v1132, 1.442695
      %v1279 = vpow.pop %v1278
      %v1280 = vmul.f32 %v1133, 1.442695
      %v1281 = vpow.pop %v1280
      %v1282 = vmul.f32 %v1134, 1.442695
      %v1283 = vpow.pop %v1282
      %v1284 = vmul.f32 %v1135, 1.442695
      %v1285 = vpow.pop %v1284
      %v1286 = vmul.f32 %v1136, 1.442695
      %v1287 = vpow.pop %v1286
      %v1288 = vmul.f32 %v1137, 1.442695
      %v1289 = vpow.pop %v1288
      %v1290 = vmul.f32 %v1138, 1.442695
      %v1291 = vpow.pop %v1290
      %v1292 = vmul.f32 %v1139, 1.442695
      %v1293 = vpow.pop %v1292
      %v1294 = vmul.f32 %v1140, 1.442695
      %v1295 = vpow.pop %v1294
      %v1296 = vmul.f32 %v1141, 1.442695
      %v1297 = vpow.pop %v1296
      %v1298 = vmul.f32 %v1142, 1.442695
      %v1299 = vpow.pop %v1298
      %v1300 = vmul.f32 %v1143, 1.442695
      %v1301 = vpow.pop %v1300
      %v1302 = vmul.f32 %v1144, 1.442695
      %v1303 = vpow.pop %v1302
      %v1304 = vmul.f32 %v1145, 1.442695
      %v1305 = vpow.pop %v1304
      %v1306 = vmul.f32 %v1146, 1.442695
      %v1307 = vpow.pop %v1306
      %v1308 = vmul.f32 %v1147, 1.442695
      %v1309 = vpow.pop %v1308
      %v1310 = vmul.f32 %v1148, 1.442695
      %v1311 = vpow.pop %v1310
      %v1312 = vmul.f32 %v1149, 1.442695
      %v1313 = vpow.pop %v1312
      %v1314 = vmul.f32 %v1150, 1.442695
      %v1315 = vpow.pop %v1314
      %v1316 = vmul.f32 %v1151, 1.442695
      %v1317 = vpow.pop %v1316
      %v1318 = vmul.f32 %v1152, 1.442695
      %v1319 = vpow.pop %v1318
      %v1320 = vmul.f32 %v1153, 1.442695
      %v1321 = vpow.pop %v1320
      %v1322 = vmul.f32 %v1154, 1.442695
      %v1323 = vpow.pop %v1322
      %v1324 = vmul.f32 %v1155, 1.442695
      %v1325 = vpow.pop %v1324
      %v1326 = vmul.f32 %v1156, 1.442695
      %v1327 = vpow.pop %v1326
      %v1328 = vmul.f32 %v1157, 1.442695
      %v1329 = vpow.pop %v1328
      %v1330 = vmul.f32 %v1158, 1.442695
      %v1331 = vpow.pop %v1330
      %v1332 = vmul.f32 %v1159, 1.442695
      %v1333 = vpow.pop %v1332
      %v1334 = vmul.f32 %v1160, 1.442695
      %v1335 = vpow.pop %v1334
      %v1336 = vmul.f32 %v1161, 1.442695
      %v1337 = vpow.pop %v1336
      %v1338 = vmul.f32 %v1162, 1.442695
      %v1339 = vpow.pop %v1338
      %v1340 = vmul.f32 %v1163, 1.442695
      %v1341 = vpow.pop %v1340
      %v1342 = vmul.f32 %v1164, 1.442695
      %v1343 = vpow.pop %v1342
      %v1344 = vmul.f32 %v1165, 1.442695
      %v1345 = vpow.pop %v1344
      %v1346 = vmul.f32 %v1166, 1.442695
      %v1347 = vpow.pop %v1346
      %v1348 = vmul.f32 %v1167, 1.442695
      %v1349 = vpow.pop %v1348
      %v1350 = vmul.f32 %v1168, 1.442695
      %v1351 = vpow.pop %v1350
      %v1352 = vmul.f32 %v1169, 1.442695
      %v1353 = vpow.pop %v1352
      %v1354 = vmul.f32 %v1170, 1.442695
      %v1355 = vpow.pop %v1354
      %v1356 = vmul.f32 %v1171, 1.442695
      %v1357 = vpow.pop %v1356
      %v1358 = vmul.f32 %v1172, 1.442695
      %v1359 = vpow.pop %v1358
      %v1360 = vmul.f32 %v1173, 1.442695
      %v1361 = vpow.pop %v1360
      %v1362 = vmul.f32 %v1174, 1.442695
      %v1363 = vpow.pop %v1362
      %v1364 = vmul.f32 %v1175, 1.442695
      %v1365 = vpow.pop %v1364
      %v1366 = vmul.f32 %v1176, 1.442695
      %v1367 = vpow.pop %v1366
      %v1368 = vmul.f32 %v1177, 1.442695
      %v1369 = vpow.pop %v1368
      %v1370 = vadd.f32 %v1179, 1.0
      %v1371 = vadd.f32 %v1181, 1.0
      %v1372 = vadd.f32 %v1183, 1.0
      %v1373 = vadd.f32 %v1185, 1.0
      %v1374 = vadd.f32 %v1187, 1.0
      %v1375 = vadd.f32 %v1189, 1.0
      %v1376 = vadd.f32 %v1191, 1.0
      %v1377 = vadd.f32 %v1193, 1.0
      %v1378 = vadd.f32 %v1195, 1.0
      %v1379 = vadd.f32 %v1197, 1.0
      %v1380 = vadd.f32 %v1199, 1.0
      %v1381 = vadd.f32 %v1201, 1.0
      %v1382 = vadd.f32 %v1203, 1.0
      %v1383 = vadd.f32 %v1205, 1.0
      %v1384 = vadd.f32 %v1207, 1.0
      %v1385 = vadd.f32 %v1209, 1.0
      %v1386 = vadd.f32 %v1211, 1.0
      %v1387 = vadd.f32 %v1213, 1.0
      %v1388 = vadd.f32 %v1215, 1.0
      %v1389 = vadd.f32 %v1217, 1.0
      %v1390 = vadd.f32 %v1219, 1.0
      %v1391 = vadd.f32 %v1221, 1.0
      %v1392 = vadd.f32 %v1223, 1.0
      %v1393 = vadd.f32 %v1225, 1.0
      %v1394 = vadd.f32 %v1227, 1.0
      %v1395 = vadd.f32 %v1229, 1.0
      %v1396 = vadd.f32 %v1231, 1.0
      %v1397 = vadd.f32 %v1233, 1.0
      %v1398 = vadd.f32 %v1235, 1.0
      %v1399 = vadd.f32 %v1237, 1.0
      %v1400 = vadd.f32 %v1239, 1.0
      %v1401 = vadd.f32 %v1241, 1.0
      %v1402 = vadd.f32 %v1243, 1.0
      %v1403 = vadd.f32 %v1245, 1.0
      %v1404 = vadd.f32 %v1247, 1.0
      %v1405 = vadd.f32 %v1249, 1.0
      %v1406 = vadd.f32 %v1251, 1.0
      %v1407 = vadd.f32 %v1253, 1.0
      %v1408 = vadd.f32 %v1255, 1.0
      %v1409 = vadd.f32 %v1257, 1.0
      %v1410 = vadd.f32 %v1259, 1.0
      %v1411 = vadd.f32 %v1261, 1.0
      %v1412 = vadd.f32 %v1263, 1.0
      %v1413 = vadd.f32 %v1265, 1.0
      %v1414 = vadd.f32 %v1267, 1.0
      %v1415 = vadd.f32 %v1269, 1.0
      %v1416 = vadd.f32 %v1271, 1.0
      %v1417 = vadd.f32 %v1273, 1.0
      %v1418 = vadd.f32 %v1275, 1.0
      %v1419 = vadd.f32 %v1277, 1.0
      %v1420 = vadd.f32 %v1279, 1.0
      %v1421 = vadd.f32 %v1281, 1.0
      %v1422 = vadd.f32 %v1283, 1.0
      %v1423 = vadd.f32 %v1285, 1.0
      %v1424 = vadd.f32 %v1287, 1.0
      %v1425 = vadd.f32 %v1289, 1.0
      %v1426 = vadd.f32 %v1291, 1.0
      %v1427 = vadd.f32 %v1293, 1.0
      %v1428 = vadd.f32 %v1295, 1.0
      %v1429 = vadd.f32 %v1297, 1.0
      %v1430 = vadd.f32 %v1299, 1.0
      %v1431 = vadd.f32 %v1301, 1.0
      %v1432 = vadd.f32 %v1303, 1.0
      %v1433 = vadd.f32 %v1305, 1.0
      %v1434 = vadd.f32 %v1307, 1.0
      %v1435 = vadd.f32 %v1309, 1.0
      %v1436 = vadd.f32 %v1311, 1.0
      %v1437 = vadd.f32 %v1313, 1.0
      %v1438 = vadd.f32 %v1315, 1.0
      %v1439 = vadd.f32 %v1317, 1.0
      %v1440 = vadd.f32 %v1319, 1.0
      %v1441 = vadd.f32 %v1321, 1.0
      %v1442 = vadd.f32 %v1323, 1.0
      %v1443 = vadd.f32 %v1325, 1.0
      %v1444 = vadd.f32 %v1327, 1.0
      %v1445 = vadd.f32 %v1329, 1.0
      %v1446 = vadd.f32 %v1331, 1.0
      %v1447 = vadd.f32 %v1333, 1.0
      %v1448 = vadd.f32 %v1335, 1.0
      %v1449 = vadd.f32 %v1337, 1.0
      %v1450 = vadd.f32 %v1339, 1.0
      %v1451 = vadd.f32 %v1341, 1.0
      %v1452 = vadd.f32 %v1343, 1.0
      %v1453 = vadd.f32 %v1345, 1.0
      %v1454 = vadd.f32 %v1347, 1.0
      %v1455 = vadd.f32 %v1349, 1.0
      %v1456 = vadd.f32 %v1351, 1.0
      %v1457 = vadd.f32 %v1353, 1.0
      %v1458 = vadd.f32 %v1355, 1.0
      %v1459 = vadd.f32 %v1357, 1.0
      %v1460 = vadd.f32 %v1359, 1.0
      %v1461 = vadd.f32 %v1361, 1.0
      %v1462 = vadd.f32 %v1363, 1.0
      %v1463 = vadd.f32 %v1365, 1.0
      %v1464 = vadd.f32 %v1367, 1.0
      %v1465 = vadd.f32 %v1369, 1.0
      %v1466 = vrcp.pop %v1370
      %v1467 = vmul.f32 %v1370, %v1466
      %v1468 = vsub.f32 1.0, %v1467
      %v1469 = vmul.f32 %v1466, %v1468
      %v1470 = vadd.f32 %v1466, %v1469
      %vm1471 = vweird.f32 %v1370
      %vm1472 = vweird.f32 %v1466
      %vm1473 = vmor %vm1471, %vm1472
      %v1474 = vsel %vm1473, %v1466, %v1470
      %v1475 = vand.u32 2147483647, %v1370
      %vm1476 = vcmp.eq.f32.partialorder %v1475, 8.507059e+37
      %v1477 = vand.u32 %v1370, 2147483648
      %v1478 = vor.u32 1.1754944e-38, %v1477
      %v1479 = vsel %vm1476, %v1478, %v1474
      %v1480 = vmul.f32 1.0, %v1479
      %v1481 = vrcp.pop %v1371
      %v1482 = vmul.f32 %v1371, %v1481
      %v1483 = vsub.f32 1.0, %v1482
      %v1484 = vmul.f32 %v1481, %v1483
      %v1485 = vadd.f32 %v1481, %v1484
      %vm1486 = vweird.f32 %v1371
      %vm1487 = vweird.f32 %v1481
      %vm1488 = vmor %vm1486, %vm1487
      %v1489 = vsel %vm1488, %v1481, %v1485
      %v1490 = vand.u32 2147483647, %v1371
      %vm1491 = vcmp.eq.f32.partialorder %v1490, 8.507059e+37
      %v1492 = vand.u32 %v1371, 2147483648
      %v1493 = vor.u32 1.1754944e-38, %v1492
      %v1494 = vsel %vm1491, %v1493, %v1489
      %v1495 = vmul.f32 1.0, %v1494
      %v1496 = vrcp.pop %v1372
      %v1497 = vmul.f32 %v1372, %v1496
      %v1498 = vsub.f32 1.0, %v1497
      %v1499 = vmul.f32 %v1496, %v1498
      %v1500 = vadd.f32 %v1496, %v1499
      %vm1501 = vweird.f32 %v1372
      %vm1502 = vweird.f32 %v1496
      %vm1503 = vmor %vm1501, %vm1502
      %v1504 = vsel %vm1503, %v1496, %v1500
      %v1505 = vand.u32 2147483647, %v1372
      %vm1506 = vcmp.eq.f32.partialorder %v1505, 8.507059e+37
      %v1507 = vand.u32 %v1372, 2147483648
      %v1508 = vor.u32 1.1754944e-38, %v1507
      %v1509 = vsel %vm1506, %v1508, %v1504
      %v1510 = vmul.f32 1.0, %v1509
      %v1511 = vrcp.pop %v1373
      %v1512 = vmul.f32 %v1373, %v1511
      %v1513 = vsub.f32 1.0, %v1512
      %v1514 = vmul.f32 %v1511, %v1513
      %v1515 = vadd.f32 %v1511, %v1514
      %vm1516 = vweird.f32 %v1373
      %vm1517 = vweird.f32 %v1511
      %vm1518 = vmor %vm1516, %vm1517
      %v1519 = vsel %vm1518, %v1511, %v1515
      %v1520 = vand.u32 2147483647, %v1373
      %vm1521 = vcmp.eq.f32.partialorder %v1520, 8.507059e+37
      %v1522 = vand.u32 %v1373, 2147483648
      %v1523 = vor.u32 1.1754944e-38, %v1522
      %v1524 = vsel %vm1521, %v1523, %v1519
      %v1525 = vmul.f32 1.0, %v1524
      %v1526 = vrcp.pop %v1374
      %v1527 = vmul.f32 %v1374, %v1526
      %v1528 = vsub.f32 1.0, %v1527
      %v1529 = vmul.f32 %v1526, %v1528
      %v1530 = vadd.f32 %v1526, %v1529
      %vm1531 = vweird.f32 %v1374
      %vm1532 = vweird.f32 %v1526
      %vm1533 = vmor %vm1531, %vm1532
      %v1534 = vsel %vm1533, %v1526, %v1530
      %v1535 = vand.u32 2147483647, %v1374
      %vm1536 = vcmp.eq.f32.partialorder %v1535, 8.507059e+37
      %v1537 = vand.u32 %v1374, 2147483648
      %v1538 = vor.u32 1.1754944e-38, %v1537
      %v1539 = vsel %vm1536, %v1538, %v1534
      %v1540 = vmul.f32 1.0, %v1539
      %v1541 = vrcp.pop %v1375
      %v1542 = vmul.f32 %v1375, %v1541
      %v1543 = vsub.f32 1.0, %v1542
      %v1544 = vmul.f32 %v1541, %v1543
      %v1545 = vadd.f32 %v1541, %v1544
      %vm1546 = vweird.f32 %v1375
      %vm1547 = vweird.f32 %v1541
      %vm1548 = vmor %vm1546, %vm1547
      %v1549 = vsel %vm1548, %v1541, %v1545
      %v1550 = vand.u32 2147483647, %v1375
      %vm1551 = vcmp.eq.f32.partialorder %v1550, 8.507059e+37
      %v1552 = vand.u32 %v1375, 2147483648
      %v1553 = vor.u32 1.1754944e-38, %v1552
      %v1554 = vsel %vm1551, %v1553, %v1549
      %v1555 = vmul.f32 1.0, %v1554
      %v1556 = vrcp.pop %v1376
      %v1557 = vmul.f32 %v1376, %v1556
      %v1558 = vsub.f32 1.0, %v1557
      %v1559 = vmul.f32 %v1556, %v1558
      %v1560 = vadd.f32 %v1556, %v1559
      %vm1561 = vweird.f32 %v1376
      %vm1562 = vweird.f32 %v1556
      %vm1563 = vmor %vm1561, %vm1562
      %v1564 = vsel %vm1563, %v1556, %v1560
      %v1565 = vand.u32 2147483647, %v1376
      %vm1566 = vcmp.eq.f32.partialorder %v1565, 8.507059e+37
      %v1567 = vand.u32 %v1376, 2147483648
      %v1568 = vor.u32 1.1754944e-38, %v1567
      %v1569 = vsel %vm1566, %v1568, %v1564
      %v1570 = vmul.f32 1.0, %v1569
      %v1571 = vrcp.pop %v1377
      %v1572 = vmul.f32 %v1377, %v1571
      %v1573 = vsub.f32 1.0, %v1572
      %v1574 = vmul.f32 %v1571, %v1573
      %v1575 = vadd.f32 %v1571, %v1574
      %vm1576 = vweird.f32 %v1377
      %vm1577 = vweird.f32 %v1571
      %vm1578 = vmor %vm1576, %vm1577
      %v1579 = vsel %vm1578, %v1571, %v1575
      %v1580 = vand.u32 2147483647, %v1377
      %vm1581 = vcmp.eq.f32.partialorder %v1580, 8.507059e+37
      %v1582 = vand.u32 %v1377, 2147483648
      %v1583 = vor.u32 1.1754944e-38, %v1582
      %v1584 = vsel %vm1581, %v1583, %v1579
      %v1585 = vmul.f32 1.0, %v1584
      %v1586 = vrcp.pop %v1378
      %v1587 = vmul.f32 %v1378, %v1586
      %v1588 = vsub.f32 1.0, %v1587
      %v1589 = vmul.f32 %v1586, %v1588
      %v1590 = vadd.f32 %v1586, %v1589
      %vm1591 = vweird.f32 %v1378
      %vm1592 = vweird.f32 %v1586
      %vm1593 = vmor %vm1591, %vm1592
      %v1594 = vsel %vm1593, %v1586, %v1590
      %v1595 = vand.u32 2147483647, %v1378
      %vm1596 = vcmp.eq.f32.partialorder %v1595, 8.507059e+37
      %v1597 = vand.u32 %v1378, 2147483648
      %v1598 = vor.u32 1.1754944e-38, %v1597
      %v1599 = vsel %vm1596, %v1598, %v1594
      %v1600 = vmul.f32 1.0, %v1599
      %v1601 = vrcp.pop %v1379
      %v1602 = vmul.f32 %v1379, %v1601
      %v1603 = vsub.f32 1.0, %v1602
      %v1604 = vmul.f32 %v1601, %v1603
      %v1605 = vadd.f32 %v1601, %v1604
      %vm1606 = vweird.f32 %v1379
      %vm1607 = vweird.f32 %v1601
      %vm1608 = vmor %vm1606, %vm1607
      %v1609 = vsel %vm1608, %v1601, %v1605
      %v1610 = vand.u32 2147483647, %v1379
      %vm1611 = vcmp.eq.f32.partialorder %v1610, 8.507059e+37
      %v1612 = vand.u32 %v1379, 2147483648
      %v1613 = vor.u32 1.1754944e-38, %v1612
      %v1614 = vsel %vm1611, %v1613, %v1609
      %v1615 = vmul.f32 1.0, %v1614
      %v1616 = vrcp.pop %v1380
      %v1617 = vmul.f32 %v1380, %v1616
      %v1618 = vsub.f32 1.0, %v1617
      %v1619 = vmul.f32 %v1616, %v1618
      %v1620 = vadd.f32 %v1616, %v1619
      %vm1621 = vweird.f32 %v1380
      %vm1622 = vweird.f32 %v1616
      %vm1623 = vmor %vm1621, %vm1622
      %v1624 = vsel %vm1623, %v1616, %v1620
      %v1625 = vand.u32 2147483647, %v1380
      %vm1626 = vcmp.eq.f32.partialorder %v1625, 8.507059e+37
      %v1627 = vand.u32 %v1380, 2147483648
      %v1628 = vor.u32 1.1754944e-38, %v1627
      %v1629 = vsel %vm1626, %v1628, %v1624
      %v1630 = vmul.f32 1.0, %v1629
      %v1631 = vrcp.pop %v1381
      %v1632 = vmul.f32 %v1381, %v1631
      %v1633 = vsub.f32 1.0, %v1632
      %v1634 = vmul.f32 %v1631, %v1633
      %v1635 = vadd.f32 %v1631, %v1634
      %vm1636 = vweird.f32 %v1381
      %vm1637 = vweird.f32 %v1631
      %vm1638 = vmor %vm1636, %vm1637
      %v1639 = vsel %vm1638, %v1631, %v1635
      %v1640 = vand.u32 2147483647, %v1381
      %vm1641 = vcmp.eq.f32.partialorder %v1640, 8.507059e+37
      %v1642 = vand.u32 %v1381, 2147483648
      %v1643 = vor.u32 1.1754944e-38, %v1642
      %v1644 = vsel %vm1641, %v1643, %v1639
      %v1645 = vmul.f32 1.0, %v1644
      %v1646 = vrcp.pop %v1382
      %v1647 = vmul.f32 %v1382, %v1646
      %v1648 = vsub.f32 1.0, %v1647
      %v1649 = vmul.f32 %v1646, %v1648
      %v1650 = vadd.f32 %v1646, %v1649
      %vm1651 = vweird.f32 %v1382
      %vm1652 = vweird.f32 %v1646
      %vm1653 = vmor %vm1651, %vm1652
      %v1654 = vsel %vm1653, %v1646, %v1650
      %v1655 = vand.u32 2147483647, %v1382
      %vm1656 = vcmp.eq.f32.partialorder %v1655, 8.507059e+37
      %v1657 = vand.u32 %v1382, 2147483648
      %v1658 = vor.u32 1.1754944e-38, %v1657
      %v1659 = vsel %vm1656, %v1658, %v1654
      %v1660 = vmul.f32 1.0, %v1659
      %v1661 = vrcp.pop %v1383
      %v1662 = vmul.f32 %v1383, %v1661
      %v1663 = vsub.f32 1.0, %v1662
      %v1664 = vmul.f32 %v1661, %v1663
      %v1665 = vadd.f32 %v1661, %v1664
      %vm1666 = vweird.f32 %v1383
      %vm1667 = vweird.f32 %v1661
      %vm1668 = vmor %vm1666, %vm1667
      %v1669 = vsel %vm1668, %v1661, %v1665
      %v1670 = vand.u32 2147483647, %v1383
      %vm1671 = vcmp.eq.f32.partialorder %v1670, 8.507059e+37
      %v1672 = vand.u32 %v1383, 2147483648
      %v1673 = vor.u32 1.1754944e-38, %v1672
      %v1674 = vsel %vm1671, %v1673, %v1669
      %v1675 = vmul.f32 1.0, %v1674
      %v1676 = vrcp.pop %v1384
      %v1677 = vmul.f32 %v1384, %v1676
      %v1678 = vsub.f32 1.0, %v1677
      %v1679 = vmul.f32 %v1676, %v1678
      %v1680 = vadd.f32 %v1676, %v1679
      %vm1681 = vweird.f32 %v1384
      %vm1682 = vweird.f32 %v1676
      %vm1683 = vmor %vm1681, %vm1682
      %v1684 = vsel %vm1683, %v1676, %v1680
      %v1685 = vand.u32 2147483647, %v1384
      %vm1686 = vcmp.eq.f32.partialorder %v1685, 8.507059e+37
      %v1687 = vand.u32 %v1384, 2147483648
      %v1688 = vor.u32 1.1754944e-38, %v1687
      %v1689 = vsel %vm1686, %v1688, %v1684
      %v1690 = vmul.f32 1.0, %v1689
      %v1691 = vrcp.pop %v1385
      %v1692 = vmul.f32 %v1385, %v1691
      %v1693 = vsub.f32 1.0, %v1692
      %v1694 = vmul.f32 %v1691, %v1693
      %v1695 = vadd.f32 %v1691, %v1694
      %vm1696 = vweird.f32 %v1385
      %vm1697 = vweird.f32 %v1691
      %vm1698 = vmor %vm1696, %vm1697
      %v1699 = vsel %vm1698, %v1691, %v1695
      %v1700 = vand.u32 2147483647, %v1385
      %vm1701 = vcmp.eq.f32.partialorder %v1700, 8.507059e+37
      %v1702 = vand.u32 %v1385, 2147483648
      %v1703 = vor.u32 1.1754944e-38, %v1702
      %v1704 = vsel %vm1701, %v1703, %v1699
      %v1705 = vmul.f32 1.0, %v1704
      %v1706 = vrcp.pop %v1386
      %v1707 = vmul.f32 %v1386, %v1706
      %v1708 = vsub.f32 1.0, %v1707
      %v1709 = vmul.f32 %v1706, %v1708
      %v1710 = vadd.f32 %v1706, %v1709
      %vm1711 = vweird.f32 %v1386
      %vm1712 = vweird.f32 %v1706
      %vm1713 = vmor %vm1711, %vm1712
      %v1714 = vsel %vm1713, %v1706, %v1710
      %v1715 = vand.u32 2147483647, %v1386
      %vm1716 = vcmp.eq.f32.partialorder %v1715, 8.507059e+37
      %v1717 = vand.u32 %v1386, 2147483648
      %v1718 = vor.u32 1.1754944e-38, %v1717
      %v1719 = vsel %vm1716, %v1718, %v1714
      %v1720 = vmul.f32 1.0, %v1719
      %v1721 = vrcp.pop %v1387
      %v1722 = vmul.f32 %v1387, %v1721
      %v1723 = vsub.f32 1.0, %v1722
      %v1724 = vmul.f32 %v1721, %v1723
      %v1725 = vadd.f32 %v1721, %v1724
      %vm1726 = vweird.f32 %v1387
      %vm1727 = vweird.f32 %v1721
      %vm1728 = vmor %vm1726, %vm1727
      %v1729 = vsel %vm1728, %v1721, %v1725
      %v1730 = vand.u32 2147483647, %v1387
      %vm1731 = vcmp.eq.f32.partialorder %v1730, 8.507059e+37
      %v1732 = vand.u32 %v1387, 2147483648
      %v1733 = vor.u32 1.1754944e-38, %v1732
      %v1734 = vsel %vm1731, %v1733, %v1729
      %v1735 = vmul.f32 1.0, %v1734
      %v1736 = vrcp.pop %v1388
      %v1737 = vmul.f32 %v1388, %v1736
      %v1738 = vsub.f32 1.0, %v1737
      %v1739 = vmul.f32 %v1736, %v1738
      %v1740 = vadd.f32 %v1736, %v1739
      %vm1741 = vweird.f32 %v1388
      %vm1742 = vweird.f32 %v1736
      %vm1743 = vmor %vm1741, %vm1742
      %v1744 = vsel %vm1743, %v1736, %v1740
      %v1745 = vand.u32 2147483647, %v1388
      %vm1746 = vcmp.eq.f32.partialorder %v1745, 8.507059e+37
      %v1747 = vand.u32 %v1388, 2147483648
      %v1748 = vor.u32 1.1754944e-38, %v1747
      %v1749 = vsel %vm1746, %v1748, %v1744
      %v1750 = vmul.f32 1.0, %v1749
      %v1751 = vrcp.pop %v1389
      %v1752 = vmul.f32 %v1389, %v1751
      %v1753 = vsub.f32 1.0, %v1752
      %v1754 = vmul.f32 %v1751, %v1753
      %v1755 = vadd.f32 %v1751, %v1754
      %vm1756 = vweird.f32 %v1389
      %vm1757 = vweird.f32 %v1751
      %vm1758 = vmor %vm1756, %vm1757
      %v1759 = vsel %vm1758, %v1751, %v1755
      %v1760 = vand.u32 2147483647, %v1389
      %vm1761 = vcmp.eq.f32.partialorder %v1760, 8.507059e+37
      %v1762 = vand.u32 %v1389, 2147483648
      %v1763 = vor.u32 1.1754944e-38, %v1762
      %v1764 = vsel %vm1761, %v1763, %v1759
      %v1765 = vmul.f32 1.0, %v1764
      %v1766 = vrcp.pop %v1390
      %v1767 = vmul.f32 %v1390, %v1766
      %v1768 = vsub.f32 1.0, %v1767
      %v1769 = vmul.f32 %v1766, %v1768
      %v1770 = vadd.f32 %v1766, %v1769
      %vm1771 = vweird.f32 %v1390
      %vm1772 = vweird.f32 %v1766
      %vm1773 = vmor %vm1771, %vm1772
      %v1774 = vsel %vm1773, %v1766, %v1770
      %v1775 = vand.u32 2147483647, %v1390
      %vm1776 = vcmp.eq.f32.partialorder %v1775, 8.507059e+37
      %v1777 = vand.u32 %v1390, 2147483648
      %v1778 = vor.u32 1.1754944e-38, %v1777
      %v1779 = vsel %vm1776, %v1778, %v1774
      %v1780 = vmul.f32 1.0, %v1779
      %v1781 = vrcp.pop %v1391
      %v1782 = vmul.f32 %v1391, %v1781
      %v1783 = vsub.f32 1.0, %v1782
      %v1784 = vmul.f32 %v1781, %v1783
      %v1785 = vadd.f32 %v1781, %v1784
      %vm1786 = vweird.f32 %v1391
      %vm1787 = vweird.f32 %v1781
      %vm1788 = vmor %vm1786, %vm1787
      %v1789 = vsel %vm1788, %v1781, %v1785
      %v1790 = vand.u32 2147483647, %v1391
      %vm1791 = vcmp.eq.f32.partialorder %v1790, 8.507059e+37
      %v1792 = vand.u32 %v1391, 2147483648
      %v1793 = vor.u32 1.1754944e-38, %v1792
      %v1794 = vsel %vm1791, %v1793, %v1789
      %v1795 = vmul.f32 1.0, %v1794
      %v1796 = vrcp.pop %v1392
      %v1797 = vmul.f32 %v1392, %v1796
      %v1798 = vsub.f32 1.0, %v1797
      %v1799 = vmul.f32 %v1796, %v1798
      %v1800 = vadd.f32 %v1796, %v1799
      %vm1801 = vweird.f32 %v1392
      %vm1802 = vweird.f32 %v1796
      %vm1803 = vmor %vm1801, %vm1802
      %v1804 = vsel %vm1803, %v1796, %v1800
      %v1805 = vand.u32 2147483647, %v1392
      %vm1806 = vcmp.eq.f32.partialorder %v1805, 8.507059e+37
      %v1807 = vand.u32 %v1392, 2147483648
      %v1808 = vor.u32 1.1754944e-38, %v1807
      %v1809 = vsel %vm1806, %v1808, %v1804
      %v1810 = vmul.f32 1.0, %v1809
      %v1811 = vrcp.pop %v1393
      %v1812 = vmul.f32 %v1393, %v1811
      %v1813 = vsub.f32 1.0, %v1812
      %v1814 = vmul.f32 %v1811, %v1813
      %v1815 = vadd.f32 %v1811, %v1814
      %vm1816 = vweird.f32 %v1393
      %vm1817 = vweird.f32 %v1811
      %vm1818 = vmor %vm1816, %vm1817
      %v1819 = vsel %vm1818, %v1811, %v1815
      %v1820 = vand.u32 2147483647, %v1393
      %vm1821 = vcmp.eq.f32.partialorder %v1820, 8.507059e+37
      %v1822 = vand.u32 %v1393, 2147483648
      %v1823 = vor.u32 1.1754944e-38, %v1822
      %v1824 = vsel %vm1821, %v1823, %v1819
      %v1825 = vmul.f32 1.0, %v1824
      %v1826 = vrcp.pop %v1394
      %v1827 = vmul.f32 %v1394, %v1826
      %v1828 = vsub.f32 1.0, %v1827
      %v1829 = vmul.f32 %v1826, %v1828
      %v1830 = vadd.f32 %v1826, %v1829
      %vm1831 = vweird.f32 %v1394
      %vm1832 = vweird.f32 %v1826
      %vm1833 = vmor %vm1831, %vm1832
      %v1834 = vsel %vm1833, %v1826, %v1830
      %v1835 = vand.u32 2147483647, %v1394
      %vm1836 = vcmp.eq.f32.partialorder %v1835, 8.507059e+37
      %v1837 = vand.u32 %v1394, 2147483648
      %v1838 = vor.u32 1.1754944e-38, %v1837
      %v1839 = vsel %vm1836, %v1838, %v1834
      %v1840 = vmul.f32 1.0, %v1839
      %v1841 = vrcp.pop %v1395
      %v1842 = vmul.f32 %v1395, %v1841
      %v1843 = vsub.f32 1.0, %v1842
      %v1844 = vmul.f32 %v1841, %v1843
      %v1845 = vadd.f32 %v1841, %v1844
      %vm1846 = vweird.f32 %v1395
      %vm1847 = vweird.f32 %v1841
      %vm1848 = vmor %vm1846, %vm1847
      %v1849 = vsel %vm1848, %v1841, %v1845
      %v1850 = vand.u32 2147483647, %v1395
      %vm1851 = vcmp.eq.f32.partialorder %v1850, 8.507059e+37
      %v1852 = vand.u32 %v1395, 2147483648
      %v1853 = vor.u32 1.1754944e-38, %v1852
      %v1854 = vsel %vm1851, %v1853, %v1849
      %v1855 = vmul.f32 1.0, %v1854
      %v1856 = vrcp.pop %v1396
      %v1857 = vmul.f32 %v1396, %v1856
      %v1858 = vsub.f32 1.0, %v1857
      %v1859 = vmul.f32 %v1856, %v1858
      %v1860 = vadd.f32 %v1856, %v1859
      %vm1861 = vweird.f32 %v1396
      %vm1862 = vweird.f32 %v1856
      %vm1863 = vmor %vm1861, %vm1862
      %v1864 = vsel %vm1863, %v1856, %v1860
      %v1865 = vand.u32 2147483647, %v1396
      %vm1866 = vcmp.eq.f32.partialorder %v1865, 8.507059e+37
      %v1867 = vand.u32 %v1396, 2147483648
      %v1868 = vor.u32 1.1754944e-38, %v1867
      %v1869 = vsel %vm1866, %v1868, %v1864
      %v1870 = vmul.f32 1.0, %v1869
      %v1871 = vrcp.pop %v1397
      %v1872 = vmul.f32 %v1397, %v1871
      %v1873 = vsub.f32 1.0, %v1872
      %v1874 = vmul.f32 %v1871, %v1873
      %v1875 = vadd.f32 %v1871, %v1874
      %vm1876 = vweird.f32 %v1397
      %vm1877 = vweird.f32 %v1871
      %vm1878 = vmor %vm1876, %vm1877
      %v1879 = vsel %vm1878, %v1871, %v1875
      %v1880 = vand.u32 2147483647, %v1397
      %vm1881 = vcmp.eq.f32.partialorder %v1880, 8.507059e+37
      %v1882 = vand.u32 %v1397, 2147483648
      %v1883 = vor.u32 1.1754944e-38, %v1882
      %v1884 = vsel %vm1881, %v1883, %v1879
      %v1885 = vmul.f32 1.0, %v1884
      %v1886 = vrcp.pop %v1398
      %v1887 = vmul.f32 %v1398, %v1886
      %v1888 = vsub.f32 1.0, %v1887
      %v1889 = vmul.f32 %v1886, %v1888
      %v1890 = vadd.f32 %v1886, %v1889
      %vm1891 = vweird.f32 %v1398
      %vm1892 = vweird.f32 %v1886
      %vm1893 = vmor %vm1891, %vm1892
      %v1894 = vsel %vm1893, %v1886, %v1890
      %v1895 = vand.u32 2147483647, %v1398
      %vm1896 = vcmp.eq.f32.partialorder %v1895, 8.507059e+37
      %v1897 = vand.u32 %v1398, 2147483648
      %v1898 = vor.u32 1.1754944e-38, %v1897
      %v1899 = vsel %vm1896, %v1898, %v1894
      %v1900 = vmul.f32 1.0, %v1899
      %v1901 = vrcp.pop %v1399
      %v1902 = vmul.f32 %v1399, %v1901
      %v1903 = vsub.f32 1.0, %v1902
      %v1904 = vmul.f32 %v1901, %v1903
      %v1905 = vadd.f32 %v1901, %v1904
      %vm1906 = vweird.f32 %v1399
      %vm1907 = vweird.f32 %v1901
      %vm1908 = vmor %vm1906, %vm1907
      %v1909 = vsel %vm1908, %v1901, %v1905
      %v1910 = vand.u32 2147483647, %v1399
      %vm1911 = vcmp.eq.f32.partialorder %v1910, 8.507059e+37
      %v1912 = vand.u32 %v1399, 2147483648
      %v1913 = vor.u32 1.1754944e-38, %v1912
      %v1914 = vsel %vm1911, %v1913, %v1909
      %v1915 = vmul.f32 1.0, %v1914
      %v1916 = vrcp.pop %v1400
      %v1917 = vmul.f32 %v1400, %v1916
      %v1918 = vsub.f32 1.0, %v1917
      %v1919 = vmul.f32 %v1916, %v1918
      %v1920 = vadd.f32 %v1916, %v1919
      %vm1921 = vweird.f32 %v1400
      %vm1922 = vweird.f32 %v1916
      %vm1923 = vmor %vm1921, %vm1922
      %v1924 = vsel %vm1923, %v1916, %v1920
      %v1925 = vand.u32 2147483647, %v1400
      %vm1926 = vcmp.eq.f32.partialorder %v1925, 8.507059e+37
      %v1927 = vand.u32 %v1400, 2147483648
      %v1928 = vor.u32 1.1754944e-38, %v1927
      %v1929 = vsel %vm1926, %v1928, %v1924
      %v1930 = vmul.f32 1.0, %v1929
      %v1931 = vrcp.pop %v1401
      %v1932 = vmul.f32 %v1401, %v1931
      %v1933 = vsub.f32 1.0, %v1932
      %v1934 = vmul.f32 %v1931, %v1933
      %v1935 = vadd.f32 %v1931, %v1934
      %vm1936 = vweird.f32 %v1401
      %vm1937 = vweird.f32 %v1931
      %vm1938 = vmor %vm1936, %vm1937
      %v1939 = vsel %vm1938, %v1931, %v1935
      %v1940 = vand.u32 2147483647, %v1401
      %vm1941 = vcmp.eq.f32.partialorder %v1940, 8.507059e+37
      %v1942 = vand.u32 %v1401, 2147483648
      %v1943 = vor.u32 1.1754944e-38, %v1942
      %v1944 = vsel %vm1941, %v1943, %v1939
      %v1945 = vmul.f32 1.0, %v1944
      %v1946 = vrcp.pop %v1402
      %v1947 = vmul.f32 %v1402, %v1946
      %v1948 = vsub.f32 1.0, %v1947
      %v1949 = vmul.f32 %v1946, %v1948
      %v1950 = vadd.f32 %v1946, %v1949
      %vm1951 = vweird.f32 %v1402
      %vm1952 = vweird.f32 %v1946
      %vm1953 = vmor %vm1951, %vm1952
      %v1954 = vsel %vm1953, %v1946, %v1950
      %v1955 = vand.u32 2147483647, %v1402
      %vm1956 = vcmp.eq.f32.partialorder %v1955, 8.507059e+37
      %v1957 = vand.u32 %v1402, 2147483648
      %v1958 = vor.u32 1.1754944e-38, %v1957
      %v1959 = vsel %vm1956, %v1958, %v1954
      %v1960 = vmul.f32 1.0, %v1959
      %v1961 = vrcp.pop %v1403
      %v1962 = vmul.f32 %v1403, %v1961
      %v1963 = vsub.f32 1.0, %v1962
      %v1964 = vmul.f32 %v1961, %v1963
      %v1965 = vadd.f32 %v1961, %v1964
      %vm1966 = vweird.f32 %v1403
      %vm1967 = vweird.f32 %v1961
      %vm1968 = vmor %vm1966, %vm1967
      %v1969 = vsel %vm1968, %v1961, %v1965
      %v1970 = vand.u32 2147483647, %v1403
      %vm1971 = vcmp.eq.f32.partialorder %v1970, 8.507059e+37
      %v1972 = vand.u32 %v1403, 2147483648
      %v1973 = vor.u32 1.1754944e-38, %v1972
      %v1974 = vsel %vm1971, %v1973, %v1969
      %v1975 = vmul.f32 1.0, %v1974
      %v1976 = vrcp.pop %v1404
      %v1977 = vmul.f32 %v1404, %v1976
      %v1978 = vsub.f32 1.0, %v1977
      %v1979 = vmul.f32 %v1976, %v1978
      %v1980 = vadd.f32 %v1976, %v1979
      %vm1981 = vweird.f32 %v1404
      %vm1982 = vweird.f32 %v1976
      %vm1983 = vmor %vm1981, %vm1982
      %v1984 = vsel %vm1983, %v1976, %v1980
      %v1985 = vand.u32 2147483647, %v1404
      %vm1986 = vcmp.eq.f32.partialorder %v1985, 8.507059e+37
      %v1987 = vand.u32 %v1404, 2147483648
      %v1988 = vor.u32 1.1754944e-38, %v1987
      %v1989 = vsel %vm1986, %v1988, %v1984
      %v1990 = vmul.f32 1.0, %v1989
      %v1991 = vrcp.pop %v1405
      %v1992 = vmul.f32 %v1405, %v1991
      %v1993 = vsub.f32 1.0, %v1992
      %v1994 = vmul.f32 %v1991, %v1993
      %v1995 = vadd.f32 %v1991, %v1994
      %vm1996 = vweird.f32 %v1405
      %vm1997 = vweird.f32 %v1991
      %vm1998 = vmor %vm1996, %vm1997
      %v1999 = vsel %vm1998, %v1991, %v1995
      %v2000 = vand.u32 2147483647, %v1405
      %vm2001 = vcmp.eq.f32.partialorder %v2000, 8.507059e+37
      %v2002 = vand.u32 %v1405, 2147483648
      %v2003 = vor.u32 1.1754944e-38, %v2002
      %v2004 = vsel %vm2001, %v2003, %v1999
      %v2005 = vmul.f32 1.0, %v2004
      %v2006 = vrcp.pop %v1406
      %v2007 = vmul.f32 %v1406, %v2006
      %v2008 = vsub.f32 1.0, %v2007
      %v2009 = vmul.f32 %v2006, %v2008
      %v2010 = vadd.f32 %v2006, %v2009
      %vm2011 = vweird.f32 %v1406
      %vm2012 = vweird.f32 %v2006
      %vm2013 = vmor %vm2011, %vm2012
      %v2014 = vsel %vm2013, %v2006, %v2010
      %v2015 = vand.u32 2147483647, %v1406
      %vm2016 = vcmp.eq.f32.partialorder %v2015, 8.507059e+37
      %v2017 = vand.u32 %v1406, 2147483648
      %v2018 = vor.u32 1.1754944e-38, %v2017
      %v2019 = vsel %vm2016, %v2018, %v2014
      %v2020 = vmul.f32 1.0, %v2019
      %v2021 = vrcp.pop %v1407
      %v2022 = vmul.f32 %v1407, %v2021
      %v2023 = vsub.f32 1.0, %v2022
      %v2024 = vmul.f32 %v2021, %v2023
      %v2025 = vadd.f32 %v2021, %v2024
      %vm2026 = vweird.f32 %v1407
      %vm2027 = vweird.f32 %v2021
      %vm2028 = vmor %vm2026, %vm2027
      %v2029 = vsel %vm2028, %v2021, %v2025
      %v2030 = vand.u32 2147483647, %v1407
      %vm2031 = vcmp.eq.f32.partialorder %v2030, 8.507059e+37
      %v2032 = vand.u32 %v1407, 2147483648
      %v2033 = vor.u32 1.1754944e-38, %v2032
      %v2034 = vsel %vm2031, %v2033, %v2029
      %v2035 = vmul.f32 1.0, %v2034
      %v2036 = vrcp.pop %v1408
      %v2037 = vmul.f32 %v1408, %v2036
      %v2038 = vsub.f32 1.0, %v2037
      %v2039 = vmul.f32 %v2036, %v2038
      %v2040 = vadd.f32 %v2036, %v2039
      %vm2041 = vweird.f32 %v1408
      %vm2042 = vweird.f32 %v2036
      %vm2043 = vmor %vm2041, %vm2042
      %v2044 = vsel %vm2043, %v2036, %v2040
      %v2045 = vand.u32 2147483647, %v1408
      %vm2046 = vcmp.eq.f32.partialorder %v2045, 8.507059e+37
      %v2047 = vand.u32 %v1408, 2147483648
      %v2048 = vor.u32 1.1754944e-38, %v2047
      %v2049 = vsel %vm2046, %v2048, %v2044
      %v2050 = vmul.f32 1.0, %v2049
      %v2051 = vrcp.pop %v1409
      %v2052 = vmul.f32 %v1409, %v2051
      %v2053 = vsub.f32 1.0, %v2052
      %v2054 = vmul.f32 %v2051, %v2053
      %v2055 = vadd.f32 %v2051, %v2054
      %vm2056 = vweird.f32 %v1409
      %vm2057 = vweird.f32 %v2051
      %vm2058 = vmor %vm2056, %vm2057
      %v2059 = vsel %vm2058, %v2051, %v2055
      %v2060 = vand.u32 2147483647, %v1409
      %vm2061 = vcmp.eq.f32.partialorder %v2060, 8.507059e+37
      %v2062 = vand.u32 %v1409, 2147483648
      %v2063 = vor.u32 1.1754944e-38, %v2062
      %v2064 = vsel %vm2061, %v2063, %v2059
      %v2065 = vmul.f32 1.0, %v2064
      %v2066 = vrcp.pop %v1410
      %v2067 = vmul.f32 %v1410, %v2066
      %v2068 = vsub.f32 1.0, %v2067
      %v2069 = vmul.f32 %v2066, %v2068
      %v2070 = vadd.f32 %v2066, %v2069
      %vm2071 = vweird.f32 %v1410
      %vm2072 = vweird.f32 %v2066
      %vm2073 = vmor %vm2071, %vm2072
      %v2074 = vsel %vm2073, %v2066, %v2070
      %v2075 = vand.u32 2147483647, %v1410
      %vm2076 = vcmp.eq.f32.partialorder %v2075, 8.507059e+37
      %v2077 = vand.u32 %v1410, 2147483648
      %v2078 = vor.u32 1.1754944e-38, %v2077
      %v2079 = vsel %vm2076, %v2078, %v2074
      %v2080 = vmul.f32 1.0, %v2079
      %v2081 = vrcp.pop %v1411
      %v2082 = vmul.f32 %v1411, %v2081
      %v2083 = vsub.f32 1.0, %v2082
      %v2084 = vmul.f32 %v2081, %v2083
      %v2085 = vadd.f32 %v2081, %v2084
      %vm2086 = vweird.f32 %v1411
      %vm2087 = vweird.f32 %v2081
      %vm2088 = vmor %vm2086, %vm2087
      %v2089 = vsel %vm2088, %v2081, %v2085
      %v2090 = vand.u32 2147483647, %v1411
      %vm2091 = vcmp.eq.f32.partialorder %v2090, 8.507059e+37
      %v2092 = vand.u32 %v1411, 2147483648
      %v2093 = vor.u32 1.1754944e-38, %v2092
      %v2094 = vsel %vm2091, %v2093, %v2089
      %v2095 = vmul.f32 1.0, %v2094
      %v2096 = vrcp.pop %v1412
      %v2097 = vmul.f32 %v1412, %v2096
      %v2098 = vsub.f32 1.0, %v2097
      %v2099 = vmul.f32 %v2096, %v2098
      %v2100 = vadd.f32 %v2096, %v2099
      %vm2101 = vweird.f32 %v1412
      %vm2102 = vweird.f32 %v2096
      %vm2103 = vmor %vm2101, %vm2102
      %v2104 = vsel %vm2103, %v2096, %v2100
      %v2105 = vand.u32 2147483647, %v1412
      %vm2106 = vcmp.eq.f32.partialorder %v2105, 8.507059e+37
      %v2107 = vand.u32 %v1412, 2147483648
      %v2108 = vor.u32 1.1754944e-38, %v2107
      %v2109 = vsel %vm2106, %v2108, %v2104
      %v2110 = vmul.f32 1.0, %v2109
      %v2111 = vrcp.pop %v1413
      %v2112 = vmul.f32 %v1413, %v2111
      %v2113 = vsub.f32 1.0, %v2112
      %v2114 = vmul.f32 %v2111, %v2113
      %v2115 = vadd.f32 %v2111, %v2114
      %vm2116 = vweird.f32 %v1413
      %vm2117 = vweird.f32 %v2111
      %vm2118 = vmor %vm2116, %vm2117
      %v2119 = vsel %vm2118, %v2111, %v2115
      %v2120 = vand.u32 2147483647, %v1413
      %vm2121 = vcmp.eq.f32.partialorder %v2120, 8.507059e+37
      %v2122 = vand.u32 %v1413, 2147483648
      %v2123 = vor.u32 1.1754944e-38, %v2122
      %v2124 = vsel %vm2121, %v2123, %v2119
      %v2125 = vmul.f32 1.0, %v2124
      %v2126 = vrcp.pop %v1414
      %v2127 = vmul.f32 %v1414, %v2126
      %v2128 = vsub.f32 1.0, %v2127
      %v2129 = vmul.f32 %v2126, %v2128
      %v2130 = vadd.f32 %v2126, %v2129
      %vm2131 = vweird.f32 %v1414
      %vm2132 = vweird.f32 %v2126
      %vm2133 = vmor %vm2131, %vm2132
      %v2134 = vsel %vm2133, %v2126, %v2130
      %v2135 = vand.u32 2147483647, %v1414
      %vm2136 = vcmp.eq.f32.partialorder %v2135, 8.507059e+37
      %v2137 = vand.u32 %v1414, 2147483648
      %v2138 = vor.u32 1.1754944e-38, %v2137
      %v2139 = vsel %vm2136, %v2138, %v2134
      %v2140 = vmul.f32 1.0, %v2139
      %v2141 = vrcp.pop %v1415
      %v2142 = vmul.f32 %v1415, %v2141
      %v2143 = vsub.f32 1.0, %v2142
      %v2144 = vmul.f32 %v2141, %v2143
      %v2145 = vadd.f32 %v2141, %v2144
      %vm2146 = vweird.f32 %v1415
      %vm2147 = vweird.f32 %v2141
      %vm2148 = vmor %vm2146, %vm2147
      %v2149 = vsel %vm2148, %v2141, %v2145
      %v2150 = vand.u32 2147483647, %v1415
      %vm2151 = vcmp.eq.f32.partialorder %v2150, 8.507059e+37
      %v2152 = vand.u32 %v1415, 2147483648
      %v2153 = vor.u32 1.1754944e-38, %v2152
      %v2154 = vsel %vm2151, %v2153, %v2149
      %v2155 = vmul.f32 1.0, %v2154
      %v2156 = vrcp.pop %v1416
      %v2157 = vmul.f32 %v1416, %v2156
      %v2158 = vsub.f32 1.0, %v2157
      %v2159 = vmul.f32 %v2156, %v2158
      %v2160 = vadd.f32 %v2156, %v2159
      %vm2161 = vweird.f32 %v1416
      %vm2162 = vweird.f32 %v2156
      %vm2163 = vmor %vm2161, %vm2162
      %v2164 = vsel %vm2163, %v2156, %v2160
      %v2165 = vand.u32 2147483647, %v1416
      %vm2166 = vcmp.eq.f32.partialorder %v2165, 8.507059e+37
      %v2167 = vand.u32 %v1416, 2147483648
      %v2168 = vor.u32 1.1754944e-38, %v2167
      %v2169 = vsel %vm2166, %v2168, %v2164
      %v2170 = vmul.f32 1.0, %v2169
      %v2171 = vrcp.pop %v1417
      %v2172 = vmul.f32 %v1417, %v2171
      %v2173 = vsub.f32 1.0, %v2172
      %v2174 = vmul.f32 %v2171, %v2173
      %v2175 = vadd.f32 %v2171, %v2174
      %vm2176 = vweird.f32 %v1417
      %vm2177 = vweird.f32 %v2171
      %vm2178 = vmor %vm2176, %vm2177
      %v2179 = vsel %vm2178, %v2171, %v2175
      %v2180 = vand.u32 2147483647, %v1417
      %vm2181 = vcmp.eq.f32.partialorder %v2180, 8.507059e+37
      %v2182 = vand.u32 %v1417, 2147483648
      %v2183 = vor.u32 1.1754944e-38, %v2182
      %v2184 = vsel %vm2181, %v2183, %v2179
      %v2185 = vmul.f32 1.0, %v2184
      %v2186 = vrcp.pop %v1418
      %v2187 = vmul.f32 %v1418, %v2186
      %v2188 = vsub.f32 1.0, %v2187
      %v2189 = vmul.f32 %v2186, %v2188
      %v2190 = vadd.f32 %v2186, %v2189
      %vm2191 = vweird.f32 %v1418
      %vm2192 = vweird.f32 %v2186
      %vm2193 = vmor %vm2191, %vm2192
      %v2194 = vsel %vm2193, %v2186, %v2190
      %v2195 = vand.u32 2147483647, %v1418
      %vm2196 = vcmp.eq.f32.partialorder %v2195, 8.507059e+37
      %v2197 = vand.u32 %v1418, 2147483648
      %v2198 = vor.u32 1.1754944e-38, %v2197
      %v2199 = vsel %vm2196, %v2198, %v2194
      %v2200 = vmul.f32 1.0, %v2199
      %v2201 = vrcp.pop %v1419
      %v2202 = vmul.f32 %v1419, %v2201
      %v2203 = vsub.f32 1.0, %v2202
      %v2204 = vmul.f32 %v2201, %v2203
      %v2205 = vadd.f32 %v2201, %v2204
      %vm2206 = vweird.f32 %v1419
      %vm2207 = vweird.f32 %v2201
      %vm2208 = vmor %vm2206, %vm2207
      %v2209 = vsel %vm2208, %v2201, %v2205
      %v2210 = vand.u32 2147483647, %v1419
      %vm2211 = vcmp.eq.f32.partialorder %v2210, 8.507059e+37
      %v2212 = vand.u32 %v1419, 2147483648
      %v2213 = vor.u32 1.1754944e-38, %v2212
      %v2214 = vsel %vm2211, %v2213, %v2209
      %v2215 = vmul.f32 1.0, %v2214
      %v2216 = vrcp.pop %v1420
      %v2217 = vmul.f32 %v1420, %v2216
      %v2218 = vsub.f32 1.0, %v2217
      %v2219 = vmul.f32 %v2216, %v2218
      %v2220 = vadd.f32 %v2216, %v2219
      %vm2221 = vweird.f32 %v1420
      %vm2222 = vweird.f32 %v2216
      %vm2223 = vmor %vm2221, %vm2222
      %v2224 = vsel %vm2223, %v2216, %v2220
      %v2225 = vand.u32 2147483647, %v1420
      %vm2226 = vcmp.eq.f32.partialorder %v2225, 8.507059e+37
      %v2227 = vand.u32 %v1420, 2147483648
      %v2228 = vor.u32 1.1754944e-38, %v2227
      %v2229 = vsel %vm2226, %v2228, %v2224
      %v2230 = vmul.f32 1.0, %v2229
      %v2231 = vrcp.pop %v1421
      %v2232 = vmul.f32 %v1421, %v2231
      %v2233 = vsub.f32 1.0, %v2232
      %v2234 = vmul.f32 %v2231, %v2233
      %v2235 = vadd.f32 %v2231, %v2234
      %vm2236 = vweird.f32 %v1421
      %vm2237 = vweird.f32 %v2231
      %vm2238 = vmor %vm2236, %vm2237
      %v2239 = vsel %vm2238, %v2231, %v2235
      %v2240 = vand.u32 2147483647, %v1421
      %vm2241 = vcmp.eq.f32.partialorder %v2240, 8.507059e+37
      %v2242 = vand.u32 %v1421, 2147483648
      %v2243 = vor.u32 1.1754944e-38, %v2242
      %v2244 = vsel %vm2241, %v2243, %v2239
      %v2245 = vmul.f32 1.0, %v2244
      %v2246 = vrcp.pop %v1422
      %v2247 = vmul.f32 %v1422, %v2246
      %v2248 = vsub.f32 1.0, %v2247
      %v2249 = vmul.f32 %v2246, %v2248
      %v2250 = vadd.f32 %v2246, %v2249
      %vm2251 = vweird.f32 %v1422
      %vm2252 = vweird.f32 %v2246
      %vm2253 = vmor %vm2251, %vm2252
      %v2254 = vsel %vm2253, %v2246, %v2250
      %v2255 = vand.u32 2147483647, %v1422
      %vm2256 = vcmp.eq.f32.partialorder %v2255, 8.507059e+37
      %v2257 = vand.u32 %v1422, 2147483648
      %v2258 = vor.u32 1.1754944e-38, %v2257
      %v2259 = vsel %vm2256, %v2258, %v2254
      %v2260 = vmul.f32 1.0, %v2259
      %v2261 = vrcp.pop %v1423
      %v2262 = vmul.f32 %v1423, %v2261
      %v2263 = vsub.f32 1.0, %v2262
      %v2264 = vmul.f32 %v2261, %v2263
      %v2265 = vadd.f32 %v2261, %v2264
      %vm2266 = vweird.f32 %v1423
      %vm2267 = vweird.f32 %v2261
      %vm2268 = vmor %vm2266, %vm2267
      %v2269 = vsel %vm2268, %v2261, %v2265
      %v2270 = vand.u32 2147483647, %v1423
      %vm2271 = vcmp.eq.f32.partialorder %v2270, 8.507059e+37
      %v2272 = vand.u32 %v1423, 2147483648
      %v2273 = vor.u32 1.1754944e-38, %v2272
      %v2274 = vsel %vm2271, %v2273, %v2269
      %v2275 = vmul.f32 1.0, %v2274
      %v2276 = vrcp.pop %v1424
      %v2277 = vmul.f32 %v1424, %v2276
      %v2278 = vsub.f32 1.0, %v2277
      %v2279 = vmul.f32 %v2276, %v2278
      %v2280 = vadd.f32 %v2276, %v2279
      %vm2281 = vweird.f32 %v1424
      %vm2282 = vweird.f32 %v2276
      %vm2283 = vmor %vm2281, %vm2282
      %v2284 = vsel %vm2283, %v2276, %v2280
      %v2285 = vand.u32 2147483647, %v1424
      %vm2286 = vcmp.eq.f32.partialorder %v2285, 8.507059e+37
      %v2287 = vand.u32 %v1424, 2147483648
      %v2288 = vor.u32 1.1754944e-38, %v2287
      %v2289 = vsel %vm2286, %v2288, %v2284
      %v2290 = vmul.f32 1.0, %v2289
      %v2291 = vrcp.pop %v1425
      %v2292 = vmul.f32 %v1425, %v2291
      %v2293 = vsub.f32 1.0, %v2292
      %v2294 = vmul.f32 %v2291, %v2293
      %v2295 = vadd.f32 %v2291, %v2294
      %vm2296 = vweird.f32 %v1425
      %vm2297 = vweird.f32 %v2291
      %vm2298 = vmor %vm2296, %vm2297
      %v2299 = vsel %vm2298, %v2291, %v2295
      %v2300 = vand.u32 2147483647, %v1425
      %vm2301 = vcmp.eq.f32.partialorder %v2300, 8.507059e+37
      %v2302 = vand.u32 %v1425, 2147483648
      %v2303 = vor.u32 1.1754944e-38, %v2302
      %v2304 = vsel %vm2301, %v2303, %v2299
      %v2305 = vmul.f32 1.0, %v2304
      %v2306 = vrcp.pop %v1426
      %v2307 = vmul.f32 %v1426, %v2306
      %v2308 = vsub.f32 1.0, %v2307
      %v2309 = vmul.f32 %v2306, %v2308
      %v2310 = vadd.f32 %v2306, %v2309
      %vm2311 = vweird.f32 %v1426
      %vm2312 = vweird.f32 %v2306
      %vm2313 = vmor %vm2311, %vm2312
      %v2314 = vsel %vm2313, %v2306, %v2310
      %v2315 = vand.u32 2147483647, %v1426
      %vm2316 = vcmp.eq.f32.partialorder %v2315, 8.507059e+37
      %v2317 = vand.u32 %v1426, 2147483648
      %v2318 = vor.u32 1.1754944e-38, %v2317
      %v2319 = vsel %vm2316, %v2318, %v2314
      %v2320 = vmul.f32 1.0, %v2319
      %v2321 = vrcp.pop %v1427
      %v2322 = vmul.f32 %v1427, %v2321
      %v2323 = vsub.f32 1.0, %v2322
      %v2324 = vmul.f32 %v2321, %v2323
      %v2325 = vadd.f32 %v2321, %v2324
      %vm2326 = vweird.f32 %v1427
      %vm2327 = vweird.f32 %v2321
      %vm2328 = vmor %vm2326, %vm2327
      %v2329 = vsel %vm2328, %v2321, %v2325
      %v2330 = vand.u32 2147483647, %v1427
      %vm2331 = vcmp.eq.f32.partialorder %v2330, 8.507059e+37
      %v2332 = vand.u32 %v1427, 2147483648
      %v2333 = vor.u32 1.1754944e-38, %v2332
      %v2334 = vsel %vm2331, %v2333, %v2329
      %v2335 = vmul.f32 1.0, %v2334
      %v2336 = vrcp.pop %v1428
      %v2337 = vmul.f32 %v1428, %v2336
      %v2338 = vsub.f32 1.0, %v2337
      %v2339 = vmul.f32 %v2336, %v2338
      %v2340 = vadd.f32 %v2336, %v2339
      %vm2341 = vweird.f32 %v1428
      %vm2342 = vweird.f32 %v2336
      %vm2343 = vmor %vm2341, %vm2342
      %v2344 = vsel %vm2343, %v2336, %v2340
      %v2345 = vand.u32 2147483647, %v1428
      %vm2346 = vcmp.eq.f32.partialorder %v2345, 8.507059e+37
      %v2347 = vand.u32 %v1428, 2147483648
      %v2348 = vor.u32 1.1754944e-38, %v2347
      %v2349 = vsel %vm2346, %v2348, %v2344
      %v2350 = vmul.f32 1.0, %v2349
      %v2351 = vrcp.pop %v1429
      %v2352 = vmul.f32 %v1429, %v2351
      %v2353 = vsub.f32 1.0, %v2352
      %v2354 = vmul.f32 %v2351, %v2353
      %v2355 = vadd.f32 %v2351, %v2354
      %vm2356 = vweird.f32 %v1429
      %vm2357 = vweird.f32 %v2351
      %vm2358 = vmor %vm2356, %vm2357
      %v2359 = vsel %vm2358, %v2351, %v2355
      %v2360 = vand.u32 2147483647, %v1429
      %vm2361 = vcmp.eq.f32.partialorder %v2360, 8.507059e+37
      %v2362 = vand.u32 %v1429, 2147483648
      %v2363 = vor.u32 1.1754944e-38, %v2362
      %v2364 = vsel %vm2361, %v2363, %v2359
      %v2365 = vmul.f32 1.0, %v2364
      %v2366 = vrcp.pop %v1430
      %v2367 = vmul.f32 %v1430, %v2366
      %v2368 = vsub.f32 1.0, %v2367
      %v2369 = vmul.f32 %v2366, %v2368
      %v2370 = vadd.f32 %v2366, %v2369
      %vm2371 = vweird.f32 %v1430
      %vm2372 = vweird.f32 %v2366
      %vm2373 = vmor %vm2371, %vm2372
      %v2374 = vsel %vm2373, %v2366, %v2370
      %v2375 = vand.u32 2147483647, %v1430
      %vm2376 = vcmp.eq.f32.partialorder %v2375, 8.507059e+37
      %v2377 = vand.u32 %v1430, 2147483648
      %v2378 = vor.u32 1.1754944e-38, %v2377
      %v2379 = vsel %vm2376, %v2378, %v2374
      %v2380 = vmul.f32 1.0, %v2379
      %v2381 = vrcp.pop %v1431
      %v2382 = vmul.f32 %v1431, %v2381
      %v2383 = vsub.f32 1.0, %v2382
      %v2384 = vmul.f32 %v2381, %v2383
      %v2385 = vadd.f32 %v2381, %v2384
      %vm2386 = vweird.f32 %v1431
      %vm2387 = vweird.f32 %v2381
      %vm2388 = vmor %vm2386, %vm2387
      %v2389 = vsel %vm2388, %v2381, %v2385
      %v2390 = vand.u32 2147483647, %v1431
      %vm2391 = vcmp.eq.f32.partialorder %v2390, 8.507059e+37
      %v2392 = vand.u32 %v1431, 2147483648
      %v2393 = vor.u32 1.1754944e-38, %v2392
      %v2394 = vsel %vm2391, %v2393, %v2389
      %v2395 = vmul.f32 1.0, %v2394
      %v2396 = vrcp.pop %v1432
      %v2397 = vmul.f32 %v1432, %v2396
      %v2398 = vsub.f32 1.0, %v2397
      %v2399 = vmul.f32 %v2396, %v2398
      %v2400 = vadd.f32 %v2396, %v2399
      %vm2401 = vweird.f32 %v1432
      %vm2402 = vweird.f32 %v2396
      %vm2403 = vmor %vm2401, %vm2402
      %v2404 = vsel %vm2403, %v2396, %v2400
      %v2405 = vand.u32 2147483647, %v1432
      %vm2406 = vcmp.eq.f32.partialorder %v2405, 8.507059e+37
      %v2407 = vand.u32 %v1432, 2147483648
      %v2408 = vor.u32 1.1754944e-38, %v2407
      %v2409 = vsel %vm2406, %v2408, %v2404
      %v2410 = vmul.f32 1.0, %v2409
      %v2411 = vrcp.pop %v1433
      %v2412 = vmul.f32 %v1433, %v2411
      %v2413 = vsub.f32 1.0, %v2412
      %v2414 = vmul.f32 %v2411, %v2413
      %v2415 = vadd.f32 %v2411, %v2414
      %vm2416 = vweird.f32 %v1433
      %vm2417 = vweird.f32 %v2411
      %vm2418 = vmor %vm2416, %vm2417
      %v2419 = vsel %vm2418, %v2411, %v2415
      %v2420 = vand.u32 2147483647, %v1433
      %vm2421 = vcmp.eq.f32.partialorder %v2420, 8.507059e+37
      %v2422 = vand.u32 %v1433, 2147483648
      %v2423 = vor.u32 1.1754944e-38, %v2422
      %v2424 = vsel %vm2421, %v2423, %v2419
      %v2425 = vmul.f32 1.0, %v2424
      %v2426 = vrcp.pop %v1434
      %v2427 = vmul.f32 %v1434, %v2426
      %v2428 = vsub.f32 1.0, %v2427
      %v2429 = vmul.f32 %v2426, %v2428
      %v2430 = vadd.f32 %v2426, %v2429
      %vm2431 = vweird.f32 %v1434
      %vm2432 = vweird.f32 %v2426
      %vm2433 = vmor %vm2431, %vm2432
      %v2434 = vsel %vm2433, %v2426, %v2430
      %v2435 = vand.u32 2147483647, %v1434
      %vm2436 = vcmp.eq.f32.partialorder %v2435, 8.507059e+37
      %v2437 = vand.u32 %v1434, 2147483648
      %v2438 = vor.u32 1.1754944e-38, %v2437
      %v2439 = vsel %vm2436, %v2438, %v2434
      %v2440 = vmul.f32 1.0, %v2439
      %v2441 = vrcp.pop %v1435
      %v2442 = vmul.f32 %v1435, %v2441
      %v2443 = vsub.f32 1.0, %v2442
      %v2444 = vmul.f32 %v2441, %v2443
      %v2445 = vadd.f32 %v2441, %v2444
      %vm2446 = vweird.f32 %v1435
      %vm2447 = vweird.f32 %v2441
      %vm2448 = vmor %vm2446, %vm2447
      %v2449 = vsel %vm2448, %v2441, %v2445
      %v2450 = vand.u32 2147483647, %v1435
      %vm2451 = vcmp.eq.f32.partialorder %v2450, 8.507059e+37
      %v2452 = vand.u32 %v1435, 2147483648
      %v2453 = vor.u32 1.1754944e-38, %v2452
      %v2454 = vsel %vm2451, %v2453, %v2449
      %v2455 = vmul.f32 1.0, %v2454
      %v2456 = vrcp.pop %v1436
      %v2457 = vmul.f32 %v1436, %v2456
      %v2458 = vsub.f32 1.0, %v2457
      %v2459 = vmul.f32 %v2456, %v2458
      %v2460 = vadd.f32 %v2456, %v2459
      %vm2461 = vweird.f32 %v1436
      %vm2462 = vweird.f32 %v2456
      %vm2463 = vmor %vm2461, %vm2462
      %v2464 = vsel %vm2463, %v2456, %v2460
      %v2465 = vand.u32 2147483647, %v1436
      %vm2466 = vcmp.eq.f32.partialorder %v2465, 8.507059e+37
      %v2467 = vand.u32 %v1436, 2147483648
      %v2468 = vor.u32 1.1754944e-38, %v2467
      %v2469 = vsel %vm2466, %v2468, %v2464
      %v2470 = vmul.f32 1.0, %v2469
      %v2471 = vrcp.pop %v1437
      %v2472 = vmul.f32 %v1437, %v2471
      %v2473 = vsub.f32 1.0, %v2472
      %v2474 = vmul.f32 %v2471, %v2473
      %v2475 = vadd.f32 %v2471, %v2474
      %vm2476 = vweird.f32 %v1437
      %vm2477 = vweird.f32 %v2471
      %vm2478 = vmor %vm2476, %vm2477
      %v2479 = vsel %vm2478, %v2471, %v2475
      %v2480 = vand.u32 2147483647, %v1437
      %vm2481 = vcmp.eq.f32.partialorder %v2480, 8.507059e+37
      %v2482 = vand.u32 %v1437, 2147483648
      %v2483 = vor.u32 1.1754944e-38, %v2482
      %v2484 = vsel %vm2481, %v2483, %v2479
      %v2485 = vmul.f32 1.0, %v2484
      %v2486 = vrcp.pop %v1438
      %v2487 = vmul.f32 %v1438, %v2486
      %v2488 = vsub.f32 1.0, %v2487
      %v2489 = vmul.f32 %v2486, %v2488
      %v2490 = vadd.f32 %v2486, %v2489
      %vm2491 = vweird.f32 %v1438
      %vm2492 = vweird.f32 %v2486
      %vm2493 = vmor %vm2491, %vm2492
      %v2494 = vsel %vm2493, %v2486, %v2490
      %v2495 = vand.u32 2147483647, %v1438
      %vm2496 = vcmp.eq.f32.partialorder %v2495, 8.507059e+37
      %v2497 = vand.u32 %v1438, 2147483648
      %v2498 = vor.u32 1.1754944e-38, %v2497
      %v2499 = vsel %vm2496, %v2498, %v2494
      %v2500 = vmul.f32 1.0, %v2499
      %v2501 = vrcp.pop %v1439
      %v2502 = vmul.f32 %v1439, %v2501
      %v2503 = vsub.f32 1.0, %v2502
      %v2504 = vmul.f32 %v2501, %v2503
      %v2505 = vadd.f32 %v2501, %v2504
      %vm2506 = vweird.f32 %v1439
      %vm2507 = vweird.f32 %v2501
      %vm2508 = vmor %vm2506, %vm2507
      %v2509 = vsel %vm2508, %v2501, %v2505
      %v2510 = vand.u32 2147483647, %v1439
      %vm2511 = vcmp.eq.f32.partialorder %v2510, 8.507059e+37
      %v2512 = vand.u32 %v1439, 2147483648
      %v2513 = vor.u32 1.1754944e-38, %v2512
      %v2514 = vsel %vm2511, %v2513, %v2509
      %v2515 = vmul.f32 1.0, %v2514
      %v2516 = vrcp.pop %v1440
      %v2517 = vmul.f32 %v1440, %v2516
      %v2518 = vsub.f32 1.0, %v2517
      %v2519 = vmul.f32 %v2516, %v2518
      %v2520 = vadd.f32 %v2516, %v2519
      %vm2521 = vweird.f32 %v1440
      %vm2522 = vweird.f32 %v2516
      %vm2523 = vmor %vm2521, %vm2522
      %v2524 = vsel %vm2523, %v2516, %v2520
      %v2525 = vand.u32 2147483647, %v1440
      %vm2526 = vcmp.eq.f32.partialorder %v2525, 8.507059e+37
      %v2527 = vand.u32 %v1440, 2147483648
      %v2528 = vor.u32 1.1754944e-38, %v2527
      %v2529 = vsel %vm2526, %v2528, %v2524
      %v2530 = vmul.f32 1.0, %v2529
      %v2531 = vrcp.pop %v1441
      %v2532 = vmul.f32 %v1441, %v2531
      %v2533 = vsub.f32 1.0, %v2532
      %v2534 = vmul.f32 %v2531, %v2533
      %v2535 = vadd.f32 %v2531, %v2534
      %vm2536 = vweird.f32 %v1441
      %vm2537 = vweird.f32 %v2531
      %vm2538 = vmor %vm2536, %vm2537
      %v2539 = vsel %vm2538, %v2531, %v2535
      %v2540 = vand.u32 2147483647, %v1441
      %vm2541 = vcmp.eq.f32.partialorder %v2540, 8.507059e+37
      %v2542 = vand.u32 %v1441, 2147483648
      %v2543 = vor.u32 1.1754944e-38, %v2542
      %v2544 = vsel %vm2541, %v2543, %v2539
      %v2545 = vmul.f32 1.0, %v2544
      %v2546 = vrcp.pop %v1442
      %v2547 = vmul.f32 %v1442, %v2546
      %v2548 = vsub.f32 1.0, %v2547
      %v2549 = vmul.f32 %v2546, %v2548
      %v2550 = vadd.f32 %v2546, %v2549
      %vm2551 = vweird.f32 %v1442
      %vm2552 = vweird.f32 %v2546
      %vm2553 = vmor %vm2551, %vm2552
      %v2554 = vsel %vm2553, %v2546, %v2550
      %v2555 = vand.u32 2147483647, %v1442
      %vm2556 = vcmp.eq.f32.partialorder %v2555, 8.507059e+37
      %v2557 = vand.u32 %v1442, 2147483648
      %v2558 = vor.u32 1.1754944e-38, %v2557
      %v2559 = vsel %vm2556, %v2558, %v2554
      %v2560 = vmul.f32 1.0, %v2559
      %v2561 = vrcp.pop %v1443
      %v2562 = vmul.f32 %v1443, %v2561
      %v2563 = vsub.f32 1.0, %v2562
      %v2564 = vmul.f32 %v2561, %v2563
      %v2565 = vadd.f32 %v2561, %v2564
      %vm2566 = vweird.f32 %v1443
      %vm2567 = vweird.f32 %v2561
      %vm2568 = vmor %vm2566, %vm2567
      %v2569 = vsel %vm2568, %v2561, %v2565
      %v2570 = vand.u32 2147483647, %v1443
      %vm2571 = vcmp.eq.f32.partialorder %v2570, 8.507059e+37
      %v2572 = vand.u32 %v1443, 2147483648
      %v2573 = vor.u32 1.1754944e-38, %v2572
      %v2574 = vsel %vm2571, %v2573, %v2569
      %v2575 = vmul.f32 1.0, %v2574
      %v2576 = vrcp.pop %v1444
      %v2577 = vmul.f32 %v1444, %v2576
      %v2578 = vsub.f32 1.0, %v2577
      %v2579 = vmul.f32 %v2576, %v2578
      %v2580 = vadd.f32 %v2576, %v2579
      %vm2581 = vweird.f32 %v1444
      %vm2582 = vweird.f32 %v2576
      %vm2583 = vmor %vm2581, %vm2582
      %v2584 = vsel %vm2583, %v2576, %v2580
      %v2585 = vand.u32 2147483647, %v1444
      %vm2586 = vcmp.eq.f32.partialorder %v2585, 8.507059e+37
      %v2587 = vand.u32 %v1444, 2147483648
      %v2588 = vor.u32 1.1754944e-38, %v2587
      %v2589 = vsel %vm2586, %v2588, %v2584
      %v2590 = vmul.f32 1.0, %v2589
      %v2591 = vrcp.pop %v1445
      %v2592 = vmul.f32 %v1445, %v2591
      %v2593 = vsub.f32 1.0, %v2592
      %v2594 = vmul.f32 %v2591, %v2593
      %v2595 = vadd.f32 %v2591, %v2594
      %vm2596 = vweird.f32 %v1445
      %vm2597 = vweird.f32 %v2591
      %vm2598 = vmor %vm2596, %vm2597
      %v2599 = vsel %vm2598, %v2591, %v2595
      %v2600 = vand.u32 2147483647, %v1445
      %vm2601 = vcmp.eq.f32.partialorder %v2600, 8.507059e+37
      %v2602 = vand.u32 %v1445, 2147483648
      %v2603 = vor.u32 1.1754944e-38, %v2602
      %v2604 = vsel %vm2601, %v2603, %v2599
      %v2605 = vmul.f32 1.0, %v2604
      %v2606 = vrcp.pop %v1446
      %v2607 = vmul.f32 %v1446, %v2606
      %v2608 = vsub.f32 1.0, %v2607
      %v2609 = vmul.f32 %v2606, %v2608
      %v2610 = vadd.f32 %v2606, %v2609
      %vm2611 = vweird.f32 %v1446
      %vm2612 = vweird.f32 %v2606
      %vm2613 = vmor %vm2611, %vm2612
      %v2614 = vsel %vm2613, %v2606, %v2610
      %v2615 = vand.u32 2147483647, %v1446
      %vm2616 = vcmp.eq.f32.partialorder %v2615, 8.507059e+37
      %v2617 = vand.u32 %v1446, 2147483648
      %v2618 = vor.u32 1.1754944e-38, %v2617
      %v2619 = vsel %vm2616, %v2618, %v2614
      %v2620 = vmul.f32 1.0, %v2619
      %v2621 = vrcp.pop %v1447
      %v2622 = vmul.f32 %v1447, %v2621
      %v2623 = vsub.f32 1.0, %v2622
      %v2624 = vmul.f32 %v2621, %v2623
      %v2625 = vadd.f32 %v2621, %v2624
      %vm2626 = vweird.f32 %v1447
      %vm2627 = vweird.f32 %v2621
      %vm2628 = vmor %vm2626, %vm2627
      %v2629 = vsel %vm2628, %v2621, %v2625
      %v2630 = vand.u32 2147483647, %v1447
      %vm2631 = vcmp.eq.f32.partialorder %v2630, 8.507059e+37
      %v2632 = vand.u32 %v1447, 2147483648
      %v2633 = vor.u32 1.1754944e-38, %v2632
      %v2634 = vsel %vm2631, %v2633, %v2629
      %v2635 = vmul.f32 1.0, %v2634
      %v2636 = vrcp.pop %v1448
      %v2637 = vmul.f32 %v1448, %v2636
      %v2638 = vsub.f32 1.0, %v2637
      %v2639 = vmul.f32 %v2636, %v2638
      %v2640 = vadd.f32 %v2636, %v2639
      %vm2641 = vweird.f32 %v1448
      %vm2642 = vweird.f32 %v2636
      %vm2643 = vmor %vm2641, %vm2642
      %v2644 = vsel %vm2643, %v2636, %v2640
      %v2645 = vand.u32 2147483647, %v1448
      %vm2646 = vcmp.eq.f32.partialorder %v2645, 8.507059e+37
      %v2647 = vand.u32 %v1448, 2147483648
      %v2648 = vor.u32 1.1754944e-38, %v2647
      %v2649 = vsel %vm2646, %v2648, %v2644
      %v2650 = vmul.f32 1.0, %v2649
      %v2651 = vrcp.pop %v1449
      %v2652 = vmul.f32 %v1449, %v2651
      %v2653 = vsub.f32 1.0, %v2652
      %v2654 = vmul.f32 %v2651, %v2653
      %v2655 = vadd.f32 %v2651, %v2654
      %vm2656 = vweird.f32 %v1449
      %vm2657 = vweird.f32 %v2651
      %vm2658 = vmor %vm2656, %vm2657
      %v2659 = vsel %vm2658, %v2651, %v2655
      %v2660 = vand.u32 2147483647, %v1449
      %vm2661 = vcmp.eq.f32.partialorder %v2660, 8.507059e+37
      %v2662 = vand.u32 %v1449, 2147483648
      %v2663 = vor.u32 1.1754944e-38, %v2662
      %v2664 = vsel %vm2661, %v2663, %v2659
      %v2665 = vmul.f32 1.0, %v2664
      %v2666 = vrcp.pop %v1450
      %v2667 = vmul.f32 %v1450, %v2666
      %v2668 = vsub.f32 1.0, %v2667
      %v2669 = vmul.f32 %v2666, %v2668
      %v2670 = vadd.f32 %v2666, %v2669
      %vm2671 = vweird.f32 %v1450
      %vm2672 = vweird.f32 %v2666
      %vm2673 = vmor %vm2671, %vm2672
      %v2674 = vsel %vm2673, %v2666, %v2670
      %v2675 = vand.u32 2147483647, %v1450
      %vm2676 = vcmp.eq.f32.partialorder %v2675, 8.507059e+37
      %v2677 = vand.u32 %v1450, 2147483648
      %v2678 = vor.u32 1.1754944e-38, %v2677
      %v2679 = vsel %vm2676, %v2678, %v2674
      %v2680 = vmul.f32 1.0, %v2679
      %v2681 = vrcp.pop %v1451
      %v2682 = vmul.f32 %v1451, %v2681
      %v2683 = vsub.f32 1.0, %v2682
      %v2684 = vmul.f32 %v2681, %v2683
      %v2685 = vadd.f32 %v2681, %v2684
      %vm2686 = vweird.f32 %v1451
      %vm2687 = vweird.f32 %v2681
      %vm2688 = vmor %vm2686, %vm2687
      %v2689 = vsel %vm2688, %v2681, %v2685
      %v2690 = vand.u32 2147483647, %v1451
      %vm2691 = vcmp.eq.f32.partialorder %v2690, 8.507059e+37
      %v2692 = vand.u32 %v1451, 2147483648
      %v2693 = vor.u32 1.1754944e-38, %v2692
      %v2694 = vsel %vm2691, %v2693, %v2689
      %v2695 = vmul.f32 1.0, %v2694
      %v2696 = vrcp.pop %v1452
      %v2697 = vmul.f32 %v1452, %v2696
      %v2698 = vsub.f32 1.0, %v2697
      %v2699 = vmul.f32 %v2696, %v2698
      %v2700 = vadd.f32 %v2696, %v2699
      %vm2701 = vweird.f32 %v1452
      %vm2702 = vweird.f32 %v2696
      %vm2703 = vmor %vm2701, %vm2702
      %v2704 = vsel %vm2703, %v2696, %v2700
      %v2705 = vand.u32 2147483647, %v1452
      %vm2706 = vcmp.eq.f32.partialorder %v2705, 8.507059e+37
      %v2707 = vand.u32 %v1452, 2147483648
      %v2708 = vor.u32 1.1754944e-38, %v2707
      %v2709 = vsel %vm2706, %v2708, %v2704
      %v2710 = vmul.f32 1.0, %v2709
      %v2711 = vrcp.pop %v1453
      %v2712 = vmul.f32 %v1453, %v2711
      %v2713 = vsub.f32 1.0, %v2712
      %v2714 = vmul.f32 %v2711, %v2713
      %v2715 = vadd.f32 %v2711, %v2714
      %vm2716 = vweird.f32 %v1453
      %vm2717 = vweird.f32 %v2711
      %vm2718 = vmor %vm2716, %vm2717
      %v2719 = vsel %vm2718, %v2711, %v2715
      %v2720 = vand.u32 2147483647, %v1453
      %vm2721 = vcmp.eq.f32.partialorder %v2720, 8.507059e+37
      %v2722 = vand.u32 %v1453, 2147483648
      %v2723 = vor.u32 1.1754944e-38, %v2722
      %v2724 = vsel %vm2721, %v2723, %v2719
      %v2725 = vmul.f32 1.0, %v2724
      %v2726 = vrcp.pop %v1454
      %v2727 = vmul.f32 %v1454, %v2726
      %v2728 = vsub.f32 1.0, %v2727
      %v2729 = vmul.f32 %v2726, %v2728
      %v2730 = vadd.f32 %v2726, %v2729
      %vm2731 = vweird.f32 %v1454
      %vm2732 = vweird.f32 %v2726
      %vm2733 = vmor %vm2731, %vm2732
      %v2734 = vsel %vm2733, %v2726, %v2730
      %v2735 = vand.u32 2147483647, %v1454
      %vm2736 = vcmp.eq.f32.partialorder %v2735, 8.507059e+37
      %v2737 = vand.u32 %v1454, 2147483648
      %v2738 = vor.u32 1.1754944e-38, %v2737
      %v2739 = vsel %vm2736, %v2738, %v2734
      %v2740 = vmul.f32 1.0, %v2739
      %v2741 = vrcp.pop %v1455
      %v2742 = vmul.f32 %v1455, %v2741
      %v2743 = vsub.f32 1.0, %v2742
      %v2744 = vmul.f32 %v2741, %v2743
      %v2745 = vadd.f32 %v2741, %v2744
      %vm2746 = vweird.f32 %v1455
      %vm2747 = vweird.f32 %v2741
      %vm2748 = vmor %vm2746, %vm2747
      %v2749 = vsel %vm2748, %v2741, %v2745
      %v2750 = vand.u32 2147483647, %v1455
      %vm2751 = vcmp.eq.f32.partialorder %v2750, 8.507059e+37
      %v2752 = vand.u32 %v1455, 2147483648
      %v2753 = vor.u32 1.1754944e-38, %v2752
      %v2754 = vsel %vm2751, %v2753, %v2749
      %v2755 = vmul.f32 1.0, %v2754
      %v2756 = vrcp.pop %v1456
      %v2757 = vmul.f32 %v1456, %v2756
      %v2758 = vsub.f32 1.0, %v2757
      %v2759 = vmul.f32 %v2756, %v2758
      %v2760 = vadd.f32 %v2756, %v2759
      %vm2761 = vweird.f32 %v1456
      %vm2762 = vweird.f32 %v2756
      %vm2763 = vmor %vm2761, %vm2762
      %v2764 = vsel %vm2763, %v2756, %v2760
      %v2765 = vand.u32 2147483647, %v1456
      %vm2766 = vcmp.eq.f32.partialorder %v2765, 8.507059e+37
      %v2767 = vand.u32 %v1456, 2147483648
      %v2768 = vor.u32 1.1754944e-38, %v2767
      %v2769 = vsel %vm2766, %v2768, %v2764
      %v2770 = vmul.f32 1.0, %v2769
      %v2771 = vrcp.pop %v1457
      %v2772 = vmul.f32 %v1457, %v2771
      %v2773 = vsub.f32 1.0, %v2772
      %v2774 = vmul.f32 %v2771, %v2773
      %v2775 = vadd.f32 %v2771, %v2774
      %vm2776 = vweird.f32 %v1457
      %vm2777 = vweird.f32 %v2771
      %vm2778 = vmor %vm2776, %vm2777
      %v2779 = vsel %vm2778, %v2771, %v2775
      %v2780 = vand.u32 2147483647, %v1457
      %vm2781 = vcmp.eq.f32.partialorder %v2780, 8.507059e+37
      %v2782 = vand.u32 %v1457, 2147483648
      %v2783 = vor.u32 1.1754944e-38, %v2782
      %v2784 = vsel %vm2781, %v2783, %v2779
      %v2785 = vmul.f32 1.0, %v2784
      %v2786 = vrcp.pop %v1458
      %v2787 = vmul.f32 %v1458, %v2786
      %v2788 = vsub.f32 1.0, %v2787
      %v2789 = vmul.f32 %v2786, %v2788
      %v2790 = vadd.f32 %v2786, %v2789
      %vm2791 = vweird.f32 %v1458
      %vm2792 = vweird.f32 %v2786
      %vm2793 = vmor %vm2791, %vm2792
      %v2794 = vsel %vm2793, %v2786, %v2790
      %v2795 = vand.u32 2147483647, %v1458
      %vm2796 = vcmp.eq.f32.partialorder %v2795, 8.507059e+37
      %v2797 = vand.u32 %v1458, 2147483648
      %v2798 = vor.u32 1.1754944e-38, %v2797
      %v2799 = vsel %vm2796, %v2798, %v2794
      %v2800 = vmul.f32 1.0, %v2799
      %v2801 = vrcp.pop %v1459
      %v2802 = vmul.f32 %v1459, %v2801
      %v2803 = vsub.f32 1.0, %v2802
      %v2804 = vmul.f32 %v2801, %v2803
      %v2805 = vadd.f32 %v2801, %v2804
      %vm2806 = vweird.f32 %v1459
      %vm2807 = vweird.f32 %v2801
      %vm2808 = vmor %vm2806, %vm2807
      %v2809 = vsel %vm2808, %v2801, %v2805
      %v2810 = vand.u32 2147483647, %v1459
      %vm2811 = vcmp.eq.f32.partialorder %v2810, 8.507059e+37
      %v2812 = vand.u32 %v1459, 2147483648
      %v2813 = vor.u32 1.1754944e-38, %v2812
      %v2814 = vsel %vm2811, %v2813, %v2809
      %v2815 = vmul.f32 1.0, %v2814
      %v2816 = vrcp.pop %v1460
      %v2817 = vmul.f32 %v1460, %v2816
      %v2818 = vsub.f32 1.0, %v2817
      %v2819 = vmul.f32 %v2816, %v2818
      %v2820 = vadd.f32 %v2816, %v2819
      %vm2821 = vweird.f32 %v1460
      %vm2822 = vweird.f32 %v2816
      %vm2823 = vmor %vm2821, %vm2822
      %v2824 = vsel %vm2823, %v2816, %v2820
      %v2825 = vand.u32 2147483647, %v1460
      %vm2826 = vcmp.eq.f32.partialorder %v2825, 8.507059e+37
      %v2827 = vand.u32 %v1460, 2147483648
      %v2828 = vor.u32 1.1754944e-38, %v2827
      %v2829 = vsel %vm2826, %v2828, %v2824
      %v2830 = vmul.f32 1.0, %v2829
      %v2831 = vrcp.pop %v1461
      %v2832 = vmul.f32 %v1461, %v2831
      %v2833 = vsub.f32 1.0, %v2832
      %v2834 = vmul.f32 %v2831, %v2833
      %v2835 = vadd.f32 %v2831, %v2834
      %vm2836 = vweird.f32 %v1461
      %vm2837 = vweird.f32 %v2831
      %vm2838 = vmor %vm2836, %vm2837
      %v2839 = vsel %vm2838, %v2831, %v2835
      %v2840 = vand.u32 2147483647, %v1461
      %vm2841 = vcmp.eq.f32.partialorder %v2840, 8.507059e+37
      %v2842 = vand.u32 %v1461, 2147483648
      %v2843 = vor.u32 1.1754944e-38, %v2842
      %v2844 = vsel %vm2841, %v2843, %v2839
      %v2845 = vmul.f32 1.0, %v2844
      %v2846 = vrcp.pop %v1462
      %v2847 = vmul.f32 %v1462, %v2846
      %v2848 = vsub.f32 1.0, %v2847
      %v2849 = vmul.f32 %v2846, %v2848
      %v2850 = vadd.f32 %v2846, %v2849
      %vm2851 = vweird.f32 %v1462
      %vm2852 = vweird.f32 %v2846
      %vm2853 = vmor %vm2851, %vm2852
      %v2854 = vsel %vm2853, %v2846, %v2850
      %v2855 = vand.u32 2147483647, %v1462
      %vm2856 = vcmp.eq.f32.partialorder %v2855, 8.507059e+37
      %v2857 = vand.u32 %v1462, 2147483648
      %v2858 = vor.u32 1.1754944e-38, %v2857
      %v2859 = vsel %vm2856, %v2858, %v2854
      %v2860 = vmul.f32 1.0, %v2859
      %v2861 = vrcp.pop %v1463
      %v2862 = vmul.f32 %v1463, %v2861
      %v2863 = vsub.f32 1.0, %v2862
      %v2864 = vmul.f32 %v2861, %v2863
      %v2865 = vadd.f32 %v2861, %v2864
      %vm2866 = vweird.f32 %v1463
      %vm2867 = vweird.f32 %v2861
      %vm2868 = vmor %vm2866, %vm2867
      %v2869 = vsel %vm2868, %v2861, %v2865
      %v2870 = vand.u32 2147483647, %v1463
      %vm2871 = vcmp.eq.f32.partialorder %v2870, 8.507059e+37
      %v2872 = vand.u32 %v1463, 2147483648
      %v2873 = vor.u32 1.1754944e-38, %v2872
      %v2874 = vsel %vm2871, %v2873, %v2869
      %v2875 = vmul.f32 1.0, %v2874
      %v2876 = vrcp.pop %v1464
      %v2877 = vmul.f32 %v1464, %v2876
      %v2878 = vsub.f32 1.0, %v2877
      %v2879 = vmul.f32 %v2876, %v2878
      %v2880 = vadd.f32 %v2876, %v2879
      %vm2881 = vweird.f32 %v1464
      %vm2882 = vweird.f32 %v2876
      %vm2883 = vmor %vm2881, %vm2882
      %v2884 = vsel %vm2883, %v2876, %v2880
      %v2885 = vand.u32 2147483647, %v1464
      %vm2886 = vcmp.eq.f32.partialorder %v2885, 8.507059e+37
      %v2887 = vand.u32 %v1464, 2147483648
      %v2888 = vor.u32 1.1754944e-38, %v2887
      %v2889 = vsel %vm2886, %v2888, %v2884
      %v2890 = vmul.f32 1.0, %v2889
      %v2891 = vrcp.pop %v1465
      %v2892 = vmul.f32 %v1465, %v2891
      %v2893 = vsub.f32 1.0, %v2892
      %v2894 = vmul.f32 %v2891, %v2893
      %v2895 = vadd.f32 %v2891, %v2894
      %vm2896 = vweird.f32 %v1465
      %vm2897 = vweird.f32 %v2891
      %vm2898 = vmor %vm2896, %vm2897
      %v2899 = vsel %vm2898, %v2891, %v2895
      %v2900 = vand.u32 2147483647, %v1465
      %vm2901 = vcmp.eq.f32.partialorder %v2900, 8.507059e+37
      %v2902 = vand.u32 %v1465, 2147483648
      %v2903 = vor.u32 1.1754944e-38, %v2902
      %v2904 = vsel %vm2901, %v2903, %v2899
      %v2905 = vmul.f32 1.0, %v2904
      %v2906 = vadd.f32 %v206, %v1480
      %v2907 = vadd.f32 %v209, %v1525
      %v2908 = vadd.f32 %v212, %v1570
      %v2909 = vadd.f32 %v215, %v1615
      %v2910 = vadd.f32 %v218, %v1660
      %v2911 = vadd.f32 %v221, %v1705
      %v2912 = vadd.f32 %v224, %v1750
      %v2913 = vadd.f32 %v227, %v1795
      %v2914 = vadd.f32 %v230, %v1840
      %v2915 = vadd.f32 %v233, %v1885
      %v2916 = vadd.f32 %v236, %v1930
      %v2917 = vadd.f32 %v239, %v1975
      %v2918 = vadd.f32 %v242, %v2020
      %v2919 = vadd.f32 %v245, %v2065
      %v2920 = vadd.f32 %v248, %v2110
      %v2921 = vadd.f32 %v251, %v2155
      %v2922 = vadd.f32 %v254, %v2200
      %v2923 = vadd.f32 %v257, %v2245
      %v2924 = vadd.f32 %v260, %v2290
      %v2925 = vadd.f32 %v263, %v2335
      %v2926 = vadd.f32 %v266, %v2380
      %v2927 = vadd.f32 %v269, %v2425
      %v2928 = vadd.f32 %v272, %v2470
      %v2929 = vadd.f32 %v275, %v2515
      %v2930 = vadd.f32 %v278, %v2560
      %v2931 = vadd.f32 %v281, %v2605
      %v2932 = vadd.f32 %v284, %v2650
      %v2933 = vadd.f32 %v287, %v2695
      %v2934 = vadd.f32 %v290, %v2740
      %v2935 = vadd.f32 %v293, %v2785
      %v2936 = vadd.f32 %v296, %v2830
      %v2937 = vadd.f32 %v299, %v2875
      %v2938 = vld [vmem:[%s2] sm:$0xff]
      %v2939 = vld [vmem:[%s2 + $0x8] sm:$0xff]
      %v2940 = vld [vmem:[%s2 + $0x10] sm:$0xff]
      %v2941 = vld [vmem:[%s2 + $0x18] sm:$0xff]
      %v2942 = vld [vmem:[%s2 + $0x20] sm:$0xff]
      %v2943 = vld [vmem:[%s2 + $0x28] sm:$0xff]
      %v2944 = vld [vmem:[%s2 + $0x30] sm:$0xff]
      %v2945 = vld [vmem:[%s2 + $0x38] sm:$0xff]
      %v2946 = vld [vmem:[%s2 + $0x40] sm:$0xff]
      %v2947 = vld [vmem:[%s2 + $0x48] sm:$0xff]
      %v2948 = vld [vmem:[%s2 + $0x50] sm:$0xff]
      %v2949 = vld [vmem:[%s2 + $0x58] sm:$0xff]
      %v2950 = vld [vmem:[%s2 + $0x60] sm:$0xff]
      %v2951 = vld [vmem:[%s2 + $0x68] sm:$0xff]
      %v2952 = vld [vmem:[%s2 + $0x70] sm:$0xff]
      %v2953 = vld [vmem:[%s2 + $0x78] sm:$0xff]
      %v2954 = vperm.slane %v302, 1
      %2955 = vmatpush.msra.mxu0 %v2953
      %2956 = vmatpush.msra.mxu0 %v2952
      %2957 = vmatpush.msra.mxu0 %v2951
      %2958 = vmatpush.msra.mxu0 %v2950
      %2959 = vmatpush.msra.mxu0 %v2949
      %2960 = vmatpush.msra.mxu0 %v2948
      %2961 = vmatpush.msra.mxu0 %v2947
      %2962 = vmatpush.msra.mxu0 %v2946
      %2963 = vmatpush.msra.mxu0 %v2945
      %2964 = vmatpush.msra.mxu0 %v2944
      %2965 = vmatpush.msra.mxu0 %v2943
      %2966 = vmatpush.msra.mxu0 %v2942
      %2967 = vmatpush.msra.mxu0 %v2941
      %2968 = vmatpush.msra.mxu0 %v2940
      %2969 = vmatpush.msra.mxu0 %v2939
      %2970 = vmatpush.msra.mxu0 %v2938
      %2971 = vmatmul.f32.gmra.mxu0 %v2906
      %v2972 = vpop.f32.mrf.mxu0
      %v2973 = vadd.f32 %v2954, %v2972
      %2974 = vmatmul.f32.gmra.mxu0 %v2907
      %v2975 = vpop.f32.mrf.mxu0
      %v2976 = vadd.f32 %v2954, %v2975
      %2977 = vmatmul.f32.gmra.mxu0 %v2908
      %v2978 = vpop.f32.mrf.mxu0
      %v2979 = vadd.f32 %v2954, %v2978
      %2980 = vmatmul.f32.gmra.mxu0 %v2909
      %v2981 = vpop.f32.mrf.mxu0
      %v2982 = vadd.f32 %v2954, %v2981
      %2983 = vmatmul.f32.gmra.mxu0 %v2910
      %v2984 = vpop.f32.mrf.mxu0
      %v2985 = vadd.f32 %v2954, %v2984
      %2986 = vmatmul.f32.gmra.mxu0 %v2911
      %v2987 = vpop.f32.mrf.mxu0
      %v2988 = vadd.f32 %v2954, %v2987
      %2989 = vmatmul.f32.gmra.mxu0 %v2912
      %v2990 = vpop.f32.mrf.mxu0
      %v2991 = vadd.f32 %v2954, %v2990
      %2992 = vmatmul.f32.gmra.mxu0 %v2913
      %v2993 = vpop.f32.mrf.mxu0
      %v2994 = vadd.f32 %v2954, %v2993
      %2995 = vmatmul.f32.gmra.mxu0 %v2914
      %v2996 = vpop.f32.mrf.mxu0
      %v2997 = vadd.f32 %v2954, %v2996
      %2998 = vmatmul.f32.gmra.mxu0 %v2915
      %v2999 = vpop.f32.mrf.mxu0
      %v3000 = vadd.f32 %v2954, %v2999
      %3001 = vmatmul.f32.gmra.mxu0 %v2916
      %v3002 = vpop.f32.mrf.mxu0
      %v3003 = vadd.f32 %v2954, %v3002
      %3004 = vmatmul.f32.gmra.mxu0 %v2917
      %v3005 = vpop.f32.mrf.mxu0
      %v3006 = vadd.f32 %v2954, %v3005
      %3007 = vmatmul.f32.gmra.mxu0 %v2918
      %v3008 = vpop.f32.mrf.mxu0
      %v3009 = vadd.f32 %v2954, %v3008
      %3010 = vmatmul.f32.gmra.mxu0 %v2919
      %v3011 = vpop.f32.mrf.mxu0
      %v3012 = vadd.f32 %v2954, %v3011
      %3013 = vmatmul.f32.gmra.mxu0 %v2920
      %v3014 = vpop.f32.mrf.mxu0
      %v3015 = vadd.f32 %v2954, %v3014
      %3016 = vmatmul.f32.gmra.mxu0 %v2921
      %v3017 = vpop.f32.mrf.mxu0
      %v3018 = vadd.f32 %v2954, %v3017
      %3019 = vmatmul.f32.gmra.mxu0 %v2922
      %v3020 = vpop.f32.mrf.mxu0
      %v3021 = vadd.f32 %v2954, %v3020
      %3022 = vmatmul.f32.gmra.mxu0 %v2923
      %v3023 = vpop.f32.mrf.mxu0
      %v3024 = vadd.f32 %v2954, %v3023
      %3025 = vmatmul.f32.gmra.mxu0 %v2924
      %v3026 = vpop.f32.mrf.mxu0
      %v3027 = vadd.f32 %v2954, %v3026
      %3028 = vmatmul.f32.gmra.mxu0 %v2925
      %v3029 = vpop.f32.mrf.mxu0
      %v3030 = vadd.f32 %v2954, %v3029
      %3031 = vmatmul.f32.gmra.mxu0 %v2926
      %v3032 = vpop.f32.mrf.mxu0
      %v3033 = vadd.f32 %v2954, %v3032
      %3034 = vmatmul.f32.gmra.mxu0 %v2927
      %v3035 = vpop.f32.mrf.mxu0
      %v3036 = vadd.f32 %v2954, %v3035
      %3037 = vmatmul.f32.gmra.mxu0 %v2928
      %v3038 = vpop.f32.mrf.mxu0
      %v3039 = vadd.f32 %v2954, %v3038
      %3040 = vmatmul.f32.gmra.mxu0 %v2929
      %v3041 = vpop.f32.mrf.mxu0
      %v3042 = vadd.f32 %v2954, %v3041
      %3043 = vmatmul.f32.gmra.mxu0 %v2930
      %v3044 = vpop.f32.mrf.mxu0
      %v3045 = vadd.f32 %v2954, %v3044
      %3046 = vmatmul.f32.gmra.mxu0 %v2931
      %v3047 = vpop.f32.mrf.mxu0
      %v3048 = vadd.f32 %v2954, %v3047
      %3049 = vmatmul.f32.gmra.mxu0 %v2932
      %v3050 = vpop.f32.mrf.mxu0
      %v3051 = vadd.f32 %v2954, %v3050
      %3052 = vmatmul.f32.gmra.mxu0 %v2933
      %v3053 = vpop.f32.mrf.mxu0
      %v3054 = vadd.f32 %v2954, %v3053
      %3055 = vmatmul.f32.gmra.mxu0 %v2934
      %v3056 = vpop.f32.mrf.mxu0
      %v3057 = vadd.f32 %v2954, %v3056
      %3058 = vmatmul.f32.gmra.mxu0 %v2935
      %v3059 = vpop.f32.mrf.mxu0
      %v3060 = vadd.f32 %v2954, %v3059
      %3061 = vmatmul.f32.gmra.mxu0 %v2936
      %v3062 = vpop.f32.mrf.mxu0
      %v3063 = vadd.f32 %v2954, %v3062
      %3064 = vmatmul.f32.gmra.mxu0 %v2937
      %v3065 = vpop.f32.mrf.mxu0
      %v3066 = vadd.f32 %v2954, %v3065
      %3067 = vdwg.mxu0
      %v3068 = vxor.u32 %v2973, 2147483648
      %v3069 = vxor.u32 %v2976, 2147483648
      %v3070 = vxor.u32 %v2979, 2147483648
      %v3071 = vxor.u32 %v2982, 2147483648
      %v3072 = vxor.u32 %v2985, 2147483648
      %v3073 = vxor.u32 %v2988, 2147483648
      %v3074 = vxor.u32 %v2991, 2147483648
      %v3075 = vxor.u32 %v2994, 2147483648
      %v3076 = vxor.u32 %v2997, 2147483648
      %v3077 = vxor.u32 %v3000, 2147483648
      %v3078 = vxor.u32 %v3003, 2147483648
      %v3079 = vxor.u32 %v3006, 2147483648
      %v3080 = vxor.u32 %v3009, 2147483648
      %v3081 = vxor.u32 %v3012, 2147483648
      %v3082 = vxor.u32 %v3015, 2147483648
      %v3083 = vxor.u32 %v3018, 2147483648
      %v3084 = vxor.u32 %v3021, 2147483648
      %v3085 = vxor.u32 %v3024, 2147483648
      %v3086 = vxor.u32 %v3027, 2147483648
      %v3087 = vxor.u32 %v3030, 2147483648
      %v3088 = vxor.u32 %v3033, 2147483648
      %v3089 = vxor.u32 %v3036, 2147483648
      %v3090 = vxor.u32 %v3039, 2147483648
      %v3091 = vxor.u32 %v3042, 2147483648
      %v3092 = vxor.u32 %v3045, 2147483648
      %v3093 = vxor.u32 %v3048, 2147483648
      %v3094 = vxor.u32 %v3051, 2147483648
      %v3095 = vxor.u32 %v3054, 2147483648
      %v3096 = vxor.u32 %v3057, 2147483648
      %v3097 = vxor.u32 %v3060, 2147483648
      %v3098 = vxor.u32 %v3063, 2147483648
      %v3099 = vxor.u32 %v3066, 2147483648
      %v3100 = vmul.f32 %v3068, 1.442695
      %v3101 = vpow.pop %v3100
      %v3102 = vmul.f32 %v3069, 1.442695
      %v3103 = vpow.pop %v3102
      %v3104 = vmul.f32 %v3070, 1.442695
      %v3105 = vpow.pop %v3104
      %v3106 = vmul.f32 %v3071, 1.442695
      %v3107 = vpow.pop %v3106
      %v3108 = vmul.f32 %v3072, 1.442695
      %v3109 = vpow.pop %v3108
      %v3110 = vmul.f32 %v3073, 1.442695
      %v3111 = vpow.pop %v3110
      %v3112 = vmul.f32 %v3074, 1.442695
      %v3113 = vpow.pop %v3112
      %v3114 = vmul.f32 %v3075, 1.442695
      %v3115 = vpow.pop %v3114
      %v3116 = vmul.f32 %v3076, 1.442695
      %v3117 = vpow.pop %v3116
      %v3118 = vmul.f32 %v3077, 1.442695
      %v3119 = vpow.pop %v3118
      %v3120 = vmul.f32 %v3078, 1.442695
      %v3121 = vpow.pop %v3120
      %v3122 = vmul.f32 %v3079, 1.442695
      %v3123 = vpow.pop %v3122
      %v3124 = vmul.f32 %v3080, 1.442695
      %v3125 = vpow.pop %v3124
      %v3126 = vmul.f32 %v3081, 1.442695
      %v3127 = vpow.pop %v3126
      %v3128 = vmul.f32 %v3082, 1.442695
      %v3129 = vpow.pop %v3128
      %v3130 = vmul.f32 %v3083, 1.442695
      %v3131 = vpow.pop %v3130
      %v3132 = vmul.f32 %v3084, 1.442695
      %v3133 = vpow.pop %v3132
      %v3134 = vmul.f32 %v3085, 1.442695
      %v3135 = vpow.pop %v3134
      %v3136 = vmul.f32 %v3086, 1.442695
      %v3137 = vpow.pop %v3136
      %v3138 = vmul.f32 %v3087, 1.442695
      %v3139 = vpow.pop %v3138
      %v3140 = vmul.f32 %v3088, 1.442695
      %v3141 = vpow.pop %v3140
      %v3142 = vmul.f32 %v3089, 1.442695
      %v3143 = vpow.pop %v3142
      %v3144 = vmul.f32 %v3090, 1.442695
      %v3145 = vpow.pop %v3144
      %v3146 = vmul.f32 %v3091, 1.442695
      %v3147 = vpow.pop %v3146
      %v3148 = vmul.f32 %v3092, 1.442695
      %v3149 = vpow.pop %v3148
      %v3150 = vmul.f32 %v3093, 1.442695
      %v3151 = vpow.pop %v3150
      %v3152 = vmul.f32 %v3094, 1.442695
      %v3153 = vpow.pop %v3152
      %v3154 = vmul.f32 %v3095, 1.442695
      %v3155 = vpow.pop %v3154
      %v3156 = vmul.f32 %v3096, 1.442695
      %v3157 = vpow.pop %v3156
      %v3158 = vmul.f32 %v3097, 1.442695
      %v3159 = vpow.pop %v3158
      %v3160 = vmul.f32 %v3098, 1.442695
      %v3161 = vpow.pop %v3160
      %v3162 = vmul.f32 %v3099, 1.442695
      %v3163 = vpow.pop %v3162
      %v3164 = vadd.f32 %v3101, 1.0
      %v3165 = vadd.f32 %v3103, 1.0
      %v3166 = vadd.f32 %v3105, 1.0
      %v3167 = vadd.f32 %v3107, 1.0
      %v3168 = vadd.f32 %v3109, 1.0
      %v3169 = vadd.f32 %v3111, 1.0
      %v3170 = vadd.f32 %v3113, 1.0
      %v3171 = vadd.f32 %v3115, 1.0
      %v3172 = vadd.f32 %v3117, 1.0
      %v3173 = vadd.f32 %v3119, 1.0
      %v3174 = vadd.f32 %v3121, 1.0
      %v3175 = vadd.f32 %v3123, 1.0
      %v3176 = vadd.f32 %v3125, 1.0
      %v3177 = vadd.f32 %v3127, 1.0
      %v3178 = vadd.f32 %v3129, 1.0
      %v3179 = vadd.f32 %v3131, 1.0
      %v3180 = vadd.f32 %v3133, 1.0
      %v3181 = vadd.f32 %v3135, 1.0
      %v3182 = vadd.f32 %v3137, 1.0
      %v3183 = vadd.f32 %v3139, 1.0
      %v3184 = vadd.f32 %v3141, 1.0
      %v3185 = vadd.f32 %v3143, 1.0
      %v3186 = vadd.f32 %v3145, 1.0
      %v3187 = vadd.f32 %v3147, 1.0
      %v3188 = vadd.f32 %v3149, 1.0
      %v3189 = vadd.f32 %v3151, 1.0
      %v3190 = vadd.f32 %v3153, 1.0
      %v3191 = vadd.f32 %v3155, 1.0
      %v3192 = vadd.f32 %v3157, 1.0
      %v3193 = vadd.f32 %v3159, 1.0
      %v3194 = vadd.f32 %v3161, 1.0
      %v3195 = vadd.f32 %v3163, 1.0
      %v3196 = vrcp.pop %v3164
      %v3197 = vmul.f32 %v3164, %v3196
      %v3198 = vsub.f32 1.0, %v3197
      %v3199 = vmul.f32 %v3196, %v3198
      %v3200 = vadd.f32 %v3196, %v3199
      %vm3201 = vweird.f32 %v3164
      %vm3202 = vweird.f32 %v3196
      %vm3203 = vmor %vm3201, %vm3202
      %v3204 = vsel %vm3203, %v3196, %v3200
      %v3205 = vand.u32 2147483647, %v3164
      %vm3206 = vcmp.eq.f32.partialorder %v3205, 8.507059e+37
      %v3207 = vand.u32 %v3164, 2147483648
      %v3208 = vor.u32 1.1754944e-38, %v3207
      %v3209 = vsel %vm3206, %v3208, %v3204
      %v3210 = vmul.f32 1.0, %v3209
      %v3211 = vrcp.pop %v3165
      %v3212 = vmul.f32 %v3165, %v3211
      %v3213 = vsub.f32 1.0, %v3212
      %v3214 = vmul.f32 %v3211, %v3213
      %v3215 = vadd.f32 %v3211, %v3214
      %vm3216 = vweird.f32 %v3165
      %vm3217 = vweird.f32 %v3211
      %vm3218 = vmor %vm3216, %vm3217
      %v3219 = vsel %vm3218, %v3211, %v3215
      %v3220 = vand.u32 2147483647, %v3165
      %vm3221 = vcmp.eq.f32.partialorder %v3220, 8.507059e+37
      %v3222 = vand.u32 %v3165, 2147483648
      %v3223 = vor.u32 1.1754944e-38, %v3222
      %v3224 = vsel %vm3221, %v3223, %v3219
      %v3225 = vmul.f32 1.0, %v3224
      %v3226 = vrcp.pop %v3166
      %v3227 = vmul.f32 %v3166, %v3226
      %v3228 = vsub.f32 1.0, %v3227
      %v3229 = vmul.f32 %v3226, %v3228
      %v3230 = vadd.f32 %v3226, %v3229
      %vm3231 = vweird.f32 %v3166
      %vm3232 = vweird.f32 %v3226
      %vm3233 = vmor %vm3231, %vm3232
      %v3234 = vsel %vm3233, %v3226, %v3230
      %v3235 = vand.u32 2147483647, %v3166
      %vm3236 = vcmp.eq.f32.partialorder %v3235, 8.507059e+37
      %v3237 = vand.u32 %v3166, 2147483648
      %v3238 = vor.u32 1.1754944e-38, %v3237
      %v3239 = vsel %vm3236, %v3238, %v3234
      %v3240 = vmul.f32 1.0, %v3239
      %v3241 = vrcp.pop %v3167
      %v3242 = vmul.f32 %v3167, %v3241
      %v3243 = vsub.f32 1.0, %v3242
      %v3244 = vmul.f32 %v3241, %v3243
      %v3245 = vadd.f32 %v3241, %v3244
      %vm3246 = vweird.f32 %v3167
      %vm3247 = vweird.f32 %v3241
      %vm3248 = vmor %vm3246, %vm3247
      %v3249 = vsel %vm3248, %v3241, %v3245
      %v3250 = vand.u32 2147483647, %v3167
      %vm3251 = vcmp.eq.f32.partialorder %v3250, 8.507059e+37
      %v3252 = vand.u32 %v3167, 2147483648
      %v3253 = vor.u32 1.1754944e-38, %v3252
      %v3254 = vsel %vm3251, %v3253, %v3249
      %v3255 = vmul.f32 1.0, %v3254
      %v3256 = vrcp.pop %v3168
      %v3257 = vmul.f32 %v3168, %v3256
      %v3258 = vsub.f32 1.0, %v3257
      %v3259 = vmul.f32 %v3256, %v3258
      %v3260 = vadd.f32 %v3256, %v3259
      %vm3261 = vweird.f32 %v3168
      %vm3262 = vweird.f32 %v3256
      %vm3263 = vmor %vm3261, %vm3262
      %v3264 = vsel %vm3263, %v3256, %v3260
      %v3265 = vand.u32 2147483647, %v3168
      %vm3266 = vcmp.eq.f32.partialorder %v3265, 8.507059e+37
      %v3267 = vand.u32 %v3168, 2147483648
      %v3268 = vor.u32 1.1754944e-38, %v3267
      %v3269 = vsel %vm3266, %v3268, %v3264
      %v3270 = vmul.f32 1.0, %v3269
      %v3271 = vrcp.pop %v3169
      %v3272 = vmul.f32 %v3169, %v3271
      %v3273 = vsub.f32 1.0, %v3272
      %v3274 = vmul.f32 %v3271, %v3273
      %v3275 = vadd.f32 %v3271, %v3274
      %vm3276 = vweird.f32 %v3169
      %vm3277 = vweird.f32 %v3271
      %vm3278 = vmor %vm3276, %vm3277
      %v3279 = vsel %vm3278, %v3271, %v3275
      %v3280 = vand.u32 2147483647, %v3169
      %vm3281 = vcmp.eq.f32.partialorder %v3280, 8.507059e+37
      %v3282 = vand.u32 %v3169, 2147483648
      %v3283 = vor.u32 1.1754944e-38, %v3282
      %v3284 = vsel %vm3281, %v3283, %v3279
      %v3285 = vmul.f32 1.0, %v3284
      %v3286 = vrcp.pop %v3170
      %v3287 = vmul.f32 %v3170, %v3286
      %v3288 = vsub.f32 1.0, %v3287
      %v3289 = vmul.f32 %v3286, %v3288
      %v3290 = vadd.f32 %v3286, %v3289
      %vm3291 = vweird.f32 %v3170
      %vm3292 = vweird.f32 %v3286
      %vm3293 = vmor %vm3291, %vm3292
      %v3294 = vsel %vm3293, %v3286, %v3290
      %v3295 = vand.u32 2147483647, %v3170
      %vm3296 = vcmp.eq.f32.partialorder %v3295, 8.507059e+37
      %v3297 = vand.u32 %v3170, 2147483648
      %v3298 = vor.u32 1.1754944e-38, %v3297
      %v3299 = vsel %vm3296, %v3298, %v3294
      %v3300 = vmul.f32 1.0, %v3299
      %v3301 = vrcp.pop %v3171
      %v3302 = vmul.f32 %v3171, %v3301
      %v3303 = vsub.f32 1.0, %v3302
      %v3304 = vmul.f32 %v3301, %v3303
      %v3305 = vadd.f32 %v3301, %v3304
      %vm3306 = vweird.f32 %v3171
      %vm3307 = vweird.f32 %v3301
      %vm3308 = vmor %vm3306, %vm3307
      %v3309 = vsel %vm3308, %v3301, %v3305
      %v3310 = vand.u32 2147483647, %v3171
      %vm3311 = vcmp.eq.f32.partialorder %v3310, 8.507059e+37
      %v3312 = vand.u32 %v3171, 2147483648
      %v3313 = vor.u32 1.1754944e-38, %v3312
      %v3314 = vsel %vm3311, %v3313, %v3309
      %v3315 = vmul.f32 1.0, %v3314
      %v3316 = vrcp.pop %v3172
      %v3317 = vmul.f32 %v3172, %v3316
      %v3318 = vsub.f32 1.0, %v3317
      %v3319 = vmul.f32 %v3316, %v3318
      %v3320 = vadd.f32 %v3316, %v3319
      %vm3321 = vweird.f32 %v3172
      %vm3322 = vweird.f32 %v3316
      %vm3323 = vmor %vm3321, %vm3322
      %v3324 = vsel %vm3323, %v3316, %v3320
      %v3325 = vand.u32 2147483647, %v3172
      %vm3326 = vcmp.eq.f32.partialorder %v3325, 8.507059e+37
      %v3327 = vand.u32 %v3172, 2147483648
      %v3328 = vor.u32 1.1754944e-38, %v3327
      %v3329 = vsel %vm3326, %v3328, %v3324
      %v3330 = vmul.f32 1.0, %v3329
      %v3331 = vrcp.pop %v3173
      %v3332 = vmul.f32 %v3173, %v3331
      %v3333 = vsub.f32 1.0, %v3332
      %v3334 = vmul.f32 %v3331, %v3333
      %v3335 = vadd.f32 %v3331, %v3334
      %vm3336 = vweird.f32 %v3173
      %vm3337 = vweird.f32 %v3331
      %vm3338 = vmor %vm3336, %vm3337
      %v3339 = vsel %vm3338, %v3331, %v3335
      %v3340 = vand.u32 2147483647, %v3173
      %vm3341 = vcmp.eq.f32.partialorder %v3340, 8.507059e+37
      %v3342 = vand.u32 %v3173, 2147483648
      %v3343 = vor.u32 1.1754944e-38, %v3342
      %v3344 = vsel %vm3341, %v3343, %v3339
      %v3345 = vmul.f32 1.0, %v3344
      %v3346 = vrcp.pop %v3174
      %v3347 = vmul.f32 %v3174, %v3346
      %v3348 = vsub.f32 1.0, %v3347
      %v3349 = vmul.f32 %v3346, %v3348
      %v3350 = vadd.f32 %v3346, %v3349
      %vm3351 = vweird.f32 %v3174
      %vm3352 = vweird.f32 %v3346
      %vm3353 = vmor %vm3351, %vm3352
      %v3354 = vsel %vm3353, %v3346, %v3350
      %v3355 = vand.u32 2147483647, %v3174
      %vm3356 = vcmp.eq.f32.partialorder %v3355, 8.507059e+37
      %v3357 = vand.u32 %v3174, 2147483648
      %v3358 = vor.u32 1.1754944e-38, %v3357
      %v3359 = vsel %vm3356, %v3358, %v3354
      %v3360 = vmul.f32 1.0, %v3359
      %v3361 = vrcp.pop %v3175
      %v3362 = vmul.f32 %v3175, %v3361
      %v3363 = vsub.f32 1.0, %v3362
      %v3364 = vmul.f32 %v3361, %v3363
      %v3365 = vadd.f32 %v3361, %v3364
      %vm3366 = vweird.f32 %v3175
      %vm3367 = vweird.f32 %v3361
      %vm3368 = vmor %vm3366, %vm3367
      %v3369 = vsel %vm3368, %v3361, %v3365
      %v3370 = vand.u32 2147483647, %v3175
      %vm3371 = vcmp.eq.f32.partialorder %v3370, 8.507059e+37
      %v3372 = vand.u32 %v3175, 2147483648
      %v3373 = vor.u32 1.1754944e-38, %v3372
      %v3374 = vsel %vm3371, %v3373, %v3369
      %v3375 = vmul.f32 1.0, %v3374
      %v3376 = vrcp.pop %v3176
      %v3377 = vmul.f32 %v3176, %v3376
      %v3378 = vsub.f32 1.0, %v3377
      %v3379 = vmul.f32 %v3376, %v3378
      %v3380 = vadd.f32 %v3376, %v3379
      %vm3381 = vweird.f32 %v3176
      %vm3382 = vweird.f32 %v3376
      %vm3383 = vmor %vm3381, %vm3382
      %v3384 = vsel %vm3383, %v3376, %v3380
      %v3385 = vand.u32 2147483647, %v3176
      %vm3386 = vcmp.eq.f32.partialorder %v3385, 8.507059e+37
      %v3387 = vand.u32 %v3176, 2147483648
      %v3388 = vor.u32 1.1754944e-38, %v3387
      %v3389 = vsel %vm3386, %v3388, %v3384
      %v3390 = vmul.f32 1.0, %v3389
      %v3391 = vrcp.pop %v3177
      %v3392 = vmul.f32 %v3177, %v3391
      %v3393 = vsub.f32 1.0, %v3392
      %v3394 = vmul.f32 %v3391, %v3393
      %v3395 = vadd.f32 %v3391, %v3394
      %vm3396 = vweird.f32 %v3177
      %vm3397 = vweird.f32 %v3391
      %vm3398 = vmor %vm3396, %vm3397
      %v3399 = vsel %vm3398, %v3391, %v3395
      %v3400 = vand.u32 2147483647, %v3177
      %vm3401 = vcmp.eq.f32.partialorder %v3400, 8.507059e+37
      %v3402 = vand.u32 %v3177, 2147483648
      %v3403 = vor.u32 1.1754944e-38, %v3402
      %v3404 = vsel %vm3401, %v3403, %v3399
      %v3405 = vmul.f32 1.0, %v3404
      %v3406 = vrcp.pop %v3178
      %v3407 = vmul.f32 %v3178, %v3406
      %v3408 = vsub.f32 1.0, %v3407
      %v3409 = vmul.f32 %v3406, %v3408
      %v3410 = vadd.f32 %v3406, %v3409
      %vm3411 = vweird.f32 %v3178
      %vm3412 = vweird.f32 %v3406
      %vm3413 = vmor %vm3411, %vm3412
      %v3414 = vsel %vm3413, %v3406, %v3410
      %v3415 = vand.u32 2147483647, %v3178
      %vm3416 = vcmp.eq.f32.partialorder %v3415, 8.507059e+37
      %v3417 = vand.u32 %v3178, 2147483648
      %v3418 = vor.u32 1.1754944e-38, %v3417
      %v3419 = vsel %vm3416, %v3418, %v3414
      %v3420 = vmul.f32 1.0, %v3419
      %v3421 = vrcp.pop %v3179
      %v3422 = vmul.f32 %v3179, %v3421
      %v3423 = vsub.f32 1.0, %v3422
      %v3424 = vmul.f32 %v3421, %v3423
      %v3425 = vadd.f32 %v3421, %v3424
      %vm3426 = vweird.f32 %v3179
      %vm3427 = vweird.f32 %v3421
      %vm3428 = vmor %vm3426, %vm3427
      %v3429 = vsel %vm3428, %v3421, %v3425
      %v3430 = vand.u32 2147483647, %v3179
      %vm3431 = vcmp.eq.f32.partialorder %v3430, 8.507059e+37
      %v3432 = vand.u32 %v3179, 2147483648
      %v3433 = vor.u32 1.1754944e-38, %v3432
      %v3434 = vsel %vm3431, %v3433, %v3429
      %v3435 = vmul.f32 1.0, %v3434
      %v3436 = vrcp.pop %v3180
      %v3437 = vmul.f32 %v3180, %v3436
      %v3438 = vsub.f32 1.0, %v3437
      %v3439 = vmul.f32 %v3436, %v3438
      %v3440 = vadd.f32 %v3436, %v3439
      %vm3441 = vweird.f32 %v3180
      %vm3442 = vweird.f32 %v3436
      %vm3443 = vmor %vm3441, %vm3442
      %v3444 = vsel %vm3443, %v3436, %v3440
      %v3445 = vand.u32 2147483647, %v3180
      %vm3446 = vcmp.eq.f32.partialorder %v3445, 8.507059e+37
      %v3447 = vand.u32 %v3180, 2147483648
      %v3448 = vor.u32 1.1754944e-38, %v3447
      %v3449 = vsel %vm3446, %v3448, %v3444
      %v3450 = vmul.f32 1.0, %v3449
      %v3451 = vrcp.pop %v3181
      %v3452 = vmul.f32 %v3181, %v3451
      %v3453 = vsub.f32 1.0, %v3452
      %v3454 = vmul.f32 %v3451, %v3453
      %v3455 = vadd.f32 %v3451, %v3454
      %vm3456 = vweird.f32 %v3181
      %vm3457 = vweird.f32 %v3451
      %vm3458 = vmor %vm3456, %vm3457
      %v3459 = vsel %vm3458, %v3451, %v3455
      %v3460 = vand.u32 2147483647, %v3181
      %vm3461 = vcmp.eq.f32.partialorder %v3460, 8.507059e+37
      %v3462 = vand.u32 %v3181, 2147483648
      %v3463 = vor.u32 1.1754944e-38, %v3462
      %v3464 = vsel %vm3461, %v3463, %v3459
      %v3465 = vmul.f32 1.0, %v3464
      %v3466 = vrcp.pop %v3182
      %v3467 = vmul.f32 %v3182, %v3466
      %v3468 = vsub.f32 1.0, %v3467
      %v3469 = vmul.f32 %v3466, %v3468
      %v3470 = vadd.f32 %v3466, %v3469
      %vm3471 = vweird.f32 %v3182
      %vm3472 = vweird.f32 %v3466
      %vm3473 = vmor %vm3471, %vm3472
      %v3474 = vsel %vm3473, %v3466, %v3470
      %v3475 = vand.u32 2147483647, %v3182
      %vm3476 = vcmp.eq.f32.partialorder %v3475, 8.507059e+37
      %v3477 = vand.u32 %v3182, 2147483648
      %v3478 = vor.u32 1.1754944e-38, %v3477
      %v3479 = vsel %vm3476, %v3478, %v3474
      %v3480 = vmul.f32 1.0, %v3479
      %v3481 = vrcp.pop %v3183
      %v3482 = vmul.f32 %v3183, %v3481
      %v3483 = vsub.f32 1.0, %v3482
      %v3484 = vmul.f32 %v3481, %v3483
      %v3485 = vadd.f32 %v3481, %v3484
      %vm3486 = vweird.f32 %v3183
      %vm3487 = vweird.f32 %v3481
      %vm3488 = vmor %vm3486, %vm3487
      %v3489 = vsel %vm3488, %v3481, %v3485
      %v3490 = vand.u32 2147483647, %v3183
      %vm3491 = vcmp.eq.f32.partialorder %v3490, 8.507059e+37
      %v3492 = vand.u32 %v3183, 2147483648
      %v3493 = vor.u32 1.1754944e-38, %v3492
      %v3494 = vsel %vm3491, %v3493, %v3489
      %v3495 = vmul.f32 1.0, %v3494
      %v3496 = vrcp.pop %v3184
      %v3497 = vmul.f32 %v3184, %v3496
      %v3498 = vsub.f32 1.0, %v3497
      %v3499 = vmul.f32 %v3496, %v3498
      %v3500 = vadd.f32 %v3496, %v3499
      %vm3501 = vweird.f32 %v3184
      %vm3502 = vweird.f32 %v3496
      %vm3503 = vmor %vm3501, %vm3502
      %v3504 = vsel %vm3503, %v3496, %v3500
      %v3505 = vand.u32 2147483647, %v3184
      %vm3506 = vcmp.eq.f32.partialorder %v3505, 8.507059e+37
      %v3507 = vand.u32 %v3184, 2147483648
      %v3508 = vor.u32 1.1754944e-38, %v3507
      %v3509 = vsel %vm3506, %v3508, %v3504
      %v3510 = vmul.f32 1.0, %v3509
      %v3511 = vrcp.pop %v3185
      %v3512 = vmul.f32 %v3185, %v3511
      %v3513 = vsub.f32 1.0, %v3512
      %v3514 = vmul.f32 %v3511, %v3513
      %v3515 = vadd.f32 %v3511, %v3514
      %vm3516 = vweird.f32 %v3185
      %vm3517 = vweird.f32 %v3511
      %vm3518 = vmor %vm3516, %vm3517
      %v3519 = vsel %vm3518, %v3511, %v3515
      %v3520 = vand.u32 2147483647, %v3185
      %vm3521 = vcmp.eq.f32.partialorder %v3520, 8.507059e+37
      %v3522 = vand.u32 %v3185, 2147483648
      %v3523 = vor.u32 1.1754944e-38, %v3522
      %v3524 = vsel %vm3521, %v3523, %v3519
      %v3525 = vmul.f32 1.0, %v3524
      %v3526 = vrcp.pop %v3186
      %v3527 = vmul.f32 %v3186, %v3526
      %v3528 = vsub.f32 1.0, %v3527
      %v3529 = vmul.f32 %v3526, %v3528
      %v3530 = vadd.f32 %v3526, %v3529
      %vm3531 = vweird.f32 %v3186
      %vm3532 = vweird.f32 %v3526
      %vm3533 = vmor %vm3531, %vm3532
      %v3534 = vsel %vm3533, %v3526, %v3530
      %v3535 = vand.u32 2147483647, %v3186
      %vm3536 = vcmp.eq.f32.partialorder %v3535, 8.507059e+37
      %v3537 = vand.u32 %v3186, 2147483648
      %v3538 = vor.u32 1.1754944e-38, %v3537
      %v3539 = vsel %vm3536, %v3538, %v3534
      %v3540 = vmul.f32 1.0, %v3539
      %v3541 = vrcp.pop %v3187
      %v3542 = vmul.f32 %v3187, %v3541
      %v3543 = vsub.f32 1.0, %v3542
      %v3544 = vmul.f32 %v3541, %v3543
      %v3545 = vadd.f32 %v3541, %v3544
      %vm3546 = vweird.f32 %v3187
      %vm3547 = vweird.f32 %v3541
      %vm3548 = vmor %vm3546, %vm3547
      %v3549 = vsel %vm3548, %v3541, %v3545
      %v3550 = vand.u32 2147483647, %v3187
      %vm3551 = vcmp.eq.f32.partialorder %v3550, 8.507059e+37
      %v3552 = vand.u32 %v3187, 2147483648
      %v3553 = vor.u32 1.1754944e-38, %v3552
      %v3554 = vsel %vm3551, %v3553, %v3549
      %v3555 = vmul.f32 1.0, %v3554
      %v3556 = vrcp.pop %v3188
      %v3557 = vmul.f32 %v3188, %v3556
      %v3558 = vsub.f32 1.0, %v3557
      %v3559 = vmul.f32 %v3556, %v3558
      %v3560 = vadd.f32 %v3556, %v3559
      %vm3561 = vweird.f32 %v3188
      %vm3562 = vweird.f32 %v3556
      %vm3563 = vmor %vm3561, %vm3562
      %v3564 = vsel %vm3563, %v3556, %v3560
      %v3565 = vand.u32 2147483647, %v3188
      %vm3566 = vcmp.eq.f32.partialorder %v3565, 8.507059e+37
      %v3567 = vand.u32 %v3188, 2147483648
      %v3568 = vor.u32 1.1754944e-38, %v3567
      %v3569 = vsel %vm3566, %v3568, %v3564
      %v3570 = vmul.f32 1.0, %v3569
      %v3571 = vrcp.pop %v3189
      %v3572 = vmul.f32 %v3189, %v3571
      %v3573 = vsub.f32 1.0, %v3572
      %v3574 = vmul.f32 %v3571, %v3573
      %v3575 = vadd.f32 %v3571, %v3574
      %vm3576 = vweird.f32 %v3189
      %vm3577 = vweird.f32 %v3571
      %vm3578 = vmor %vm3576, %vm3577
      %v3579 = vsel %vm3578, %v3571, %v3575
      %v3580 = vand.u32 2147483647, %v3189
      %vm3581 = vcmp.eq.f32.partialorder %v3580, 8.507059e+37
      %v3582 = vand.u32 %v3189, 2147483648
      %v3583 = vor.u32 1.1754944e-38, %v3582
      %v3584 = vsel %vm3581, %v3583, %v3579
      %v3585 = vmul.f32 1.0, %v3584
      %v3586 = vrcp.pop %v3190
      %v3587 = vmul.f32 %v3190, %v3586
      %v3588 = vsub.f32 1.0, %v3587
      %v3589 = vmul.f32 %v3586, %v3588
      %v3590 = vadd.f32 %v3586, %v3589
      %vm3591 = vweird.f32 %v3190
      %vm3592 = vweird.f32 %v3586
      %vm3593 = vmor %vm3591, %vm3592
      %v3594 = vsel %vm3593, %v3586, %v3590
      %v3595 = vand.u32 2147483647, %v3190
      %vm3596 = vcmp.eq.f32.partialorder %v3595, 8.507059e+37
      %v3597 = vand.u32 %v3190, 2147483648
      %v3598 = vor.u32 1.1754944e-38, %v3597
      %v3599 = vsel %vm3596, %v3598, %v3594
      %v3600 = vmul.f32 1.0, %v3599
      %v3601 = vrcp.pop %v3191
      %v3602 = vmul.f32 %v3191, %v3601
      %v3603 = vsub.f32 1.0, %v3602
      %v3604 = vmul.f32 %v3601, %v3603
      %v3605 = vadd.f32 %v3601, %v3604
      %vm3606 = vweird.f32 %v3191
      %vm3607 = vweird.f32 %v3601
      %vm3608 = vmor %vm3606, %vm3607
      %v3609 = vsel %vm3608, %v3601, %v3605
      %v3610 = vand.u32 2147483647, %v3191
      %vm3611 = vcmp.eq.f32.partialorder %v3610, 8.507059e+37
      %v3612 = vand.u32 %v3191, 2147483648
      %v3613 = vor.u32 1.1754944e-38, %v3612
      %v3614 = vsel %vm3611, %v3613, %v3609
      %v3615 = vmul.f32 1.0, %v3614
      %v3616 = vrcp.pop %v3192
      %v3617 = vmul.f32 %v3192, %v3616
      %v3618 = vsub.f32 1.0, %v3617
      %v3619 = vmul.f32 %v3616, %v3618
      %v3620 = vadd.f32 %v3616, %v3619
      %vm3621 = vweird.f32 %v3192
      %vm3622 = vweird.f32 %v3616
      %vm3623 = vmor %vm3621, %vm3622
      %v3624 = vsel %vm3623, %v3616, %v3620
      %v3625 = vand.u32 2147483647, %v3192
      %vm3626 = vcmp.eq.f32.partialorder %v3625, 8.507059e+37
      %v3627 = vand.u32 %v3192, 2147483648
      %v3628 = vor.u32 1.1754944e-38, %v3627
      %v3629 = vsel %vm3626, %v3628, %v3624
      %v3630 = vmul.f32 1.0, %v3629
      %v3631 = vrcp.pop %v3193
      %v3632 = vmul.f32 %v3193, %v3631
      %v3633 = vsub.f32 1.0, %v3632
      %v3634 = vmul.f32 %v3631, %v3633
      %v3635 = vadd.f32 %v3631, %v3634
      %vm3636 = vweird.f32 %v3193
      %vm3637 = vweird.f32 %v3631
      %vm3638 = vmor %vm3636, %vm3637
      %v3639 = vsel %vm3638, %v3631, %v3635
      %v3640 = vand.u32 2147483647, %v3193
      %vm3641 = vcmp.eq.f32.partialorder %v3640, 8.507059e+37
      %v3642 = vand.u32 %v3193, 2147483648
      %v3643 = vor.u32 1.1754944e-38, %v3642
      %v3644 = vsel %vm3641, %v3643, %v3639
      %v3645 = vmul.f32 1.0, %v3644
      %v3646 = vrcp.pop %v3194
      %v3647 = vmul.f32 %v3194, %v3646
      %v3648 = vsub.f32 1.0, %v3647
      %v3649 = vmul.f32 %v3646, %v3648
      %v3650 = vadd.f32 %v3646, %v3649
      %vm3651 = vweird.f32 %v3194
      %vm3652 = vweird.f32 %v3646
      %vm3653 = vmor %vm3651, %vm3652
      %v3654 = vsel %vm3653, %v3646, %v3650
      %v3655 = vand.u32 2147483647, %v3194
      %vm3656 = vcmp.eq.f32.partialorder %v3655, 8.507059e+37
      %v3657 = vand.u32 %v3194, 2147483648
      %v3658 = vor.u32 1.1754944e-38, %v3657
      %v3659 = vsel %vm3656, %v3658, %v3654
      %v3660 = vmul.f32 1.0, %v3659
      %v3661 = vrcp.pop %v3195
      %v3662 = vmul.f32 %v3195, %v3661
      %v3663 = vsub.f32 1.0, %v3662
      %v3664 = vmul.f32 %v3661, %v3663
      %v3665 = vadd.f32 %v3661, %v3664
      %vm3666 = vweird.f32 %v3195
      %vm3667 = vweird.f32 %v3661
      %vm3668 = vmor %vm3666, %vm3667
      %v3669 = vsel %vm3668, %v3661, %v3665
      %v3670 = vand.u32 2147483647, %v3195
      %vm3671 = vcmp.eq.f32.partialorder %v3670, 8.507059e+37
      %v3672 = vand.u32 %v3195, 2147483648
      %v3673 = vor.u32 1.1754944e-38, %v3672
      %v3674 = vsel %vm3671, %v3673, %v3669
      %v3675 = vmul.f32 1.0, %v3674
      %v3676 = vadd.f32 %v3210, %v1495
      %v3677 = vadd.f32 %v3225, %v1540
      %v3678 = vadd.f32 %v3240, %v1585
      %v3679 = vadd.f32 %v3255, %v1630
      %v3680 = vadd.f32 %v3270, %v1675
      %v3681 = vadd.f32 %v3285, %v1720
      %v3682 = vadd.f32 %v3300, %v1765
      %v3683 = vadd.f32 %v3315, %v1810
      %v3684 = vadd.f32 %v3330, %v1855
      %v3685 = vadd.f32 %v3345, %v1900
      %v3686 = vadd.f32 %v3360, %v1945
      %v3687 = vadd.f32 %v3375, %v1990
      %v3688 = vadd.f32 %v3390, %v2035
      %v3689 = vadd.f32 %v3405, %v2080
      %v3690 = vadd.f32 %v3420, %v2125
      %v3691 = vadd.f32 %v3435, %v2170
      %v3692 = vadd.f32 %v3450, %v2215
      %v3693 = vadd.f32 %v3465, %v2260
      %v3694 = vadd.f32 %v3480, %v2305
      %v3695 = vadd.f32 %v3495, %v2350
      %v3696 = vadd.f32 %v3510, %v2395
      %v3697 = vadd.f32 %v3525, %v2440
      %v3698 = vadd.f32 %v3540, %v2485
      %v3699 = vadd.f32 %v3555, %v2530
      %v3700 = vadd.f32 %v3570, %v2575
      %v3701 = vadd.f32 %v3585, %v2620
      %v3702 = vadd.f32 %v3600, %v2665
      %v3703 = vadd.f32 %v3615, %v2710
      %v3704 = vadd.f32 %v3630, %v2755
      %v3705 = vadd.f32 %v3645, %v2800
      %v3706 = vadd.f32 %v3660, %v2845
      %v3707 = vadd.f32 %v3675, %v2890
      %v3708 = vld [vmem:[%s2 + $0x80] sm:$0xff]
      %v3709 = vld [vmem:[%s2 + $0x88] sm:$0xff]
      %v3710 = vld [vmem:[%s2 + $0x90] sm:$0xff]
      %v3711 = vld [vmem:[%s2 + $0x98] sm:$0xff]
      %v3712 = vld [vmem:[%s2 + $0xa0] sm:$0xff]
      %v3713 = vld [vmem:[%s2 + $0xa8] sm:$0xff]
      %v3714 = vld [vmem:[%s2 + $0xb0] sm:$0xff]
      %v3715 = vld [vmem:[%s2 + $0xb8] sm:$0xff]
      %v3716 = vld [vmem:[%s2 + $0xc0] sm:$0xff]
      %v3717 = vld [vmem:[%s2 + $0xc8] sm:$0xff]
      %v3718 = vld [vmem:[%s2 + $0xd0] sm:$0xff]
      %v3719 = vld [vmem:[%s2 + $0xd8] sm:$0xff]
      %v3720 = vld [vmem:[%s2 + $0xe0] sm:$0xff]
      %v3721 = vld [vmem:[%s2 + $0xe8] sm:$0xff]
      %v3722 = vld [vmem:[%s2 + $0xf0] sm:$0xff]
      %v3723 = vld [vmem:[%s2 + $0xf8] sm:$0xff]
      %v3724 = vperm.slane %v303, 1
      %3725 = vmatpush.msra.mxu0 %v3723
      %3726 = vmatpush.msra.mxu0 %v3722
      %3727 = vmatpush.msra.mxu0 %v3721
      %3728 = vmatpush.msra.mxu0 %v3720
      %3729 = vmatpush.msra.mxu0 %v3719
      %3730 = vmatpush.msra.mxu0 %v3718
      %3731 = vmatpush.msra.mxu0 %v3717
      %3732 = vmatpush.msra.mxu0 %v3716
      %3733 = vmatpush.msra.mxu0 %v3715
      %3734 = vmatpush.msra.mxu0 %v3714
      %3735 = vmatpush.msra.mxu0 %v3713
      %3736 = vmatpush.msra.mxu0 %v3712
      %3737 = vmatpush.msra.mxu0 %v3711
      %3738 = vmatpush.msra.mxu0 %v3710
      %3739 = vmatpush.msra.mxu0 %v3709
      %3740 = vmatpush.msra.mxu0 %v3708
      %3741 = vmatmul.f32.gmra.mxu0 %v3676
      %v3742 = vpop.f32.mrf.mxu0
      %v3743 = vadd.f32 %v3724, %v3742
      %3744 = vmatmul.f32.gmra.mxu0 %v3677
      %v3745 = vpop.f32.mrf.mxu0
      %v3746 = vadd.f32 %v3724, %v3745
      %3747 = vmatmul.f32.gmra.mxu0 %v3678
      %v3748 = vpop.f32.mrf.mxu0
      %v3749 = vadd.f32 %v3724, %v3748
      %3750 = vmatmul.f32.gmra.mxu0 %v3679
      %v3751 = vpop.f32.mrf.mxu0
      %v3752 = vadd.f32 %v3724, %v3751
      %3753 = vmatmul.f32.gmra.mxu0 %v3680
      %v3754 = vpop.f32.mrf.mxu0
      %v3755 = vadd.f32 %v3724, %v3754
      %3756 = vmatmul.f32.gmra.mxu0 %v3681
      %v3757 = vpop.f32.mrf.mxu0
      %v3758 = vadd.f32 %v3724, %v3757
      %3759 = vmatmul.f32.gmra.mxu0 %v3682
      %v3760 = vpop.f32.mrf.mxu0
      %v3761 = vadd.f32 %v3724, %v3760
      %3762 = vmatmul.f32.gmra.mxu0 %v3683
      %v3763 = vpop.f32.mrf.mxu0
      %v3764 = vadd.f32 %v3724, %v3763
      %3765 = vmatmul.f32.gmra.mxu0 %v3684
      %v3766 = vpop.f32.mrf.mxu0
      %v3767 = vadd.f32 %v3724, %v3766
      %3768 = vmatmul.f32.gmra.mxu0 %v3685
      %v3769 = vpop.f32.mrf.mxu0
      %v3770 = vadd.f32 %v3724, %v3769
      %3771 = vmatmul.f32.gmra.mxu0 %v3686
      %v3772 = vpop.f32.mrf.mxu0
      %v3773 = vadd.f32 %v3724, %v3772
      %3774 = vmatmul.f32.gmra.mxu0 %v3687
      %v3775 = vpop.f32.mrf.mxu0
      %v3776 = vadd.f32 %v3724, %v3775
      %3777 = vmatmul.f32.gmra.mxu0 %v3688
      %v3778 = vpop.f32.mrf.mxu0
      %v3779 = vadd.f32 %v3724, %v3778
      %3780 = vmatmul.f32.gmra.mxu0 %v3689
      %v3781 = vpop.f32.mrf.mxu0
      %v3782 = vadd.f32 %v3724, %v3781
      %3783 = vmatmul.f32.gmra.mxu0 %v3690
      %v3784 = vpop.f32.mrf.mxu0
      %v3785 = vadd.f32 %v3724, %v3784
      %3786 = vmatmul.f32.gmra.mxu0 %v3691
      %v3787 = vpop.f32.mrf.mxu0
      %v3788 = vadd.f32 %v3724, %v3787
      %3789 = vmatmul.f32.gmra.mxu0 %v3692
      %v3790 = vpop.f32.mrf.mxu0
      %v3791 = vadd.f32 %v3724, %v3790
      %3792 = vmatmul.f32.gmra.mxu0 %v3693
      %v3793 = vpop.f32.mrf.mxu0
      %v3794 = vadd.f32 %v3724, %v3793
      %3795 = vmatmul.f32.gmra.mxu0 %v3694
      %v3796 = vpop.f32.mrf.mxu0
      %v3797 = vadd.f32 %v3724, %v3796
      %3798 = vmatmul.f32.gmra.mxu0 %v3695
      %v3799 = vpop.f32.mrf.mxu0
      %v3800 = vadd.f32 %v3724, %v3799
      %3801 = vmatmul.f32.gmra.mxu0 %v3696
      %v3802 = vpop.f32.mrf.mxu0
      %v3803 = vadd.f32 %v3724, %v3802
      %3804 = vmatmul.f32.gmra.mxu0 %v3697
      %v3805 = vpop.f32.mrf.mxu0
      %v3806 = vadd.f32 %v3724, %v3805
      %3807 = vmatmul.f32.gmra.mxu0 %v3698
      %v3808 = vpop.f32.mrf.mxu0
      %v3809 = vadd.f32 %v3724, %v3808
      %3810 = vmatmul.f32.gmra.mxu0 %v3699
      %v3811 = vpop.f32.mrf.mxu0
      %v3812 = vadd.f32 %v3724, %v3811
      %3813 = vmatmul.f32.gmra.mxu0 %v3700
      %v3814 = vpop.f32.mrf.mxu0
      %v3815 = vadd.f32 %v3724, %v3814
      %3816 = vmatmul.f32.gmra.mxu0 %v3701
      %v3817 = vpop.f32.mrf.mxu0
      %v3818 = vadd.f32 %v3724, %v3817
      %3819 = vmatmul.f32.gmra.mxu0 %v3702
      %v3820 = vpop.f32.mrf.mxu0
      %v3821 = vadd.f32 %v3724, %v3820
      %3822 = vmatmul.f32.gmra.mxu0 %v3703
      %v3823 = vpop.f32.mrf.mxu0
      %v3824 = vadd.f32 %v3724, %v3823
      %3825 = vmatmul.f32.gmra.mxu0 %v3704
      %v3826 = vpop.f32.mrf.mxu0
      %v3827 = vadd.f32 %v3724, %v3826
      %3828 = vmatmul.f32.gmra.mxu0 %v3705
      %v3829 = vpop.f32.mrf.mxu0
      %v3830 = vadd.f32 %v3724, %v3829
      %3831 = vmatmul.f32.gmra.mxu0 %v3706
      %v3832 = vpop.f32.mrf.mxu0
      %v3833 = vadd.f32 %v3724, %v3832
      %3834 = vmatmul.f32.gmra.mxu0 %v3707
      %v3835 = vpop.f32.mrf.mxu0
      %v3836 = vadd.f32 %v3724, %v3835
      %3837 = vdwg.mxu0
      %v3838 = vxor.u32 %v3743, 2147483648
      %v3839 = vxor.u32 %v3746, 2147483648
      %v3840 = vxor.u32 %v3749, 2147483648
      %v3841 = vxor.u32 %v3752, 2147483648
      %v3842 = vxor.u32 %v3755, 2147483648
      %v3843 = vxor.u32 %v3758, 2147483648
      %v3844 = vxor.u32 %v3761, 2147483648
      %v3845 = vxor.u32 %v3764, 2147483648
      %v3846 = vxor.u32 %v3767, 2147483648
      %v3847 = vxor.u32 %v3770, 2147483648
      %v3848 = vxor.u32 %v3773, 2147483648
      %v3849 = vxor.u32 %v3776, 2147483648
      %v3850 = vxor.u32 %v3779, 2147483648
      %v3851 = vxor.u32 %v3782, 2147483648
      %v3852 = vxor.u32 %v3785, 2147483648
      %v3853 = vxor.u32 %v3788, 2147483648
      %v3854 = vxor.u32 %v3791, 2147483648
      %v3855 = vxor.u32 %v3794, 2147483648
      %v3856 = vxor.u32 %v3797, 2147483648
      %v3857 = vxor.u32 %v3800, 2147483648
      %v3858 = vxor.u32 %v3803, 2147483648
      %v3859 = vxor.u32 %v3806, 2147483648
      %v3860 = vxor.u32 %v3809, 2147483648
      %v3861 = vxor.u32 %v3812, 2147483648
      %v3862 = vxor.u32 %v3815, 2147483648
      %v3863 = vxor.u32 %v3818, 2147483648
      %v3864 = vxor.u32 %v3821, 2147483648
      %v3865 = vxor.u32 %v3824, 2147483648
      %v3866 = vxor.u32 %v3827, 2147483648
      %v3867 = vxor.u32 %v3830, 2147483648
      %v3868 = vxor.u32 %v3833, 2147483648
      %v3869 = vxor.u32 %v3836, 2147483648
      %v3870 = vmul.f32 %v3838, 1.442695
      %v3871 = vpow.pop %v3870
      %v3872 = vmul.f32 %v3839, 1.442695
      %v3873 = vpow.pop %v3872
      %v3874 = vmul.f32 %v3840, 1.442695
      %v3875 = vpow.pop %v3874
      %v3876 = vmul.f32 %v3841, 1.442695
      %v3877 = vpow.pop %v3876
      %v3878 = vmul.f32 %v3842, 1.442695
      %v3879 = vpow.pop %v3878
      %v3880 = vmul.f32 %v3843, 1.442695
      %v3881 = vpow.pop %v3880
      %v3882 = vmul.f32 %v3844, 1.442695
      %v3883 = vpow.pop %v3882
      %v3884 = vmul.f32 %v3845, 1.442695
      %v3885 = vpow.pop %v3884
      %v3886 = vmul.f32 %v3846, 1.442695
      %v3887 = vpow.pop %v3886
      %v3888 = vmul.f32 %v3847, 1.442695
      %v3889 = vpow.pop %v3888
      %v3890 = vmul.f32 %v3848, 1.442695
      %v3891 = vpow.pop %v3890
      %v3892 = vmul.f32 %v3849, 1.442695
      %v3893 = vpow.pop %v3892
      %v3894 = vmul.f32 %v3850, 1.442695
      %v3895 = vpow.pop %v3894
      %v3896 = vmul.f32 %v3851, 1.442695
      %v3897 = vpow.pop %v3896
      %v3898 = vmul.f32 %v3852, 1.442695
      %v3899 = vpow.pop %v3898
      %v3900 = vmul.f32 %v3853, 1.442695
      %v3901 = vpow.pop %v3900
      %v3902 = vmul.f32 %v3854, 1.442695
      %v3903 = vpow.pop %v3902
      %v3904 = vmul.f32 %v3855, 1.442695
      %v3905 = vpow.pop %v3904
      %v3906 = vmul.f32 %v3856, 1.442695
      %v3907 = vpow.pop %v3906
      %v3908 = vmul.f32 %v3857, 1.442695
      %v3909 = vpow.pop %v3908
      %v3910 = vmul.f32 %v3858, 1.442695
      %v3911 = vpow.pop %v3910
      %v3912 = vmul.f32 %v3859, 1.442695
      %v3913 = vpow.pop %v3912
      %v3914 = vmul.f32 %v3860, 1.442695
      %v3915 = vpow.pop %v3914
      %v3916 = vmul.f32 %v3861, 1.442695
      %v3917 = vpow.pop %v3916
      %v3918 = vmul.f32 %v3862, 1.442695
      %v3919 = vpow.pop %v3918
      %v3920 = vmul.f32 %v3863, 1.442695
      %v3921 = vpow.pop %v3920
      %v3922 = vmul.f32 %v3864, 1.442695
      %v3923 = vpow.pop %v3922
      %v3924 = vmul.f32 %v3865, 1.442695
      %v3925 = vpow.pop %v3924
      %v3926 = vmul.f32 %v3866, 1.442695
      %v3927 = vpow.pop %v3926
      %v3928 = vmul.f32 %v3867, 1.442695
      %v3929 = vpow.pop %v3928
      %v3930 = vmul.f32 %v3868, 1.442695
      %v3931 = vpow.pop %v3930
      %v3932 = vmul.f32 %v3869, 1.442695
      %v3933 = vpow.pop %v3932
      %v3934 = vadd.f32 %v3871, 1.0
      %v3935 = vadd.f32 %v3873, 1.0
      %v3936 = vadd.f32 %v3875, 1.0
      %v3937 = vadd.f32 %v3877, 1.0
      %v3938 = vadd.f32 %v3879, 1.0
      %v3939 = vadd.f32 %v3881, 1.0
      %v3940 = vadd.f32 %v3883, 1.0
      %v3941 = vadd.f32 %v3885, 1.0
      %v3942 = vadd.f32 %v3887, 1.0
      %v3943 = vadd.f32 %v3889, 1.0
      %v3944 = vadd.f32 %v3891, 1.0
      %v3945 = vadd.f32 %v3893, 1.0
      %v3946 = vadd.f32 %v3895, 1.0
      %v3947 = vadd.f32 %v3897, 1.0
      %v3948 = vadd.f32 %v3899, 1.0
      %v3949 = vadd.f32 %v3901, 1.0
      %v3950 = vadd.f32 %v3903, 1.0
      %v3951 = vadd.f32 %v3905, 1.0
      %v3952 = vadd.f32 %v3907, 1.0
      %v3953 = vadd.f32 %v3909, 1.0
      %v3954 = vadd.f32 %v3911, 1.0
      %v3955 = vadd.f32 %v3913, 1.0
      %v3956 = vadd.f32 %v3915, 1.0
      %v3957 = vadd.f32 %v3917, 1.0
      %v3958 = vadd.f32 %v3919, 1.0
      %v3959 = vadd.f32 %v3921, 1.0
      %v3960 = vadd.f32 %v3923, 1.0
      %v3961 = vadd.f32 %v3925, 1.0
      %v3962 = vadd.f32 %v3927, 1.0
      %v3963 = vadd.f32 %v3929, 1.0
      %v3964 = vadd.f32 %v3931, 1.0
      %v3965 = vadd.f32 %v3933, 1.0
      %v3966 = vrcp.pop %v3934
      %v3967 = vmul.f32 %v3934, %v3966
      %v3968 = vsub.f32 1.0, %v3967
      %v3969 = vmul.f32 %v3966, %v3968
      %v3970 = vadd.f32 %v3966, %v3969
      %vm3971 = vweird.f32 %v3934
      %vm3972 = vweird.f32 %v3966
      %vm3973 = vmor %vm3971, %vm3972
      %v3974 = vsel %vm3973, %v3966, %v3970
      %v3975 = vand.u32 2147483647, %v3934
      %vm3976 = vcmp.eq.f32.partialorder %v3975, 8.507059e+37
      %v3977 = vand.u32 %v3934, 2147483648
      %v3978 = vor.u32 1.1754944e-38, %v3977
      %v3979 = vsel %vm3976, %v3978, %v3974
      %v3980 = vmul.f32 1.0, %v3979
      %v3981 = vrcp.pop %v3935
      %v3982 = vmul.f32 %v3935, %v3981
      %v3983 = vsub.f32 1.0, %v3982
      %v3984 = vmul.f32 %v3981, %v3983
      %v3985 = vadd.f32 %v3981, %v3984
      %vm3986 = vweird.f32 %v3935
      %vm3987 = vweird.f32 %v3981
      %vm3988 = vmor %vm3986, %vm3987
      %v3989 = vsel %vm3988, %v3981, %v3985
      %v3990 = vand.u32 2147483647, %v3935
      %vm3991 = vcmp.eq.f32.partialorder %v3990, 8.507059e+37
      %v3992 = vand.u32 %v3935, 2147483648
      %v3993 = vor.u32 1.1754944e-38, %v3992
      %v3994 = vsel %vm3991, %v3993, %v3989
      %v3995 = vmul.f32 1.0, %v3994
      %v3996 = vrcp.pop %v3936
      %v3997 = vmul.f32 %v3936, %v3996
      %v3998 = vsub.f32 1.0, %v3997
      %v3999 = vmul.f32 %v3996, %v3998
      %v4000 = vadd.f32 %v3996, %v3999
      %vm4001 = vweird.f32 %v3936
      %vm4002 = vweird.f32 %v3996
      %vm4003 = vmor %vm4001, %vm4002
      %v4004 = vsel %vm4003, %v3996, %v4000
      %v4005 = vand.u32 2147483647, %v3936
      %vm4006 = vcmp.eq.f32.partialorder %v4005, 8.507059e+37
      %v4007 = vand.u32 %v3936, 2147483648
      %v4008 = vor.u32 1.1754944e-38, %v4007
      %v4009 = vsel %vm4006, %v4008, %v4004
      %v4010 = vmul.f32 1.0, %v4009
      %v4011 = vrcp.pop %v3937
      %v4012 = vmul.f32 %v3937, %v4011
      %v4013 = vsub.f32 1.0, %v4012
      %v4014 = vmul.f32 %v4011, %v4013
      %v4015 = vadd.f32 %v4011, %v4014
      %vm4016 = vweird.f32 %v3937
      %vm4017 = vweird.f32 %v4011
      %vm4018 = vmor %vm4016, %vm4017
      %v4019 = vsel %vm4018, %v4011, %v4015
      %v4020 = vand.u32 2147483647, %v3937
      %vm4021 = vcmp.eq.f32.partialorder %v4020, 8.507059e+37
      %v4022 = vand.u32 %v3937, 2147483648
      %v4023 = vor.u32 1.1754944e-38, %v4022
      %v4024 = vsel %vm4021, %v4023, %v4019
      %v4025 = vmul.f32 1.0, %v4024
      %v4026 = vrcp.pop %v3938
      %v4027 = vmul.f32 %v3938, %v4026
      %v4028 = vsub.f32 1.0, %v4027
      %v4029 = vmul.f32 %v4026, %v4028
      %v4030 = vadd.f32 %v4026, %v4029
      %vm4031 = vweird.f32 %v3938
      %vm4032 = vweird.f32 %v4026
      %vm4033 = vmor %vm4031, %vm4032
      %v4034 = vsel %vm4033, %v4026, %v4030
      %v4035 = vand.u32 2147483647, %v3938
      %vm4036 = vcmp.eq.f32.partialorder %v4035, 8.507059e+37
      %v4037 = vand.u32 %v3938, 2147483648
      %v4038 = vor.u32 1.1754944e-38, %v4037
      %v4039 = vsel %vm4036, %v4038, %v4034
      %v4040 = vmul.f32 1.0, %v4039
      %v4041 = vrcp.pop %v3939
      %v4042 = vmul.f32 %v3939, %v4041
      %v4043 = vsub.f32 1.0, %v4042
      %v4044 = vmul.f32 %v4041, %v4043
      %v4045 = vadd.f32 %v4041, %v4044
      %vm4046 = vweird.f32 %v3939
      %vm4047 = vweird.f32 %v4041
      %vm4048 = vmor %vm4046, %vm4047
      %v4049 = vsel %vm4048, %v4041, %v4045
      %v4050 = vand.u32 2147483647, %v3939
      %vm4051 = vcmp.eq.f32.partialorder %v4050, 8.507059e+37
      %v4052 = vand.u32 %v3939, 2147483648
      %v4053 = vor.u32 1.1754944e-38, %v4052
      %v4054 = vsel %vm4051, %v4053, %v4049
      %v4055 = vmul.f32 1.0, %v4054
      %v4056 = vrcp.pop %v3940
      %v4057 = vmul.f32 %v3940, %v4056
      %v4058 = vsub.f32 1.0, %v4057
      %v4059 = vmul.f32 %v4056, %v4058
      %v4060 = vadd.f32 %v4056, %v4059
      %vm4061 = vweird.f32 %v3940
      %vm4062 = vweird.f32 %v4056
      %vm4063 = vmor %vm4061, %vm4062
      %v4064 = vsel %vm4063, %v4056, %v4060
      %v4065 = vand.u32 2147483647, %v3940
      %vm4066 = vcmp.eq.f32.partialorder %v4065, 8.507059e+37
      %v4067 = vand.u32 %v3940, 2147483648
      %v4068 = vor.u32 1.1754944e-38, %v4067
      %v4069 = vsel %vm4066, %v4068, %v4064
      %v4070 = vmul.f32 1.0, %v4069
      %v4071 = vrcp.pop %v3941
      %v4072 = vmul.f32 %v3941, %v4071
      %v4073 = vsub.f32 1.0, %v4072
      %v4074 = vmul.f32 %v4071, %v4073
      %v4075 = vadd.f32 %v4071, %v4074
      %vm4076 = vweird.f32 %v3941
      %vm4077 = vweird.f32 %v4071
      %vm4078 = vmor %vm4076, %vm4077
      %v4079 = vsel %vm4078, %v4071, %v4075
      %v4080 = vand.u32 2147483647, %v3941
      %vm4081 = vcmp.eq.f32.partialorder %v4080, 8.507059e+37
      %v4082 = vand.u32 %v3941, 2147483648
      %v4083 = vor.u32 1.1754944e-38, %v4082
      %v4084 = vsel %vm4081, %v4083, %v4079
      %v4085 = vmul.f32 1.0, %v4084
      %v4086 = vrcp.pop %v3942
      %v4087 = vmul.f32 %v3942, %v4086
      %v4088 = vsub.f32 1.0, %v4087
      %v4089 = vmul.f32 %v4086, %v4088
      %v4090 = vadd.f32 %v4086, %v4089
      %vm4091 = vweird.f32 %v3942
      %vm4092 = vweird.f32 %v4086
      %vm4093 = vmor %vm4091, %vm4092
      %v4094 = vsel %vm4093, %v4086, %v4090
      %v4095 = vand.u32 2147483647, %v3942
      %vm4096 = vcmp.eq.f32.partialorder %v4095, 8.507059e+37
      %v4097 = vand.u32 %v3942, 2147483648
      %v4098 = vor.u32 1.1754944e-38, %v4097
      %v4099 = vsel %vm4096, %v4098, %v4094
      %v4100 = vmul.f32 1.0, %v4099
      %v4101 = vrcp.pop %v3943
      %v4102 = vmul.f32 %v3943, %v4101
      %v4103 = vsub.f32 1.0, %v4102
      %v4104 = vmul.f32 %v4101, %v4103
      %v4105 = vadd.f32 %v4101, %v4104
      %vm4106 = vweird.f32 %v3943
      %vm4107 = vweird.f32 %v4101
      %vm4108 = vmor %vm4106, %vm4107
      %v4109 = vsel %vm4108, %v4101, %v4105
      %v4110 = vand.u32 2147483647, %v3943
      %vm4111 = vcmp.eq.f32.partialorder %v4110, 8.507059e+37
      %v4112 = vand.u32 %v3943, 2147483648
      %v4113 = vor.u32 1.1754944e-38, %v4112
      %v4114 = vsel %vm4111, %v4113, %v4109
      %v4115 = vmul.f32 1.0, %v4114
      %v4116 = vrcp.pop %v3944
      %v4117 = vmul.f32 %v3944, %v4116
      %v4118 = vsub.f32 1.0, %v4117
      %v4119 = vmul.f32 %v4116, %v4118
      %v4120 = vadd.f32 %v4116, %v4119
      %vm4121 = vweird.f32 %v3944
      %vm4122 = vweird.f32 %v4116
      %vm4123 = vmor %vm4121, %vm4122
      %v4124 = vsel %vm4123, %v4116, %v4120
      %v4125 = vand.u32 2147483647, %v3944
      %vm4126 = vcmp.eq.f32.partialorder %v4125, 8.507059e+37
      %v4127 = vand.u32 %v3944, 2147483648
      %v4128 = vor.u32 1.1754944e-38, %v4127
      %v4129 = vsel %vm4126, %v4128, %v4124
      %v4130 = vmul.f32 1.0, %v4129
      %v4131 = vrcp.pop %v3945
      %v4132 = vmul.f32 %v3945, %v4131
      %v4133 = vsub.f32 1.0, %v4132
      %v4134 = vmul.f32 %v4131, %v4133
      %v4135 = vadd.f32 %v4131, %v4134
      %vm4136 = vweird.f32 %v3945
      %vm4137 = vweird.f32 %v4131
      %vm4138 = vmor %vm4136, %vm4137
      %v4139 = vsel %vm4138, %v4131, %v4135
      %v4140 = vand.u32 2147483647, %v3945
      %vm4141 = vcmp.eq.f32.partialorder %v4140, 8.507059e+37
      %v4142 = vand.u32 %v3945, 2147483648
      %v4143 = vor.u32 1.1754944e-38, %v4142
      %v4144 = vsel %vm4141, %v4143, %v4139
      %v4145 = vmul.f32 1.0, %v4144
      %v4146 = vrcp.pop %v3946
      %v4147 = vmul.f32 %v3946, %v4146
      %v4148 = vsub.f32 1.0, %v4147
      %v4149 = vmul.f32 %v4146, %v4148
      %v4150 = vadd.f32 %v4146, %v4149
      %vm4151 = vweird.f32 %v3946
      %vm4152 = vweird.f32 %v4146
      %vm4153 = vmor %vm4151, %vm4152
      %v4154 = vsel %vm4153, %v4146, %v4150
      %v4155 = vand.u32 2147483647, %v3946
      %vm4156 = vcmp.eq.f32.partialorder %v4155, 8.507059e+37
      %v4157 = vand.u32 %v3946, 2147483648
      %v4158 = vor.u32 1.1754944e-38, %v4157
      %v4159 = vsel %vm4156, %v4158, %v4154
      %v4160 = vmul.f32 1.0, %v4159
      %v4161 = vrcp.pop %v3947
      %v4162 = vmul.f32 %v3947, %v4161
      %v4163 = vsub.f32 1.0, %v4162
      %v4164 = vmul.f32 %v4161, %v4163
      %v4165 = vadd.f32 %v4161, %v4164
      %vm4166 = vweird.f32 %v3947
      %vm4167 = vweird.f32 %v4161
      %vm4168 = vmor %vm4166, %vm4167
      %v4169 = vsel %vm4168, %v4161, %v4165
      %v4170 = vand.u32 2147483647, %v3947
      %vm4171 = vcmp.eq.f32.partialorder %v4170, 8.507059e+37
      %v4172 = vand.u32 %v3947, 2147483648
      %v4173 = vor.u32 1.1754944e-38, %v4172
      %v4174 = vsel %vm4171, %v4173, %v4169
      %v4175 = vmul.f32 1.0, %v4174
      %v4176 = vrcp.pop %v3948
      %v4177 = vmul.f32 %v3948, %v4176
      %v4178 = vsub.f32 1.0, %v4177
      %v4179 = vmul.f32 %v4176, %v4178
      %v4180 = vadd.f32 %v4176, %v4179
      %vm4181 = vweird.f32 %v3948
      %vm4182 = vweird.f32 %v4176
      %vm4183 = vmor %vm4181, %vm4182
      %v4184 = vsel %vm4183, %v4176, %v4180
      %v4185 = vand.u32 2147483647, %v3948
      %vm4186 = vcmp.eq.f32.partialorder %v4185, 8.507059e+37
      %v4187 = vand.u32 %v3948, 2147483648
      %v4188 = vor.u32 1.1754944e-38, %v4187
      %v4189 = vsel %vm4186, %v4188, %v4184
      %v4190 = vmul.f32 1.0, %v4189
      %v4191 = vrcp.pop %v3949
      %v4192 = vmul.f32 %v3949, %v4191
      %v4193 = vsub.f32 1.0, %v4192
      %v4194 = vmul.f32 %v4191, %v4193
      %v4195 = vadd.f32 %v4191, %v4194
      %vm4196 = vweird.f32 %v3949
      %vm4197 = vweird.f32 %v4191
      %vm4198 = vmor %vm4196, %vm4197
      %v4199 = vsel %vm4198, %v4191, %v4195
      %v4200 = vand.u32 2147483647, %v3949
      %vm4201 = vcmp.eq.f32.partialorder %v4200, 8.507059e+37
      %v4202 = vand.u32 %v3949, 2147483648
      %v4203 = vor.u32 1.1754944e-38, %v4202
      %v4204 = vsel %vm4201, %v4203, %v4199
      %v4205 = vmul.f32 1.0, %v4204
      %v4206 = vrcp.pop %v3950
      %v4207 = vmul.f32 %v3950, %v4206
      %v4208 = vsub.f32 1.0, %v4207
      %v4209 = vmul.f32 %v4206, %v4208
      %v4210 = vadd.f32 %v4206, %v4209
      %vm4211 = vweird.f32 %v3950
      %vm4212 = vweird.f32 %v4206
      %vm4213 = vmor %vm4211, %vm4212
      %v4214 = vsel %vm4213, %v4206, %v4210
      %v4215 = vand.u32 2147483647, %v3950
      %vm4216 = vcmp.eq.f32.partialorder %v4215, 8.507059e+37
      %v4217 = vand.u32 %v3950, 2147483648
      %v4218 = vor.u32 1.1754944e-38, %v4217
      %v4219 = vsel %vm4216, %v4218, %v4214
      %v4220 = vmul.f32 1.0, %v4219
      %v4221 = vrcp.pop %v3951
      %v4222 = vmul.f32 %v3951, %v4221
      %v4223 = vsub.f32 1.0, %v4222
      %v4224 = vmul.f32 %v4221, %v4223
      %v4225 = vadd.f32 %v4221, %v4224
      %vm4226 = vweird.f32 %v3951
      %vm4227 = vweird.f32 %v4221
      %vm4228 = vmor %vm4226, %vm4227
      %v4229 = vsel %vm4228, %v4221, %v4225
      %v4230 = vand.u32 2147483647, %v3951
      %vm4231 = vcmp.eq.f32.partialorder %v4230, 8.507059e+37
      %v4232 = vand.u32 %v3951, 2147483648
      %v4233 = vor.u32 1.1754944e-38, %v4232
      %v4234 = vsel %vm4231, %v4233, %v4229
      %v4235 = vmul.f32 1.0, %v4234
      %v4236 = vrcp.pop %v3952
      %v4237 = vmul.f32 %v3952, %v4236
      %v4238 = vsub.f32 1.0, %v4237
      %v4239 = vmul.f32 %v4236, %v4238
      %v4240 = vadd.f32 %v4236, %v4239
      %vm4241 = vweird.f32 %v3952
      %vm4242 = vweird.f32 %v4236
      %vm4243 = vmor %vm4241, %vm4242
      %v4244 = vsel %vm4243, %v4236, %v4240
      %v4245 = vand.u32 2147483647, %v3952
      %vm4246 = vcmp.eq.f32.partialorder %v4245, 8.507059e+37
      %v4247 = vand.u32 %v3952, 2147483648
      %v4248 = vor.u32 1.1754944e-38, %v4247
      %v4249 = vsel %vm4246, %v4248, %v4244
      %v4250 = vmul.f32 1.0, %v4249
      %v4251 = vrcp.pop %v3953
      %v4252 = vmul.f32 %v3953, %v4251
      %v4253 = vsub.f32 1.0, %v4252
      %v4254 = vmul.f32 %v4251, %v4253
      %v4255 = vadd.f32 %v4251, %v4254
      %vm4256 = vweird.f32 %v3953
      %vm4257 = vweird.f32 %v4251
      %vm4258 = vmor %vm4256, %vm4257
      %v4259 = vsel %vm4258, %v4251, %v4255
      %v4260 = vand.u32 2147483647, %v3953
      %vm4261 = vcmp.eq.f32.partialorder %v4260, 8.507059e+37
      %v4262 = vand.u32 %v3953, 2147483648
      %v4263 = vor.u32 1.1754944e-38, %v4262
      %v4264 = vsel %vm4261, %v4263, %v4259
      %v4265 = vmul.f32 1.0, %v4264
      %v4266 = vrcp.pop %v3954
      %v4267 = vmul.f32 %v3954, %v4266
      %v4268 = vsub.f32 1.0, %v4267
      %v4269 = vmul.f32 %v4266, %v4268
      %v4270 = vadd.f32 %v4266, %v4269
      %vm4271 = vweird.f32 %v3954
      %vm4272 = vweird.f32 %v4266
      %vm4273 = vmor %vm4271, %vm4272
      %v4274 = vsel %vm4273, %v4266, %v4270
      %v4275 = vand.u32 2147483647, %v3954
      %vm4276 = vcmp.eq.f32.partialorder %v4275, 8.507059e+37
      %v4277 = vand.u32 %v3954, 2147483648
      %v4278 = vor.u32 1.1754944e-38, %v4277
      %v4279 = vsel %vm4276, %v4278, %v4274
      %v4280 = vmul.f32 1.0, %v4279
      %v4281 = vrcp.pop %v3955
      %v4282 = vmul.f32 %v3955, %v4281
      %v4283 = vsub.f32 1.0, %v4282
      %v4284 = vmul.f32 %v4281, %v4283
      %v4285 = vadd.f32 %v4281, %v4284
      %vm4286 = vweird.f32 %v3955
      %vm4287 = vweird.f32 %v4281
      %vm4288 = vmor %vm4286, %vm4287
      %v4289 = vsel %vm4288, %v4281, %v4285
      %v4290 = vand.u32 2147483647, %v3955
      %vm4291 = vcmp.eq.f32.partialorder %v4290, 8.507059e+37
      %v4292 = vand.u32 %v3955, 2147483648
      %v4293 = vor.u32 1.1754944e-38, %v4292
      %v4294 = vsel %vm4291, %v4293, %v4289
      %v4295 = vmul.f32 1.0, %v4294
      %v4296 = vrcp.pop %v3956
      %v4297 = vmul.f32 %v3956, %v4296
      %v4298 = vsub.f32 1.0, %v4297
      %v4299 = vmul.f32 %v4296, %v4298
      %v4300 = vadd.f32 %v4296, %v4299
      %vm4301 = vweird.f32 %v3956
      %vm4302 = vweird.f32 %v4296
      %vm4303 = vmor %vm4301, %vm4302
      %v4304 = vsel %vm4303, %v4296, %v4300
      %v4305 = vand.u32 2147483647, %v3956
      %vm4306 = vcmp.eq.f32.partialorder %v4305, 8.507059e+37
      %v4307 = vand.u32 %v3956, 2147483648
      %v4308 = vor.u32 1.1754944e-38, %v4307
      %v4309 = vsel %vm4306, %v4308, %v4304
      %v4310 = vmul.f32 1.0, %v4309
      %v4311 = vrcp.pop %v3957
      %v4312 = vmul.f32 %v3957, %v4311
      %v4313 = vsub.f32 1.0, %v4312
      %v4314 = vmul.f32 %v4311, %v4313
      %v4315 = vadd.f32 %v4311, %v4314
      %vm4316 = vweird.f32 %v3957
      %vm4317 = vweird.f32 %v4311
      %vm4318 = vmor %vm4316, %vm4317
      %v4319 = vsel %vm4318, %v4311, %v4315
      %v4320 = vand.u32 2147483647, %v3957
      %vm4321 = vcmp.eq.f32.partialorder %v4320, 8.507059e+37
      %v4322 = vand.u32 %v3957, 2147483648
      %v4323 = vor.u32 1.1754944e-38, %v4322
      %v4324 = vsel %vm4321, %v4323, %v4319
      %v4325 = vmul.f32 1.0, %v4324
      %v4326 = vrcp.pop %v3958
      %v4327 = vmul.f32 %v3958, %v4326
      %v4328 = vsub.f32 1.0, %v4327
      %v4329 = vmul.f32 %v4326, %v4328
      %v4330 = vadd.f32 %v4326, %v4329
      %vm4331 = vweird.f32 %v3958
      %vm4332 = vweird.f32 %v4326
      %vm4333 = vmor %vm4331, %vm4332
      %v4334 = vsel %vm4333, %v4326, %v4330
      %v4335 = vand.u32 2147483647, %v3958
      %vm4336 = vcmp.eq.f32.partialorder %v4335, 8.507059e+37
      %v4337 = vand.u32 %v3958, 2147483648
      %v4338 = vor.u32 1.1754944e-38, %v4337
      %v4339 = vsel %vm4336, %v4338, %v4334
      %v4340 = vmul.f32 1.0, %v4339
      %v4341 = vrcp.pop %v3959
      %v4342 = vmul.f32 %v3959, %v4341
      %v4343 = vsub.f32 1.0, %v4342
      %v4344 = vmul.f32 %v4341, %v4343
      %v4345 = vadd.f32 %v4341, %v4344
      %vm4346 = vweird.f32 %v3959
      %vm4347 = vweird.f32 %v4341
      %vm4348 = vmor %vm4346, %vm4347
      %v4349 = vsel %vm4348, %v4341, %v4345
      %v4350 = vand.u32 2147483647, %v3959
      %vm4351 = vcmp.eq.f32.partialorder %v4350, 8.507059e+37
      %v4352 = vand.u32 %v3959, 2147483648
      %v4353 = vor.u32 1.1754944e-38, %v4352
      %v4354 = vsel %vm4351, %v4353, %v4349
      %v4355 = vmul.f32 1.0, %v4354
      %v4356 = vrcp.pop %v3960
      %v4357 = vmul.f32 %v3960, %v4356
      %v4358 = vsub.f32 1.0, %v4357
      %v4359 = vmul.f32 %v4356, %v4358
      %v4360 = vadd.f32 %v4356, %v4359
      %vm4361 = vweird.f32 %v3960
      %vm4362 = vweird.f32 %v4356
      %vm4363 = vmor %vm4361, %vm4362
      %v4364 = vsel %vm4363, %v4356, %v4360
      %v4365 = vand.u32 2147483647, %v3960
      %vm4366 = vcmp.eq.f32.partialorder %v4365, 8.507059e+37
      %v4367 = vand.u32 %v3960, 2147483648
      %v4368 = vor.u32 1.1754944e-38, %v4367
      %v4369 = vsel %vm4366, %v4368, %v4364
      %v4370 = vmul.f32 1.0, %v4369
      %v4371 = vrcp.pop %v3961
      %v4372 = vmul.f32 %v3961, %v4371
      %v4373 = vsub.f32 1.0, %v4372
      %v4374 = vmul.f32 %v4371, %v4373
      %v4375 = vadd.f32 %v4371, %v4374
      %vm4376 = vweird.f32 %v3961
      %vm4377 = vweird.f32 %v4371
      %vm4378 = vmor %vm4376, %vm4377
      %v4379 = vsel %vm4378, %v4371, %v4375
      %v4380 = vand.u32 2147483647, %v3961
      %vm4381 = vcmp.eq.f32.partialorder %v4380, 8.507059e+37
      %v4382 = vand.u32 %v3961, 2147483648
      %v4383 = vor.u32 1.1754944e-38, %v4382
      %v4384 = vsel %vm4381, %v4383, %v4379
      %v4385 = vmul.f32 1.0, %v4384
      %v4386 = vrcp.pop %v3962
      %v4387 = vmul.f32 %v3962, %v4386
      %v4388 = vsub.f32 1.0, %v4387
      %v4389 = vmul.f32 %v4386, %v4388
      %v4390 = vadd.f32 %v4386, %v4389
      %vm4391 = vweird.f32 %v3962
      %vm4392 = vweird.f32 %v4386
      %vm4393 = vmor %vm4391, %vm4392
      %v4394 = vsel %vm4393, %v4386, %v4390
      %v4395 = vand.u32 2147483647, %v3962
      %vm4396 = vcmp.eq.f32.partialorder %v4395, 8.507059e+37
      %v4397 = vand.u32 %v3962, 2147483648
      %v4398 = vor.u32 1.1754944e-38, %v4397
      %v4399 = vsel %vm4396, %v4398, %v4394
      %v4400 = vmul.f32 1.0, %v4399
      %v4401 = vrcp.pop %v3963
      %v4402 = vmul.f32 %v3963, %v4401
      %v4403 = vsub.f32 1.0, %v4402
      %v4404 = vmul.f32 %v4401, %v4403
      %v4405 = vadd.f32 %v4401, %v4404
      %vm4406 = vweird.f32 %v3963
      %vm4407 = vweird.f32 %v4401
      %vm4408 = vmor %vm4406, %vm4407
      %v4409 = vsel %vm4408, %v4401, %v4405
      %v4410 = vand.u32 2147483647, %v3963
      %vm4411 = vcmp.eq.f32.partialorder %v4410, 8.507059e+37
      %v4412 = vand.u32 %v3963, 2147483648
      %v4413 = vor.u32 1.1754944e-38, %v4412
      %v4414 = vsel %vm4411, %v4413, %v4409
      %v4415 = vmul.f32 1.0, %v4414
      %v4416 = vrcp.pop %v3964
      %v4417 = vmul.f32 %v3964, %v4416
      %v4418 = vsub.f32 1.0, %v4417
      %v4419 = vmul.f32 %v4416, %v4418
      %v4420 = vadd.f32 %v4416, %v4419
      %vm4421 = vweird.f32 %v3964
      %vm4422 = vweird.f32 %v4416
      %vm4423 = vmor %vm4421, %vm4422
      %v4424 = vsel %vm4423, %v4416, %v4420
      %v4425 = vand.u32 2147483647, %v3964
      %vm4426 = vcmp.eq.f32.partialorder %v4425, 8.507059e+37
      %v4427 = vand.u32 %v3964, 2147483648
      %v4428 = vor.u32 1.1754944e-38, %v4427
      %v4429 = vsel %vm4426, %v4428, %v4424
      %v4430 = vmul.f32 1.0, %v4429
      %v4431 = vrcp.pop %v3965
      %v4432 = vmul.f32 %v3965, %v4431
      %v4433 = vsub.f32 1.0, %v4432
      %v4434 = vmul.f32 %v4431, %v4433
      %v4435 = vadd.f32 %v4431, %v4434
      %vm4436 = vweird.f32 %v3965
      %vm4437 = vweird.f32 %v4431
      %vm4438 = vmor %vm4436, %vm4437
      %v4439 = vsel %vm4438, %v4431, %v4435
      %v4440 = vand.u32 2147483647, %v3965
      %vm4441 = vcmp.eq.f32.partialorder %v4440, 8.507059e+37
      %v4442 = vand.u32 %v3965, 2147483648
      %v4443 = vor.u32 1.1754944e-38, %v4442
      %v4444 = vsel %vm4441, %v4443, %v4439
      %v4445 = vmul.f32 1.0, %v4444
      %v4446 = vadd.f32 %v3980, %v1510
      %v4447 = vadd.f32 %v3995, %v1555
      %v4448 = vadd.f32 %v4010, %v1600
      %v4449 = vadd.f32 %v4025, %v1645
      %v4450 = vadd.f32 %v4040, %v1690
      %v4451 = vadd.f32 %v4055, %v1735
      %v4452 = vadd.f32 %v4070, %v1780
      %v4453 = vadd.f32 %v4085, %v1825
      %v4454 = vadd.f32 %v4100, %v1870
      %v4455 = vadd.f32 %v4115, %v1915
      %v4456 = vadd.f32 %v4130, %v1960
      %v4457 = vadd.f32 %v4145, %v2005
      %v4458 = vadd.f32 %v4160, %v2050
      %v4459 = vadd.f32 %v4175, %v2095
      %v4460 = vadd.f32 %v4190, %v2140
      %v4461 = vadd.f32 %v4205, %v2185
      %v4462 = vadd.f32 %v4220, %v2230
      %v4463 = vadd.f32 %v4235, %v2275
      %v4464 = vadd.f32 %v4250, %v2320
      %v4465 = vadd.f32 %v4265, %v2365
      %v4466 = vadd.f32 %v4280, %v2410
      %v4467 = vadd.f32 %v4295, %v2455
      %v4468 = vadd.f32 %v4310, %v2500
      %v4469 = vadd.f32 %v4325, %v2545
      %v4470 = vadd.f32 %v4340, %v2590
      %v4471 = vadd.f32 %v4355, %v2635
      %v4472 = vadd.f32 %v4370, %v2680
      %v4473 = vadd.f32 %v4385, %v2725
      %v4474 = vadd.f32 %v4400, %v2770
      %v4475 = vadd.f32 %v4415, %v2815
      %v4476 = vadd.f32 %v4430, %v2860
      %v4477 = vadd.f32 %v4445, %v2905
      %v4478 = vld [vmem:[%s2 + $0x100] sm:$0xff]
      %v4479 = vld [vmem:[%s2 + $0x108] sm:$0xff]
      %v4480 = vld [vmem:[%s2 + $0x110] sm:$0xff]
      %v4481 = vld [vmem:[%s2 + $0x118] sm:$0xff]
      %v4482 = vld [vmem:[%s2 + $0x120] sm:$0xff]
      %v4483 = vld [vmem:[%s2 + $0x128] sm:$0xff]
      %v4484 = vld [vmem:[%s2 + $0x130] sm:$0xff]
      %v4485 = vld [vmem:[%s2 + $0x138] sm:$0xff]
      %v4486 = vld [vmem:[%s2 + $0x140] sm:$0xff]
      %v4487 = vld [vmem:[%s2 + $0x148] sm:$0xff]
      %v4488 = vld [vmem:[%s2 + $0x150] sm:$0xff]
      %v4489 = vld [vmem:[%s2 + $0x158] sm:$0xff]
      %v4490 = vld [vmem:[%s2 + $0x160] sm:$0xff]
      %v4491 = vld [vmem:[%s2 + $0x168] sm:$0xff]
      %v4492 = vld [vmem:[%s2 + $0x170] sm:$0xff]
      %v4493 = vld [vmem:[%s2 + $0x178] sm:$0xff]
      %v4494 = vperm.slane %v304, 1
      %4495 = vmatpush.msra.mxu0 %v4493
      %4496 = vmatpush.msra.mxu0 %v4492
      %4497 = vmatpush.msra.mxu0 %v4491
      %4498 = vmatpush.msra.mxu0 %v4490
      %4499 = vmatpush.msra.mxu0 %v4489
      %4500 = vmatpush.msra.mxu0 %v4488
      %4501 = vmatpush.msra.mxu0 %v4487
      %4502 = vmatpush.msra.mxu0 %v4486
      %4503 = vmatpush.msra.mxu0 %v4485
      %4504 = vmatpush.msra.mxu0 %v4484
      %4505 = vmatpush.msra.mxu0 %v4483
      %4506 = vmatpush.msra.mxu0 %v4482
      %4507 = vmatpush.msra.mxu0 %v4481
      %4508 = vmatpush.msra.mxu0 %v4480
      %4509 = vmatpush.msra.mxu0 %v4479
      %4510 = vmatpush.msra.mxu0 %v4478
      %4511 = vmatmul.f32.gmra.mxu0 %v4446
      %v4512 = vpop.f32.mrf.mxu0
      %v4513 = vadd.f32 %v4494, %v4512
      %4514 = vmatmul.f32.gmra.mxu0 %v4447
      %v4515 = vpop.f32.mrf.mxu0
      %v4516 = vadd.f32 %v4494, %v4515
      %4517 = vmatmul.f32.gmra.mxu0 %v4448
      %v4518 = vpop.f32.mrf.mxu0
      %v4519 = vadd.f32 %v4494, %v4518
      %4520 = vmatmul.f32.gmra.mxu0 %v4449
      %v4521 = vpop.f32.mrf.mxu0
      %v4522 = vadd.f32 %v4494, %v4521
      %4523 = vmatmul.f32.gmra.mxu0 %v4450
      %v4524 = vpop.f32.mrf.mxu0
      %v4525 = vadd.f32 %v4494, %v4524
      %4526 = vmatmul.f32.gmra.mxu0 %v4451
      %v4527 = vpop.f32.mrf.mxu0
      %v4528 = vadd.f32 %v4494, %v4527
      %4529 = vmatmul.f32.gmra.mxu0 %v4452
      %v4530 = vpop.f32.mrf.mxu0
      %v4531 = vadd.f32 %v4494, %v4530
      %4532 = vmatmul.f32.gmra.mxu0 %v4453
      %v4533 = vpop.f32.mrf.mxu0
      %v4534 = vadd.f32 %v4494, %v4533
      %4535 = vmatmul.f32.gmra.mxu0 %v4454
      %v4536 = vpop.f32.mrf.mxu0
      %v4537 = vadd.f32 %v4494, %v4536
      %4538 = vmatmul.f32.gmra.mxu0 %v4455
      %v4539 = vpop.f32.mrf.mxu0
      %v4540 = vadd.f32 %v4494, %v4539
      %4541 = vmatmul.f32.gmra.mxu0 %v4456
      %v4542 = vpop.f32.mrf.mxu0
      %v4543 = vadd.f32 %v4494, %v4542
      %4544 = vmatmul.f32.gmra.mxu0 %v4457
      %v4545 = vpop.f32.mrf.mxu0
      %v4546 = vadd.f32 %v4494, %v4545
      %4547 = vmatmul.f32.gmra.mxu0 %v4458
      %v4548 = vpop.f32.mrf.mxu0
      %v4549 = vadd.f32 %v4494, %v4548
      %4550 = vmatmul.f32.gmra.mxu0 %v4459
      %v4551 = vpop.f32.mrf.mxu0
      %v4552 = vadd.f32 %v4494, %v4551
      %4553 = vmatmul.f32.gmra.mxu0 %v4460
      %v4554 = vpop.f32.mrf.mxu0
      %v4555 = vadd.f32 %v4494, %v4554
      %4556 = vmatmul.f32.gmra.mxu0 %v4461
      %v4557 = vpop.f32.mrf.mxu0
      %v4558 = vadd.f32 %v4494, %v4557
      %4559 = vmatmul.f32.gmra.mxu0 %v4462
      %v4560 = vpop.f32.mrf.mxu0
      %v4561 = vadd.f32 %v4494, %v4560
      %4562 = vmatmul.f32.gmra.mxu0 %v4463
      %v4563 = vpop.f32.mrf.mxu0
      %v4564 = vadd.f32 %v4494, %v4563
      %4565 = vmatmul.f32.gmra.mxu0 %v4464
      %v4566 = vpop.f32.mrf.mxu0
      %v4567 = vadd.f32 %v4494, %v4566
      %4568 = vmatmul.f32.gmra.mxu0 %v4465
      %v4569 = vpop.f32.mrf.mxu0
      %v4570 = vadd.f32 %v4494, %v4569
      %4571 = vmatmul.f32.gmra.mxu0 %v4466
      %v4572 = vpop.f32.mrf.mxu0
      %v4573 = vadd.f32 %v4494, %v4572
      %4574 = vmatmul.f32.gmra.mxu0 %v4467
      %v4575 = vpop.f32.mrf.mxu0
      %v4576 = vadd.f32 %v4494, %v4575
      %4577 = vmatmul.f32.gmra.mxu0 %v4468
      %v4578 = vpop.f32.mrf.mxu0
      %v4579 = vadd.f32 %v4494, %v4578
      %4580 = vmatmul.f32.gmra.mxu0 %v4469
      %v4581 = vpop.f32.mrf.mxu0
      %v4582 = vadd.f32 %v4494, %v4581
      %4583 = vmatmul.f32.gmra.mxu0 %v4470
      %v4584 = vpop.f32.mrf.mxu0
      %v4585 = vadd.f32 %v4494, %v4584
      %4586 = vmatmul.f32.gmra.mxu0 %v4471
      %v4587 = vpop.f32.mrf.mxu0
      %v4588 = vadd.f32 %v4494, %v4587
      %4589 = vmatmul.f32.gmra.mxu0 %v4472
      %v4590 = vpop.f32.mrf.mxu0
      %v4591 = vadd.f32 %v4494, %v4590
      %4592 = vmatmul.f32.gmra.mxu0 %v4473
      %v4593 = vpop.f32.mrf.mxu0
      %v4594 = vadd.f32 %v4494, %v4593
      %4595 = vmatmul.f32.gmra.mxu0 %v4474
      %v4596 = vpop.f32.mrf.mxu0
      %v4597 = vadd.f32 %v4494, %v4596
      %4598 = vmatmul.f32.gmra.mxu0 %v4475
      %v4599 = vpop.f32.mrf.mxu0
      %v4600 = vadd.f32 %v4494, %v4599
      %4601 = vmatmul.f32.gmra.mxu0 %v4476
      %v4602 = vpop.f32.mrf.mxu0
      %v4603 = vadd.f32 %v4494, %v4602
      %4604 = vmatmul.f32.gmra.mxu0 %v4477
      %v4605 = vpop.f32.mrf.mxu0
      %v4606 = vadd.f32 %v4494, %v4605
      %4607 = vdwg.mxu0
      %4608 = vst [vmem:[%s204] sm:$0xff] %v2906
      %4609 = vst [vmem:[%s204 + $0x20] sm:$0xff] %v2907
      %4610 = vst [vmem:[%s204 + $0x40] sm:$0xff] %v2908
      %4611 = vst [vmem:[%s204 + $0x60] sm:$0xff] %v2909
      %4612 = vst [vmem:[%s204 + $0x80] sm:$0xff] %v2910
      %4613 = vst [vmem:[%s204 + $0xa0] sm:$0xff] %v2911
      %4614 = vst [vmem:[%s204 + $0xc0] sm:$0xff] %v2912
      %4615 = vst [vmem:[%s204 + $0xe0] sm:$0xff] %v2913
      %4616 = vst [vmem:[%s204 + $0x100] sm:$0xff] %v2914
      %4617 = vst [vmem:[%s204 + $0x120] sm:$0xff] %v2915
      %4618 = vst [vmem:[%s204 + $0x140] sm:$0xff] %v2916
      %4619 = vst [vmem:[%s204 + $0x160] sm:$0xff] %v2917
      %4620 = vst [vmem:[%s204 + $0x180] sm:$0xff] %v2918
      %4621 = vst [vmem:[%s204 + $0x1a0] sm:$0xff] %v2919
      %4622 = vst [vmem:[%s204 + $0x1c0] sm:$0xff] %v2920
      %4623 = vst [vmem:[%s204 + $0x1e0] sm:$0xff] %v2921
      %4624 = vst [vmem:[%s204 + $0x200] sm:$0xff] %v2922
      %4625 = vst [vmem:[%s204 + $0x220] sm:$0xff] %v2923
      %4626 = vst [vmem:[%s204 + $0x240] sm:$0xff] %v2924
      %4627 = vst [vmem:[%s204 + $0x260] sm:$0xff] %v2925
      %4628 = vst [vmem:[%s204 + $0x280] sm:$0xff] %v2926
      %4629 = vst [vmem:[%s204 + $0x2a0] sm:$0xff] %v2927
      %4630 = vst [vmem:[%s204 + $0x2c0] sm:$0xff] %v2928
      %4631 = vst [vmem:[%s204 + $0x2e0] sm:$0xff] %v2929
      %4632 = vst [vmem:[%s204 + $0x300] sm:$0xff] %v2930
      %4633 = vst [vmem:[%s204 + $0x320] sm:$0xff] %v2931
      %4634 = vst [vmem:[%s204 + $0x340] sm:$0xff] %v2932
      %4635 = vst [vmem:[%s204 + $0x360] sm:$0xff] %v2933
      %4636 = vst [vmem:[%s204 + $0x380] sm:$0xff] %v2934
      %4637 = vst [vmem:[%s204 + $0x3a0] sm:$0xff] %v2935
      %4638 = vst [vmem:[%s204 + $0x3c0] sm:$0xff] %v2936
      %4639 = vst [vmem:[%s204 + $0x3e0] sm:$0xff] %v2937
      %4640 = vst [vmem:[%s204 + $0x8] sm:$0xff] %v3676
      %4641 = vst [vmem:[%s204 + $0x28] sm:$0xff] %v3677
      %4642 = vst [vmem:[%s204 + $0x48] sm:$0xff] %v3678
      %4643 = vst [vmem:[%s204 + $0x68] sm:$0xff] %v3679
      %4644 = vst [vmem:[%s204 + $0x88] sm:$0xff] %v3680
      %4645 = vst [vmem:[%s204 + $0xa8] sm:$0xff] %v3681
      %4646 = vst [vmem:[%s204 + $0xc8] sm:$0xff] %v3682
      %4647 = vst [vmem:[%s204 + $0xe8] sm:$0xff] %v3683
      %4648 = vst [vmem:[%s204 + $0x108] sm:$0xff] %v3684
      %4649 = vst [vmem:[%s204 + $0x128] sm:$0xff] %v3685
      %4650 = vst [vmem:[%s204 + $0x148] sm:$0xff] %v3686
      %4651 = vst [vmem:[%s204 + $0x168] sm:$0xff] %v3687
      %4652 = vst [vmem:[%s204 + $0x188] sm:$0xff] %v3688
      %4653 = vst [vmem:[%s204 + $0x1a8] sm:$0xff] %v3689
      %4654 = vst [vmem:[%s204 + $0x1c8] sm:$0xff] %v3690
      %4655 = vst [vmem:[%s204 + $0x1e8] sm:$0xff] %v3691
      %4656 = vst [vmem:[%s204 + $0x208] sm:$0xff] %v3692
      %4657 = vst [vmem:[%s204 + $0x228] sm:$0xff] %v3693
      %4658 = vst [vmem:[%s204 + $0x248] sm:$0xff] %v3694
      %4659 = vst [vmem:[%s204 + $0x268] sm:$0xff] %v3695
      %4660 = vst [vmem:[%s204 + $0x288] sm:$0xff] %v3696
      %4661 = vst [vmem:[%s204 + $0x2a8] sm:$0xff] %v3697
      %4662 = vst [vmem:[%s204 + $0x2c8] sm:$0xff] %v3698
      %4663 = vst [vmem:[%s204 + $0x2e8] sm:$0xff] %v3699
      %4664 = vst [vmem:[%s204 + $0x308] sm:$0xff] %v3700
      %4665 = vst [vmem:[%s204 + $0x328] sm:$0xff] %v3701
      %4666 = vst [vmem:[%s204 + $0x348] sm:$0xff] %v3702
      %4667 = vst [vmem:[%s204 + $0x368] sm:$0xff] %v3703
      %4668 = vst [vmem:[%s204 + $0x388] sm:$0xff] %v3704
      %4669 = vst [vmem:[%s204 + $0x3a8] sm:$0xff] %v3705
      %4670 = vst [vmem:[%s204 + $0x3c8] sm:$0xff] %v3706
      %4671 = vst [vmem:[%s204 + $0x3e8] sm:$0xff] %v3707
      %4672 = vst [vmem:[%s204 + $0x10] sm:$0xff] %v4446
      %4673 = vst [vmem:[%s204 + $0x30] sm:$0xff] %v4447
      %4674 = vst [vmem:[%s204 + $0x50] sm:$0xff] %v4448
      %4675 = vst [vmem:[%s204 + $0x70] sm:$0xff] %v4449
      %4676 = vst [vmem:[%s204 + $0x90] sm:$0xff] %v4450
      %4677 = vst [vmem:[%s204 + $0xb0] sm:$0xff] %v4451
      %4678 = vst [vmem:[%s204 + $0xd0] sm:$0xff] %v4452
      %4679 = vst [vmem:[%s204 + $0xf0] sm:$0xff] %v4453
      %4680 = vst [vmem:[%s204 + $0x110] sm:$0xff] %v4454
      %4681 = vst [vmem:[%s204 + $0x130] sm:$0xff] %v4455
      %4682 = vst [vmem:[%s204 + $0x150] sm:$0xff] %v4456
      %4683 = vst [vmem:[%s204 + $0x170] sm:$0xff] %v4457
      %4684 = vst [vmem:[%s204 + $0x190] sm:$0xff] %v4458
      %4685 = vst [vmem:[%s204 + $0x1b0] sm:$0xff] %v4459
      %4686 = vst [vmem:[%s204 + $0x1d0] sm:$0xff] %v4460
      %4687 = vst [vmem:[%s204 + $0x1f0] sm:$0xff] %v4461
      %4688 = vst [vmem:[%s204 + $0x210] sm:$0xff] %v4462
      %4689 = vst [vmem:[%s204 + $0x230] sm:$0xff] %v4463
      %4690 = vst [vmem:[%s204 + $0x250] sm:$0xff] %v4464
      %4691 = vst [vmem:[%s204 + $0x270] sm:$0xff] %v4465
      %4692 = vst [vmem:[%s204 + $0x290] sm:$0xff] %v4466
      %4693 = vst [vmem:[%s204 + $0x2b0] sm:$0xff] %v4467
      %4694 = vst [vmem:[%s204 + $0x2d0] sm:$0xff] %v4468
      %4695 = vst [vmem:[%s204 + $0x2f0] sm:$0xff] %v4469
      %4696 = vst [vmem:[%s204 + $0x310] sm:$0xff] %v4470
      %4697 = vst [vmem:[%s204 + $0x330] sm:$0xff] %v4471
      %4698 = vst [vmem:[%s204 + $0x350] sm:$0xff] %v4472
      %4699 = vst [vmem:[%s204 + $0x370] sm:$0xff] %v4473
      %4700 = vst [vmem:[%s204 + $0x390] sm:$0xff] %v4474
      %4701 = vst [vmem:[%s204 + $0x3b0] sm:$0xff] %v4475
      %4702 = vst [vmem:[%s204 + $0x3d0] sm:$0xff] %v4476
      %4703 = vst [vmem:[%s204 + $0x3f0] sm:$0xff] %v4477
      %4704 = vst [vmem:[%s204 + $0x18] sm:$0xff] %v4513
      %4705 = vst [vmem:[%s204 + $0x38] sm:$0xff] %v4516
      %4706 = vst [vmem:[%s204 + $0x58] sm:$0xff] %v4519
      %4707 = vst [vmem:[%s204 + $0x78] sm:$0xff] %v4522
      %4708 = vst [vmem:[%s204 + $0x98] sm:$0xff] %v4525
      %4709 = vst [vmem:[%s204 + $0xb8] sm:$0xff] %v4528
      %4710 = vst [vmem:[%s204 + $0xd8] sm:$0xff] %v4531
      %4711 = vst [vmem:[%s204 + $0xf8] sm:$0xff] %v4534
      %4712 = vst [vmem:[%s204 + $0x118] sm:$0xff] %v4537
      %4713 = vst [vmem:[%s204 + $0x138] sm:$0xff] %v4540
      %4714 = vst [vmem:[%s204 + $0x158] sm:$0xff] %v4543
      %4715 = vst [vmem:[%s204 + $0x178] sm:$0xff] %v4546
      %4716 = vst [vmem:[%s204 + $0x198] sm:$0xff] %v4549
      %4717 = vst [vmem:[%s204 + $0x1b8] sm:$0xff] %v4552
      %4718 = vst [vmem:[%s204 + $0x1d8] sm:$0xff] %v4555
      %4719 = vst [vmem:[%s204 + $0x1f8] sm:$0xff] %v4558
      %4720 = vst [vmem:[%s204 + $0x218] sm:$0xff] %v4561
      %4721 = vst [vmem:[%s204 + $0x238] sm:$0xff] %v4564
      %4722 = vst [vmem:[%s204 + $0x258] sm:$0xff] %v4567
      %4723 = vst [vmem:[%s204 + $0x278] sm:$0xff] %v4570
      %4724 = vst [vmem:[%s204 + $0x298] sm:$0xff] %v4573
      %4725 = vst [vmem:[%s204 + $0x2b8] sm:$0xff] %v4576
      %4726 = vst [vmem:[%s204 + $0x2d8] sm:$0xff] %v4579
      %4727 = vst [vmem:[%s204 + $0x2f8] sm:$0xff] %v4582
      %4728 = vst [vmem:[%s204 + $0x318] sm:$0xff] %v4585
      %4729 = vst [vmem:[%s204 + $0x338] sm:$0xff] %v4588
      %4730 = vst [vmem:[%s204 + $0x358] sm:$0xff] %v4591
      %4731 = vst [vmem:[%s204 + $0x378] sm:$0xff] %v4594
      %4732 = vst [vmem:[%s204 + $0x398] sm:$0xff] %v4597
      %4733 = vst [vmem:[%s204 + $0x3b8] sm:$0xff] %v4600
      %4734 = vst [vmem:[%s204 + $0x3d8] sm:$0xff] %v4603
      %4735 = vst [vmem:[%s204 + $0x3f8] sm:$0xff] %v4606
      %s4736 = smul.u32 32, %s15
      %p4737 = scmp.lt.s32.totalorder %s4736, 63
      %s4738 = scalar_select %p4737, %s4736, 63
      %s4739 = smul.addr %s4738, 4
      %s4740 = smul.addr %s4739, 8
      %s4741 = scalar_lea.vmem %s4, %s4740
      // Predicated region
      $region37: #{forward.1} parent=35 // pred_check
        %p4742 = pneg %p122
      $region38: #{forward.1} parent=35 // pred_check_branch
        %4744 = sbr.rel (%p4742) target = $region40
      $region39: #{forward.1} parent=35 // pred_region
        %s4745 = smul.u32 32, %s15
      $region40: #{forward.1} parent=35 // pred_fallthru
        _
    $region36: #{forward.1} parent=5 // pred_fallthru
      _
    %p4746 = scmp.le.s32.totalorder 2, %s10
    // Predicated region
    $region41: #{forward.1} parent=5 // pred_check
      %p4747 = pneg %p4746
    $region42: #{forward.1} parent=5 // pred_check_branch
      %4749 = sbr.rel (%p4747) target = $region44
    $region43: #{forward.1} parent=5 // pred_region
      %s4750 = ssub.s32 %s10, 2
      // Predicated region
      $region45: #{forward.1} parent=43 // pred_check
        %p4751 = pneg %p128
      $region46: #{forward.1} parent=43 // pred_check_branch
        %4753 = sbr.rel (%p4751) target = $region48
      $region47: #{forward.1} parent=43 // pred_region
        %s4754 = smul.u32 32, %s16
        %p4755 = scmp.lt.s32.totalorder %s4754, 63
        %s4756 = scalar_select %p4755, %s4754, 63
        %s4757 = smul.addr %s4756, 4
        %s4758 = smul.addr %s4757, 8
        %s4759 = scalar_lea.vmem %s4, %s4758
      $region48: #{forward.1} parent=43 // pred_fallthru
        _
    $region44: #{forward.1} parent=5 // pred_fallthru
      _
  $region6: #{forward.1} parent=0 // loop_footer
    %s14 = sadd.s32 1, %s10
  $region7: #{forward.1} parent=0 // loop_footer_branch
    %9 = sbr.rel target = $region3
  $region8: #{forward.1} parent=0 // loop_exit
    _

</llo_original>
